<compile_context>
chip_gen: v7x
topology: tpu7x:2x2x1
jax: 0.10.0
libtpu: 0.0.40
codegen_flags: <defaults>
</compile_context>

<pallas_src>
import jax
import jax.numpy as jnp
from jax import lax
from jax.experimental import pallas as pl
from jax.experimental.pallas import tpu as pltpu

LANE = 128
_VMEM_LIMIT = 32 * 1024 * 1024


def _round_up(x, m):
    return (x + m - 1) // m * m


def _pick_row_block(h2, w2):
    """Output rows per conv grid step.  Aim for ~256 MXU rows (TR*W2) per dot.
    TR>1 requires W2 % 16 == 0 so the (TR, W2, Cin)->(TR*W2, Cin) fold stays
    bf16 tile-aligned, and TR must divide H2 (blocks never cross images)."""
    if w2 % 16 != 0:
        return 1
    target = max(1, 256 // w2)
    for cand in (32, 16, 8, 4, 2):
        if cand <= target and h2 % cand == 0:
            return cand
    return 1


def _pick_row_tile(m):
    for t in (1024, 512, 256, 128, 64, 32, 16, 8):
        if m % t == 0:
            return t
    return m


# ---------------------------------------------------------------------------
# Kernel 1: direct 3x3 conv over a TR-row block + fused per-block BN stats
# ---------------------------------------------------------------------------
def _conv3x3_stats_kernel(x_ref, w_ref, o_ref, s1_ref, s2_ref):
    # x_ref : (1, TR+2, W2+2, Cin) bf16  padded row block (2 overlap rows)
    # w_ref : (3, 3, Cin, Cp)      bf16  full 3x3 weights (constant block)
    # o_ref : (1, TR*W2, Cp)       f32   conv output rows of this block
    # s1/s2 : (1, 1, Cp)           f32   per-block column sum / sum of squares
    tr = x_ref.shape[1] - 2
    w2 = x_ref.shape[2] - 2
    cin = x_ref.shape[3]

    acc = None
    for dh in range(3):                      # static unroll: 9 MXU pushes
        for dw in range(3):
            a = x_ref[0, dh:dh + tr, dw:dw + w2, :].reshape(tr * w2, cin)
            p = jnp.dot(a, w_ref[dh, dw],
                        preferred_element_type=jnp.float32)
            acc = p if acc is None else acc + p

    o_ref[0] = acc.astype(o_ref.dtype)
    s1_ref[0] = jnp.sum(acc, axis=0, keepdims=True)
    s2_ref[0] = jnp.sum(acc * acc, axis=0, keepdims=True)


def conv3x3_with_stats(xblk, wt, tr, w2):
    """xblk: (NB, TR+2, W2+2, Cin) bf16 overlapping padded row blocks.
    wt:   (3, 3, Cin, Cp) bf16 (Cp = Cout padded to 128).
    Returns conv output (NB, TR*W2, Cp) f32 and per-block column sums /
    sums-of-squares, each (NB, 1, Cp) f32."""
    nb, trp2, wp2, cin = xblk.shape
    cp = wt.shape[-1]
    return pl.pallas_call(
        _conv3x3_stats_kernel,
        out_shape=(
            jax.ShapeDtypeStruct((nb, tr * w2, cp), jnp.float32),
            jax.ShapeDtypeStruct((nb, 1, cp), jnp.float32),
            jax.ShapeDtypeStruct((nb, 1, cp), jnp.float32),
        ),
        grid_spec=pltpu.PrefetchScalarGridSpec(
            num_scalar_prefetch=0,
            grid=(nb,),
            in_specs=[
                pl.BlockSpec((1, trp2, wp2, cin), lambda i: (i, 0, 0, 0)),
                pl.BlockSpec((3, 3, cin, cp), lambda i: (0, 0, 0, 0)),
            ],
            out_specs=(
                pl.BlockSpec((1, tr * w2, cp), lambda i: (i, 0, 0)),
                pl.BlockSpec((1, 1, cp), lambda i: (i, 0, 0)),
                pl.BlockSpec((1, 1, cp), lambda i: (i, 0, 0)),
            ),
        ),
        compiler_params=pltpu.CompilerParams(
            dimension_semantics=("parallel",),
            vmem_limit_bytes=_VMEM_LIMIT),
    )(xblk, wt)


# ---------------------------------------------------------------------------
# Kernel 2: BatchNorm apply + ReLU, tiled / pipelined / lane-dense
# ---------------------------------------------------------------------------
def _bn_relu_apply_kernel(x_ref, scale_ref, shift_ref, o_ref):
    x = x_ref[...].astype(jnp.float32)
    o_ref[...] = jnp.maximum(x * scale_ref[...] + shift_ref[...], 0.0)


def bn_relu_apply(x2d, scale, shift):
    m, c = x2d.shape
    tr = _pick_row_tile(m)
    return pl.pallas_call(
        _bn_relu_apply_kernel,
        out_shape=jax.ShapeDtypeStruct((m, c), jnp.float32),
        grid_spec=pltpu.PrefetchScalarGridSpec(
            num_scalar_prefetch=0,
            grid=(m // tr,),
            in_specs=[
                pl.BlockSpec((tr, c), lambda i: (i, 0)),
                pl.BlockSpec((1, c), lambda i: (0, 0)),
                pl.BlockSpec((1, c), lambda i: (0, 0)),
            ],
            out_specs=pl.BlockSpec((tr, c), lambda i: (i, 0)),
        ),
        compiler_params=pltpu.CompilerParams(
            dimension_semantics=("parallel",),
            vmem_limit_bytes=_VMEM_LIMIT),
    )(x2d, scale.reshape(1, c), shift.reshape(1, c))


# ---------------------------------------------------------------------------
# Parameters (PyTorch-like init) and one-time prep (pad + bf16 cast)
# ---------------------------------------------------------------------------
def init_up_block_params(key, ch_in, ch_out):
    k1, k2 = jax.random.split(key)
    bound = 1.0 / float(ch_in * 9) ** 0.5
    w = jax.random.uniform(k1, (3, 3, ch_in, ch_out), jnp.float32, -bound, bound)
    b = jax.random.uniform(k2, (ch_out,), jnp.float32, -bound, bound)
    return dict(w=w, b=b, gamma=jnp.ones((ch_out,), jnp.float32),
                beta=jnp.zeros((ch_out,), jnp.float32))


def prepare_params(p):
    """One-time prep: pad Cout to a multiple of 128 (lane-dense stores) and
    pre-cast the conv weight to bf16.  The conv bias is provably a no-op:
    training-mode BatchNorm subtracts the batch mean, so a constant
    per-channel shift cancels exactly — it is dropped from the kernel."""
    w = p['w']
    ch_out = w.shape[-1]
    cp = _round_up(ch_out, LANE)
    w_p = jnp.zeros((3, 3, w.shape[2], cp), jnp.bfloat16)
    w_p = w_p.at[..., :ch_out].set(w.astype(jnp.bfloat16))
    gamma_p = jnp.zeros((cp,), jnp.float32).at[:ch_out].set(p['gamma'])
    beta_p = jnp.zeros((cp,), jnp.float32).at[:ch_out].set(p['beta'])
    return dict(w=w_p, gamma=gamma_p, beta=beta_p)


# ---------------------------------------------------------------------------
# UpBlock forward (mirrors the PyTorch module)
# ---------------------------------------------------------------------------
def up_block_forward(x_nchw, prepared, ch_out):
    w = prepared['w']                     # (3, 3, Cin, Cp) bf16
    gamma = prepared['gamma']             # (Cp,) f32
    beta = prepared['beta']               # (Cp,) f32
    cp = w.shape[-1]

    n, cin, h, wd = x_nchw.shape
    h2, w2 = 2 * h, 2 * wd
    tr = _pick_row_block(h2, w2)
    nb_per = h2 // tr
    nb = n * nb_per

    # Data-movement glue (XLA): NCHW->NHWC, nearest 2x upsample, 1-px zero
    # pad, bf16 cast, and layout into overlapping TR+2-row blocks per image.
    x = jnp.transpose(x_nchw, (0, 2, 3, 1))
    x = jnp.repeat(jnp.repeat(x, 2, axis=1), 2, axis=2)        # nearest 2x
    xp = jnp.pad(x, ((0, 0), (1, 1), (1, 1), (0, 0))).astype(jnp.bfloat16)
    row_idx = (jnp.arange(nb_per) * tr)[:, None] + jnp.arange(tr + 2)[None, :]
    xblk = jnp.take(xp, row_idx, axis=1)       # (N, nb_per, TR+2, W2+2, Cin)
    xblk = xblk.reshape(nb, tr + 2, w2 + 2, cin)

    # Pallas: direct 3x3 conv (9 taps in-kernel) + fused per-block BN stats.
    y, s1, s2 = conv3x3_with_stats(xblk, w, tr, w2)

    # Tiny O(C) finalization of the global batch statistics (plain JAX).
    m_rows = n * h2 * w2
    total = jnp.sum(s1[:, 0, :], axis=0)
    total_sq = jnp.sum(s2[:, 0, :], axis=0)
    mean = total / m_rows
    var = jnp.maximum(total_sq / m_rows - mean * mean, 0.0)    # biased var
    inv = lax.rsqrt(var + 1e-5)
    scale = gamma * inv
    shift = beta - mean * scale

    # Pallas: normalize + ReLU, tiled & lane-dense over padded channels.
    out = bn_relu_apply(y.reshape(m_rows, cp), scale, shift)

    out = out.reshape(n, h2, w2, cp)[..., :ch_out]
    return jnp.transpose(out, (0, 3, 1, 2))                    # back to NCHW


# ---------------------------------------------------------------------------
# Pure-JAX reference (f32) for a tolerance check
# ---------------------------------------------------------------------------
def reference_up_block(x_nchw, p):
    x = jnp.transpose(x_nchw, (0, 2, 3, 1))
    x = jnp.repeat(jnp.repeat(x, 2, axis=1), 2, axis=2)
    y = lax.conv_general_dilated(
        x, p['w'], window_strides=(1, 1), padding='SAME',
        dimension_numbers=('NHWC', 'HWIO', 'NHWC'),
        precision=lax.Precision.HIGHEST) + p['b']
    mean = jnp.mean(y, axis=(0, 1, 2))
    var = jnp.mean((y - mean) ** 2, axis=(0, 1, 2))
    y = (y - mean) * lax.rsqrt(var + 1e-5) * p['gamma'] + p['beta']
    return jnp.transpose(jnp.maximum(y, 0.0), (0, 3, 1, 2))


if __name__ == "__main__":
    key = jax.random.PRNGKey(0)
    kx, kp = jax.random.split(key)

    N, CH_IN, CH_OUT, H, W = 2, 16, 32, 16, 16
    x = jax.random.normal(kx, (N, CH_IN, H, W), dtype=jnp.float32)

    params = init_up_block_params(kp, CH_IN, CH_OUT)
    prepared = prepare_params(params)

    fwd = jax.jit(up_block_forward, static_argnames=("ch_out",))
    out = fwd(x, prepared, ch_out=CH_OUT)
    out = jax.block_until_ready(out)

    assert out.shape == (N, CH_OUT, 2 * H, 2 * W)
    assert bool(jnp.all(jnp.isfinite(out)))

    ref = reference_up_block(x, params)
    err = float(jnp.max(jnp.abs(out - ref)))
    assert err < 0.1, f"max abs err vs reference: {err}"

    print("KERNEL_OK")
</pallas_src>

<mosaic_0001>
module attributes {stable_mosaic.version = 11 : i64} {
  func.func @_conv3x3_stats_kernel(%arg0: i32, %arg1: memref<1x10x34x16xbf16, #tpu.memory_space<vmem>>, %arg2: memref<3x3x16x128xbf16, #tpu.memory_space<vmem>>, %arg3: memref<1x256x128xf32, #tpu.memory_space<vmem>>, %arg4: memref<1x1x128xf32, #tpu.memory_space<vmem>>, %arg5: memref<1x1x128xf32, #tpu.memory_space<vmem>>) attributes {dimension_semantics = [#tpu.dimension_semantics<parallel>], iteration_bounds = array<i64: 8>, scalar_prefetch = 0 : i64, scratch_operands = 0 : i64, tpu.core_type = #tpu.core_type<tc>, window_params = [{transform_indices = @transform_0, window_bounds = array<i64: 1, 10, 34, 16>}, {pipeline_mode = #tpu.pipeline_mode<synchronous>, transform_indices = @transform_1, window_bounds = array<i64: 3, 3, 16, 128>}, {transform_indices = @transform_2, window_bounds = array<i64: 1, 256, 128>}, {transform_indices = @transform_3, window_bounds = array<i64: 1, 1, 128>}, {transform_indices = @transform_4, window_bounds = array<i64: 1, 1, 128>}]} {
    %c0 = arith.constant 0 : index
    %c0_0 = arith.constant 0 : index
    %c0_1 = arith.constant 0 : index
    %c0_2 = arith.constant 0 : index
    %0 = vector.load %arg1[%c0, %c0_0, %c0_1, %c0_2] : memref<1x10x34x16xbf16, #tpu.memory_space<vmem>>, vector<1x8x32x16xbf16>
    %1 = vector.shape_cast %0 : vector<1x8x32x16xbf16> to vector<8x32x16xbf16>
    %2 = vector.shape_cast %1 : vector<8x32x16xbf16> to vector<256x16xbf16>
    %c0_3 = arith.constant 0 : index
    %c0_4 = arith.constant 0 : index
    %c0_5 = arith.constant 0 : index
    %c0_6 = arith.constant 0 : index
    %3 = vector.load %arg2[%c0_3, %c0_4, %c0_5, %c0_6] : memref<3x3x16x128xbf16, #tpu.memory_space<vmem>>, vector<1x1x16x128xbf16>
    %4 = vector.shape_cast %3 : vector<1x1x16x128xbf16> to vector<16x128xbf16>
    %cst = arith.constant dense<0.000000e+00> : vector<256x128xf32>
    %5 = tpu.matmul %2, %4, %cst {dimension_numbers = #tpu.dot_dimension_numbers<[1], [0], [0], [1], [0, 0, 1, 1], [], []>} : vector<256x16xbf16>, vector<16x128xbf16>, vector<256x128xf32> -> vector<256x128xf32>
    %c0_7 = arith.constant 0 : index
    %c0_8 = arith.constant 0 : index
    %c1 = arith.constant 1 : index
    %c0_9 = arith.constant 0 : index
    %6 = vector.load %arg1[%c0_7, %c0_8, %c1, %c0_9] : memref<1x10x34x16xbf16, #tpu.memory_space<vmem>>, vector<1x8x32x16xbf16>
    %7 = vector.shape_cast %6 : vector<1x8x32x16xbf16> to vector<8x32x16xbf16>
    %8 = vector.shape_cast %7 : vector<8x32x16xbf16> to vector<256x16xbf16>
    %c0_10 = arith.constant 0 : index
    %c1_11 = arith.constant 1 : index
    %c0_12 = arith.constant 0 : index
    %c0_13 = arith.constant 0 : index
    %9 = vector.load %arg2[%c0_10, %c1_11, %c0_12, %c0_13] : memref<3x3x16x128xbf16, #tpu.memory_space<vmem>>, vector<1x1x16x128xbf16>
    %10 = vector.shape_cast %9 : vector<1x1x16x128xbf16> to vector<16x128xbf16>
    %cst_14 = arith.constant dense<0.000000e+00> : vector<256x128xf32>
    %11 = tpu.matmul %8, %10, %cst_14 {dimension_numbers = #tpu.dot_dimension_numbers<[1], [0], [0], [1], [0, 0, 1, 1], [], []>} : vector<256x16xbf16>, vector<16x128xbf16>, vector<256x128xf32> -> vector<256x128xf32>
    %12 = arith.addf %5, %11 : vector<256x128xf32>
    %c0_15 = arith.constant 0 : index
    %c0_16 = arith.constant 0 : index
    %c2 = arith.constant 2 : index
    %c0_17 = arith.constant 0 : index
    %13 = vector.load %arg1[%c0_15, %c0_16, %c2, %c0_17] : memref<1x10x34x16xbf16, #tpu.memory_space<vmem>>, vector<1x8x32x16xbf16>
    %14 = vector.shape_cast %13 : vector<1x8x32x16xbf16> to vector<8x32x16xbf16>
    %15 = vector.shape_cast %14 : vector<8x32x16xbf16> to vector<256x16xbf16>
    %c0_18 = arith.constant 0 : index
    %c2_19 = arith.constant 2 : index
    %c0_20 = arith.constant 0 : index
    %c0_21 = arith.constant 0 : index
    %16 = vector.load %arg2[%c0_18, %c2_19, %c0_20, %c0_21] : memref<3x3x16x128xbf16, #tpu.memory_space<vmem>>, vector<1x1x16x128xbf16>
    %17 = vector.shape_cast %16 : vector<1x1x16x128xbf16> to vector<16x128xbf16>
    %cst_22 = arith.constant dense<0.000000e+00> : vector<256x128xf32>
    %18 = tpu.matmul %15, %17, %cst_22 {dimension_numbers = #tpu.dot_dimension_numbers<[1], [0], [0], [1], [0, 0, 1, 1], [], []>} : vector<256x16xbf16>, vector<16x128xbf16>, vector<256x128xf32> -> vector<256x128xf32>
    %19 = arith.addf %12, %18 : vector<256x128xf32>
    %c0_23 = arith.constant 0 : index
    %c1_24 = arith.constant 1 : index
    %c0_25 = arith.constant 0 : index
    %c0_26 = arith.constant 0 : index
    %20 = vector.load %arg1[%c0_23, %c1_24, %c0_25, %c0_26] : memref<1x10x34x16xbf16, #tpu.memory_space<vmem>>, vector<1x8x32x16xbf16>
    %21 = vector.shape_cast %20 : vector<1x8x32x16xbf16> to vector<8x32x16xbf16>
    %22 = vector.shape_cast %21 : vector<8x32x16xbf16> to vector<256x16xbf16>
    %c1_27 = arith.constant 1 : index
    %c0_28 = arith.constant 0 : index
    %c0_29 = arith.constant 0 : index
    %c0_30 = arith.constant 0 : index
    %23 = vector.load %arg2[%c1_27, %c0_28, %c0_29, %c0_30] : memref<3x3x16x128xbf16, #tpu.memory_space<vmem>>, vector<1x1x16x128xbf16>
    %24 = vector.shape_cast %23 : vector<1x1x16x128xbf16> to vector<16x128xbf16>
    %cst_31 = arith.constant dense<0.000000e+00> : vector<256x128xf32>
    %25 = tpu.matmul %22, %24, %cst_31 {dimension_numbers = #tpu.dot_dimension_numbers<[1], [0], [0], [1], [0, 0, 1, 1], [], []>} : vector<256x16xbf16>, vector<16x128xbf16>, vector<256x128xf32> -> vector<256x128xf32>
    %26 = arith.addf %19, %25 : vector<256x128xf32>
    %c0_32 = arith.constant 0 : index
    %c1_33 = arith.constant 1 : index
    %c1_34 = arith.constant 1 : index
    %c0_35 = arith.constant 0 : index
    %27 = vector.load %arg1[%c0_32, %c1_33, %c1_34, %c0_35] : memref<1x10x34x16xbf16, #tpu.memory_space<vmem>>, vector<1x8x32x16xbf16>
    %28 = vector.shape_cast %27 : vector<1x8x32x16xbf16> to vector<8x32x16xbf16>
    %29 = vector.shape_cast %28 : vector<8x32x16xbf16> to vector<256x16xbf16>
    %c1_36 = arith.constant 1 : index
    %c1_37 = arith.constant 1 : index
    %c0_38 = arith.constant 0 : index
    %c0_39 = arith.constant 0 : index
    %30 = vector.load %arg2[%c1_36, %c1_37, %c0_38, %c0_39] : memref<3x3x16x128xbf16, #tpu.memory_space<vmem>>, vector<1x1x16x128xbf16>
    %31 = vector.shape_cast %30 : vector<1x1x16x128xbf16> to vector<16x128xbf16>
    %cst_40 = arith.constant dense<0.000000e+00> : vector<256x128xf32>
    %32 = tpu.matmul %29, %31, %cst_40 {dimension_numbers = #tpu.dot_dimension_numbers<[1], [0], [0], [1], [0, 0, 1, 1], [], []>} : vector<256x16xbf16>, vector<16x128xbf16>, vector<256x128xf32> -> vector<256x128xf32>
    %33 = arith.addf %26, %32 : vector<256x128xf32>
    %c0_41 = arith.constant 0 : index
    %c1_42 = arith.constant 1 : index
    %c2_43 = arith.constant 2 : index
    %c0_44 = arith.constant 0 : index
    %34 = vector.load %arg1[%c0_41, %c1_42, %c2_43, %c0_44] : memref<1x10x34x16xbf16, #tpu.memory_space<vmem>>, vector<1x8x32x16xbf16>
    %35 = vector.shape_cast %34 : vector<1x8x32x16xbf16> to vector<8x32x16xbf16>
    %36 = vector.shape_cast %35 : vector<8x32x16xbf16> to vector<256x16xbf16>
    %c1_45 = arith.constant 1 : index
    %c2_46 = arith.constant 2 : index
    %c0_47 = arith.constant 0 : index
    %c0_48 = arith.constant 0 : index
    %37 = vector.load %arg2[%c1_45, %c2_46, %c0_47, %c0_48] : memref<3x3x16x128xbf16, #tpu.memory_space<vmem>>, vector<1x1x16x128xbf16>
    %38 = vector.shape_cast %37 : vector<1x1x16x128xbf16> to vector<16x128xbf16>
    %cst_49 = arith.constant dense<0.000000e+00> : vector<256x128xf32>
    %39 = tpu.matmul %36, %38, %cst_49 {dimension_numbers = #tpu.dot_dimension_numbers<[1], [0], [0], [1], [0, 0, 1, 1], [], []>} : vector<256x16xbf16>, vector<16x128xbf16>, vector<256x128xf32> -> vector<256x128xf32>
    %40 = arith.addf %33, %39 : vector<256x128xf32>
    %c0_50 = arith.constant 0 : index
    %c2_51 = arith.constant 2 : index
    %c0_52 = arith.constant 0 : index
    %c0_53 = arith.constant 0 : index
    %41 = vector.load %arg1[%c0_50, %c2_51, %c0_52, %c0_53] : memref<1x10x34x16xbf16, #tpu.memory_space<vmem>>, vector<1x8x32x16xbf16>
    %42 = vector.shape_cast %41 : vector<1x8x32x16xbf16> to vector<8x32x16xbf16>
    %43 = vector.shape_cast %42 : vector<8x32x16xbf16> to vector<256x16xbf16>
    %c2_54 = arith.constant 2 : index
    %c0_55 = arith.constant 0 : index
    %c0_56 = arith.constant 0 : index
    %c0_57 = arith.constant 0 : index
    %44 = vector.load %arg2[%c2_54, %c0_55, %c0_56, %c0_57] : memref<3x3x16x128xbf16, #tpu.memory_space<vmem>>, vector<1x1x16x128xbf16>
    %45 = vector.shape_cast %44 : vector<1x1x16x128xbf16> to vector<16x128xbf16>
    %cst_58 = arith.constant dense<0.000000e+00> : vector<256x128xf32>
    %46 = tpu.matmul %43, %45, %cst_58 {dimension_numbers = #tpu.dot_dimension_numbers<[1], [0], [0], [1], [0, 0, 1, 1], [], []>} : vector<256x16xbf16>, vector<16x128xbf16>, vector<256x128xf32> -> vector<256x128xf32>
    %47 = arith.addf %40, %46 : vector<256x128xf32>
    %c0_59 = arith.constant 0 : index
    %c2_60 = arith.constant 2 : index
    %c1_61 = arith.constant 1 : index
    %c0_62 = arith.constant 0 : index
    %48 = vector.load %arg1[%c0_59, %c2_60, %c1_61, %c0_62] : memref<1x10x34x16xbf16, #tpu.memory_space<vmem>>, vector<1x8x32x16xbf16>
    %49 = vector.shape_cast %48 : vector<1x8x32x16xbf16> to vector<8x32x16xbf16>
    %50 = vector.shape_cast %49 : vector<8x32x16xbf16> to vector<256x16xbf16>
    %c2_63 = arith.constant 2 : index
    %c1_64 = arith.constant 1 : index
    %c0_65 = arith.constant 0 : index
    %c0_66 = arith.constant 0 : index
    %51 = vector.load %arg2[%c2_63, %c1_64, %c0_65, %c0_66] : memref<3x3x16x128xbf16, #tpu.memory_space<vmem>>, vector<1x1x16x128xbf16>
    %52 = vector.shape_cast %51 : vector<1x1x16x128xbf16> to vector<16x128xbf16>
    %cst_67 = arith.constant dense<0.000000e+00> : vector<256x128xf32>
    %53 = tpu.matmul %50, %52, %cst_67 {dimension_numbers = #tpu.dot_dimension_numbers<[1], [0], [0], [1], [0, 0, 1, 1], [], []>} : vector<256x16xbf16>, vector<16x128xbf16>, vector<256x128xf32> -> vector<256x128xf32>
    %54 = arith.addf %47, %53 : vector<256x128xf32>
    %c0_68 = arith.constant 0 : index
    %c2_69 = arith.constant 2 : index
    %c2_70 = arith.constant 2 : index
    %c0_71 = arith.constant 0 : index
    %55 = vector.load %arg1[%c0_68, %c2_69, %c2_70, %c0_71] : memref<1x10x34x16xbf16, #tpu.memory_space<vmem>>, vector<1x8x32x16xbf16>
    %56 = vector.shape_cast %55 : vector<1x8x32x16xbf16> to vector<8x32x16xbf16>
    %57 = vector.shape_cast %56 : vector<8x32x16xbf16> to vector<256x16xbf16>
    %c2_72 = arith.constant 2 : index
    %c2_73 = arith.constant 2 : index
    %c0_74 = arith.constant 0 : index
    %c0_75 = arith.constant 0 : index
    %58 = vector.load %arg2[%c2_72, %c2_73, %c0_74, %c0_75] : memref<3x3x16x128xbf16, #tpu.memory_space<vmem>>, vector<1x1x16x128xbf16>
    %59 = vector.shape_cast %58 : vector<1x1x16x128xbf16> to vector<16x128xbf16>
    %cst_76 = arith.constant dense<0.000000e+00> : vector<256x128xf32>
    %60 = tpu.matmul %57, %59, %cst_76 {dimension_numbers = #tpu.dot_dimension_numbers<[1], [0], [0], [1], [0, 0, 1, 1], [], []>} : vector<256x16xbf16>, vector<16x128xbf16>, vector<256x128xf32> -> vector<256x128xf32>
    %61 = arith.addf %54, %60 : vector<256x128xf32>
    %c0_77 = arith.constant 0 : index
    %c0_78 = arith.constant 0 : index
    %c0_79 = arith.constant 0 : index
    %62 = vector.load %arg3[%c0_77, %c0_78, %c0_79] : memref<1x256x128xf32, #tpu.memory_space<vmem>>, vector<1x256x128xf32>
    %63 = vector.shape_cast %62 : vector<1x256x128xf32> to vector<256x128xf32>
    %64 = vector.shape_cast %61 : vector<256x128xf32> to vector<1x256x128xf32>
    tpu.vector_store %arg3[%c0_77, %c0_78, %c0_79], %64 {strides = array<i32>} : memref<1x256x128xf32, #tpu.memory_space<vmem>>, vector<1x256x128xf32>,
    %cst_80 = arith.constant dense<0.000000e+00> : vector<128xf32>
    %65 = vector.multi_reduction <add>, %61, %cst_80 [0] : vector<256x128xf32> to vector<128xf32>
    %66 = vector.shape_cast %65 : vector<128xf32> to vector<1x128xf32>
    %c0_81 = arith.constant 0 : index
    %c0_82 = arith.constant 0 : index
    %c0_83 = arith.constant 0 : index
    %67 = vector.load %arg4[%c0_81, %c0_82, %c0_83] : memref<1x1x128xf32, #tpu.memory_space<vmem>>, vector<1x1x128xf32>
    %68 = vector.shape_cast %67 : vector<1x1x128xf32> to vector<1x128xf32>
    %69 = vector.shape_cast %66 : vector<1x128xf32> to vector<1x1x128xf32>
    tpu.vector_store %arg4[%c0_81, %c0_82, %c0_83], %69 {strides = array<i32>} : memref<1x1x128xf32, #tpu.memory_space<vmem>>, vector<1x1x128xf32>,
    %70 = arith.mulf %61, %61 : vector<256x128xf32>
    %cst_84 = arith.constant dense<0.000000e+00> : vector<128xf32>
    %71 = vector.multi_reduction <add>, %70, %cst_84 [0] : vector<256x128xf32> to vector<128xf32>
    %72 = vector.shape_cast %71 : vector<128xf32> to vector<1x128xf32>
    %c0_85 = arith.constant 0 : index
    %c0_86 = arith.constant 0 : index
    %c0_87 = arith.constant 0 : index
    %73 = vector.load %arg5[%c0_85, %c0_86, %c0_87] : memref<1x1x128xf32, #tpu.memory_space<vmem>>, vector<1x1x128xf32>
    %74 = vector.shape_cast %73 : vector<1x1x128xf32> to vector<1x128xf32>
    %75 = vector.shape_cast %72 : vector<1x128xf32> to vector<1x1x128xf32>
    tpu.vector_store %arg5[%c0_85, %c0_86, %c0_87], %75 {strides = array<i32>} : memref<1x1x128xf32, #tpu.memory_space<vmem>>, vector<1x1x128xf32>,
    return
  }
  func.func @transform_0(%arg0: i32) -> (i32, i32, i32, i32) {
    %c0_i32 = arith.constant 0 : i32
    %c0_i32_0 = arith.constant 0 : i32
    %c0_i32_1 = arith.constant 0 : i32
    %c0_i32_2 = arith.constant 0 : i32
    return %arg0, %c0_i32, %c0_i32_0, %c0_i32_1 : i32, i32, i32, i32
  }
  func.func @transform_1(%arg0: i32) -> (i32, i32, i32, i32) {
    %c0_i32 = arith.constant 0 : i32
    %c0_i32_0 = arith.constant 0 : i32
    %c0_i32_1 = arith.constant 0 : i32
    %c0_i32_2 = arith.constant 0 : i32
    %c0_i32_3 = arith.constant 0 : i32
    return %c0_i32, %c0_i32_0, %c0_i32_1, %c0_i32_2 : i32, i32, i32, i32
  }
  func.func @transform_2(%arg0: i32) -> (i32, i32, i32) {
    %c0_i32 = arith.constant 0 : i32
    %c0_i32_0 = arith.constant 0 : i32
    %c0_i32_1 = arith.constant 0 : i32
    return %arg0, %c0_i32, %c0_i32_0 : i32, i32, i32
  }
  func.func @transform_3(%arg0: i32) -> (i32, i32, i32) {
    %c0_i32 = arith.constant 0 : i32
    %c0_i32_0 = arith.constant 0 : i32
    %c0_i32_1 = arith.constant 0 : i32
    return %arg0, %c0_i32, %c0_i32_0 : i32, i32, i32
  }
  func.func @transform_4(%arg0: i32) -> (i32, i32, i32) {
    %c0_i32 = arith.constant 0 : i32
    %c0_i32_0 = arith.constant 0 : i32
    %c0_i32_1 = arith.constant 0 : i32
    return %arg0, %c0_i32, %c0_i32_0 : i32, i32, i32
  }
}

module attributes {stable_mosaic.version = 11 : i64} {
  func.func @_bn_relu_apply_kernel(%arg0: i32, %arg1: memref<1024x128xf32, #tpu.memory_space<vmem>>, %arg2: memref<1x128xf32, #tpu.memory_space<vmem>>, %arg3: memref<1x128xf32, #tpu.memory_space<vmem>>, %arg4: memref<1024x128xf32, #tpu.memory_space<vmem>>) attributes {dimension_semantics = [#tpu.dimension_semantics<parallel>], iteration_bounds = array<i64: 2>, scalar_prefetch = 0 : i64, scratch_operands = 0 : i64, tpu.core_type = #tpu.core_type<tc>, window_params = [{transform_indices = @transform_0, window_bounds = array<i64: 1024, 128>}, {pipeline_mode = #tpu.pipeline_mode<synchronous>, transform_indices = @transform_1, window_bounds = array<i64: 1, 128>}, {pipeline_mode = #tpu.pipeline_mode<synchronous>, transform_indices = @transform_2, window_bounds = array<i64: 1, 128>}, {transform_indices = @transform_3, window_bounds = array<i64: 1024, 128>}]} {
    %c0 = arith.constant 0 : index
    %c0_0 = arith.constant 0 : index
    %0 = vector.load %arg1[%c0, %c0_0] : memref<1024x128xf32, #tpu.memory_space<vmem>>, vector<1024x128xf32>
    %c0_1 = arith.constant 0 : index
    %c0_2 = arith.constant 0 : index
    %1 = vector.load %arg2[%c0_1, %c0_2] : memref<1x128xf32, #tpu.memory_space<vmem>>, vector<1x128xf32>
    %2 = vector.broadcast %1 : vector<1x128xf32> to vector<1024x128xf32>
    %3 = arith.mulf %0, %2 : vector<1024x128xf32>
    %c0_3 = arith.constant 0 : index
    %c0_4 = arith.constant 0 : index
    %4 = vector.load %arg3[%c0_3, %c0_4] : memref<1x128xf32, #tpu.memory_space<vmem>>, vector<1x128xf32>
    %5 = vector.broadcast %4 : vector<1x128xf32> to vector<1024x128xf32>
    %6 = arith.addf %3, %5 : vector<1024x128xf32>
    %cst = arith.constant 0.000000e+00 : f32
    %7 = vector.broadcast %cst : f32 to vector<1024x128xf32>
    %8 = arith.maximumf %6, %7 : vector<1024x128xf32>
    %c0_5 = arith.constant 0 : index
    %c0_6 = arith.constant 0 : index
    %9 = vector.load %arg4[%c0_5, %c0_6] : memref<1024x128xf32, #tpu.memory_space<vmem>>, vector<1024x128xf32>
    tpu.vector_store %arg4[%c0_5, %c0_6], %8 {strides = array<i32>} : memref<1024x128xf32, #tpu.memory_space<vmem>>, vector<1024x128xf32>,
    return
  }
  func.func @transform_0(%arg0: i32) -> (i32, i32) {
    %c0_i32 = arith.constant 0 : i32
    %c0_i32_0 = arith.constant 0 : i32
    return %arg0, %c0_i32 : i32, i32
  }
  func.func @transform_1(%arg0: i32) -> (i32, i32) {
    %c0_i32 = arith.constant 0 : i32
    %c0_i32_0 = arith.constant 0 : i32
    %c0_i32_1 = arith.constant 0 : i32
    return %c0_i32, %c0_i32_0 : i32, i32
  }
  func.func @transform_2(%arg0: i32) -> (i32, i32) {
    %c0_i32 = arith.constant 0 : i32
    %c0_i32_0 = arith.constant 0 : i32
    %c0_i32_1 = arith.constant 0 : i32
    return %c0_i32, %c0_i32_0 : i32, i32
  }
  func.func @transform_3(%arg0: i32) -> (i32, i32) {
    %c0_i32 = arith.constant 0 : i32
    %c0_i32_0 = arith.constant 0 : i32
    return %arg0, %c0_i32 : i32, i32
  }
}

</mosaic_0001>

<llo_original>
// kernel: up_block_forward.3
$region0: #{up_block_forward.3}
  #allocation0 [shape = 'u32[]', space=smem, size = 0x4, offset = 0x4, fixed_abs, tag = 'smem constant byte address 0x4 - core index']
  #allocation1 [shape = 'u32[144,128]{1,0:T(1,128)}', space=vmem, size = 0x12000, scoped, tag = 'internal scratch']
  %s0 = inlined_call_operand.vmem [shape: f32[2048,128], index: 0, kind: input, shape index: {}]
  %s1 = inlined_call_operand.vmem [shape: f32[1,128], index: 1, kind: input, shape index: {}]
  %s2 = inlined_call_operand.vmem [shape: f32[1,128], index: 2, kind: input, shape index: {}]
  %s3 = inlined_call_operand.vmem [shape: f32[2048,128], index: 3, kind: output, shape index: {}]
  %s4 = sld [smem:[#allocation0]]
  $region45: #{up_block_forward.3} parent=0
    _
  %s6 = ssub.s32 1, %s4
  %s7 = scalar_select 0, %s6, %s4
  loop: start=0, step=1, limit=4
  $region2: #{up_block_forward.3} parent=0 // loop_pre_header
    _
  $region3: #{up_block_forward.3} parent=0 // loop_header
    %s9 = sphi 0, %s13
    %p10 = scmp.ge.s32.totalorder %s9, 4
    %s19 = sphi 0, %s21
    %s22 = sphi 0, %s19
    %s23 = sphi 0, %s22
    %s39 = sphi 0, %s23
    %s43 = sphi 0, %s43
    %s45 = sphi 0, %s43
    %s46 = sphi 0, %s45
    %s60 = sphi 0, %s46
    %s64 = sphi 0, %s64
    %s66 = sphi 0, %s64
    %s67 = sphi 0, %s66
    %s81 = sphi 0, %s67
    %s87 = sphi 0, %s89
    %s90 = sphi 0, %s87
    %s91 = sphi 0, %s90
    %s107 = sphi 0, %s91
  $region4: #{up_block_forward.3} parent=0 // loop_header_branch
    %12 = sbr.rel (%p10) target = $region8
  $region5: #{up_block_forward.3} parent=0 // loop_body
    %s14 = ssub.s32 %s9, 1
    %s15 = ssub.s32 %s9, 2
    %s16 = sadd.s32 %s9, 1
    %s17 = ssub.s32 %s9, %s16
    %p18 = scmp.eq.s32.totalorder %s17, 0
    %s20 = sadd.s32 %s19, 1
    %s21 = scalar_select %p18, %s19, %s20
    %p24 = pneg %p18
    %p25 = scmp.eq.s32.totalorder %s9, 1
    %p26 = por %p24, %p25
    %p27 = scmp.ne.s32.totalorder %s19, %s22
    %p28 = scmp.eq.s32.totalorder %s9, 0
    %p29 = por %p27, %p28
    %p30 = scmp.ne.s32.totalorder %s19, %s22
    %p31 = scmp.eq.s32.totalorder %s14, 1
    %p32 = por %p30, %p31
    %p33 = scmp.ne.s32.totalorder %s22, %s23
    %p34 = scmp.eq.s32.totalorder %s14, 0
    %p35 = por %p33, %p34
    %p36 = scmp.ne.s32.totalorder %s22, %s23
    %p37 = scmp.eq.s32.totalorder %s15, 1
    %p38 = por %p36, %p37
    %p40 = scmp.ne.s32.totalorder %s23, %s39
    %p41 = scmp.eq.s32.totalorder %s15, 0
    %p42 = por %p40, %p41
    %s44 = sadd.s32 %s43, 1
    %p47 = scmp.eq.s32.totalorder %s9, 1
    %p48 = scmp.ne.s32.totalorder %s43, %s45
    %p49 = scmp.eq.s32.totalorder %s9, 0
    %p50 = por %p48, %p49
    %p51 = scmp.ne.s32.totalorder %s43, %s45
    %p52 = scmp.eq.s32.totalorder %s14, 1
    %p53 = por %p51, %p52
    %p54 = scmp.ne.s32.totalorder %s45, %s46
    %p55 = scmp.eq.s32.totalorder %s14, 0
    %p56 = por %p54, %p55
    %p57 = scmp.ne.s32.totalorder %s45, %s46
    %p58 = scmp.eq.s32.totalorder %s15, 1
    %p59 = por %p57, %p58
    %p61 = scmp.ne.s32.totalorder %s46, %s60
    %p62 = scmp.eq.s32.totalorder %s15, 0
    %p63 = por %p61, %p62
    %s65 = sadd.s32 %s64, 1
    %p68 = scmp.eq.s32.totalorder %s9, 1
    %p69 = scmp.ne.s32.totalorder %s64, %s66
    %p70 = scmp.eq.s32.totalorder %s9, 0
    %p71 = por %p69, %p70
    %p72 = scmp.ne.s32.totalorder %s64, %s66
    %p73 = scmp.eq.s32.totalorder %s14, 1
    %p74 = por %p72, %p73
    %p75 = scmp.ne.s32.totalorder %s66, %s67
    %p76 = scmp.eq.s32.totalorder %s14, 0
    %p77 = por %p75, %p76
    %p78 = scmp.ne.s32.totalorder %s66, %s67
    %p79 = scmp.eq.s32.totalorder %s15, 1
    %p80 = por %p78, %p79
    %p82 = scmp.ne.s32.totalorder %s67, %s81
    %p83 = scmp.eq.s32.totalorder %s15, 0
    %p84 = por %p82, %p83
    %s85 = ssub.s32 %s9, %s16
    %p86 = scmp.eq.s32.totalorder %s85, 0
    %s88 = sadd.s32 %s87, 1
    %s89 = scalar_select %p86, %s87, %s88
    %p92 = pneg %p86
    %p93 = scmp.eq.s32.totalorder %s9, 1
    %p94 = por %p92, %p93
    %p95 = scmp.ne.s32.totalorder %s87, %s90
    %p96 = scmp.eq.s32.totalorder %s9, 0
    %p97 = por %p95, %p96
    %p98 = scmp.ne.s32.totalorder %s87, %s90
    %p99 = scmp.eq.s32.totalorder %s14, 1
    %p100 = por %p98, %p99
    %p101 = scmp.ne.s32.totalorder %s90, %s91
    %p102 = scmp.eq.s32.totalorder %s14, 0
    %p103 = por %p101, %p102
    %p104 = scmp.ne.s32.totalorder %s90, %s91
    %p105 = scmp.eq.s32.totalorder %s15, 1
    %p106 = por %p104, %p105
    %p108 = scmp.ne.s32.totalorder %s91, %s107
    %p109 = scmp.eq.s32.totalorder %s15, 0
    %p110 = por %p108, %p109
    %p111 = scmp.le.s32.totalorder 1, %s9
    %p112 = scmp.lt.s32.totalorder %s9, 3
    %p113 = pnand %p111, %p112
    %p114 = pneg %p113
    // Predicated region
    $region9: #{up_block_forward.3} parent=5 // pred_check
      _
    $region10: #{up_block_forward.3} parent=5 // pred_check_branch
      %116 = sbr.rel (%p113) target = $region12
    $region11: #{up_block_forward.3} parent=5 // pred_region
      %s117 = ssub.s32 %s9, 1
      // Predicated region
      $region13: #{up_block_forward.3} parent=11 // pred_check
        %p118 = pneg %p56
      $region14: #{up_block_forward.3} parent=11 // pred_check_branch
        %120 = sbr.rel (%p118) target = $region16
      $region15: #{up_block_forward.3} parent=11 // pred_region
        _
      $region16: #{up_block_forward.3} parent=11 // pred_fallthru
        _
      // Predicated region
      $region17: #{up_block_forward.3} parent=11 // pred_check
        %p121 = pneg %p77
      $region18: #{up_block_forward.3} parent=11 // pred_check_branch
        %123 = sbr.rel (%p121) target = $region20
      $region19: #{up_block_forward.3} parent=11 // pred_region
        _
      $region20: #{up_block_forward.3} parent=11 // pred_fallthru
        _
    $region12: #{up_block_forward.3} parent=5 // pred_fallthru
      _
    %p124 = scmp.lt.s32.totalorder %s9, 2
    // Predicated region
    $region21: #{up_block_forward.3} parent=5 // pred_check
      %p125 = pneg %p124
    $region22: #{up_block_forward.3} parent=5 // pred_check_branch
      %127 = sbr.rel (%p125) target = $region24
    $region23: #{up_block_forward.3} parent=5 // pred_region
      // Predicated region
      $region25: #{up_block_forward.3} parent=23 // pred_check
        %p128 = pneg %p29
      $region26: #{up_block_forward.3} parent=23 // pred_check_branch
        %130 = sbr.rel (%p128) target = $region28
      $region27: #{up_block_forward.3} parent=23 // pred_region
        %s131 = smul.u32 128, %s9
        %p132 = scmp.lt.s32.totalorder %s131, 255
        %s133 = scalar_select %p132, %s131, 255
        %s134 = smul.addr %s133, 8
        %s135 = scalar_lea.vmem %s0, %s134
        %s136 = smul.u32 128, %s9
      $region28: #{up_block_forward.3} parent=23 // pred_fallthru
        _
    $region24: #{up_block_forward.3} parent=5 // pred_fallthru
      _
    %p137 = scmp.le.s32.totalorder 1, %s9
    %p138 = scmp.lt.s32.totalorder %s9, 3
    %p139 = pnand %p137, %p138
    %p140 = pneg %p139
    // Predicated region
    $region29: #{up_block_forward.3} parent=5 // pred_check
      _
    $region30: #{up_block_forward.3} parent=5 // pred_check_branch
      %142 = sbr.rel (%p139) target = $region32
    $region31: #{up_block_forward.3} parent=5 // pred_region
      %s143 = ssub.s32 %s9, 1
      %s144 = smul.u32 128, %s14
      %p145 = scmp.lt.s32.totalorder %s144, 255
      %s146 = scalar_select %p145, %s144, 255
      %s147 = smul.addr %s146, 8
      %s148 = scalar_lea.vmem %s0, %s147
      %p149 = pneg %p35
      %p150 = pneg %p32
      %p151 = pneg %p56
      %p152 = pneg %p53
      %p153 = pneg %p77
      %p154 = pneg %p74
      %p155 = pneg %p103
      %p156 = pneg %p100
      %s157 = smul.u32 128, %s14
      %p158 = scmp.lt.s32.totalorder %s157, 255
      %s159 = scalar_select %p158, %s157, 255
      %s160 = smul.addr %s159, 8
      %s161 = scalar_lea.vmem %s3, %s160
      %s162 = smul.u32 128, %s14
      %p163 = scmp.lt.s32.totalorder %s162, 255
      %s164 = scalar_select %p163, %s162, 255
      %s165 = smul.addr %s164, 8
      %s166 = scalar_lea.vmem %s0, %s165
      %s167 = smul.u32 128, %s14
      %s168 = smul.u32 128, %s14
      %p169 = scmp.lt.s32.totalorder %s168, 255
      %s170 = scalar_select %p169, %s168, 255
      %s171 = smul.addr %s170, 8
      %s172 = scalar_lea.vmem %s3, %s171
      %s173 = smul.u32 128, %s14
      %v174 = vld [vmem:[%s166] sm:$0xff]
      %v175 = vld [vmem:[%s166 + $0x8] sm:$0xff]
      %v176 = vld [vmem:[%s166 + $0x10] sm:$0xff]
      %v177 = vld [vmem:[%s166 + $0x18] sm:$0xff]
      %v178 = vld [vmem:[%s166 + $0x20] sm:$0xff]
      %v179 = vld [vmem:[%s166 + $0x28] sm:$0xff]
      %v180 = vld [vmem:[%s166 + $0x30] sm:$0xff]
      %v181 = vld [vmem:[%s166 + $0x38] sm:$0xff]
      %v182 = vld [vmem:[%s166 + $0x40] sm:$0xff]
      %v183 = vld [vmem:[%s166 + $0x48] sm:$0xff]
      %v184 = vld [vmem:[%s166 + $0x50] sm:$0xff]
      %v185 = vld [vmem:[%s166 + $0x58] sm:$0xff]
      %v186 = vld [vmem:[%s166 + $0x60] sm:$0xff]
      %v187 = vld [vmem:[%s166 + $0x68] sm:$0xff]
      %v188 = vld [vmem:[%s166 + $0x70] sm:$0xff]
      %v189 = vld [vmem:[%s166 + $0x78] sm:$0xff]
      %v190 = vld [vmem:[%s166 + $0x80] sm:$0xff]
      %v191 = vld [vmem:[%s166 + $0x88] sm:$0xff]
      %v192 = vld [vmem:[%s166 + $0x90] sm:$0xff]
      %v193 = vld [vmem:[%s166 + $0x98] sm:$0xff]
      %v194 = vld [vmem:[%s166 + $0xa0] sm:$0xff]
      %v195 = vld [vmem:[%s166 + $0xa8] sm:$0xff]
      %v196 = vld [vmem:[%s166 + $0xb0] sm:$0xff]
      %v197 = vld [vmem:[%s166 + $0xb8] sm:$0xff]
      %v198 = vld [vmem:[%s166 + $0xc0] sm:$0xff]
      %v199 = vld [vmem:[%s166 + $0xc8] sm:$0xff]
      %v200 = vld [vmem:[%s166 + $0xd0] sm:$0xff]
      %v201 = vld [vmem:[%s166 + $0xd8] sm:$0xff]
      %v202 = vld [vmem:[%s166 + $0xe0] sm:$0xff]
      %v203 = vld [vmem:[%s166 + $0xe8] sm:$0xff]
      %v204 = vld [vmem:[%s166 + $0xf0] sm:$0xff]
      %v205 = vld [vmem:[%s166 + $0xf8] sm:$0xff]
      %v206 = vld [vmem:[%s166 + $0x100] sm:$0xff]
      %v207 = vld [vmem:[%s166 + $0x108] sm:$0xff]
      %v208 = vld [vmem:[%s166 + $0x110] sm:$0xff]
      %v209 = vld [vmem:[%s166 + $0x118] sm:$0xff]
      %v210 = vld [vmem:[%s166 + $0x120] sm:$0xff]
      %v211 = vld [vmem:[%s166 + $0x128] sm:$0xff]
      %v212 = vld [vmem:[%s166 + $0x130] sm:$0xff]
      %v213 = vld [vmem:[%s166 + $0x138] sm:$0xff]
      %v214 = vld [vmem:[%s166 + $0x140] sm:$0xff]
      %v215 = vld [vmem:[%s166 + $0x148] sm:$0xff]
      %v216 = vld [vmem:[%s166 + $0x150] sm:$0xff]
      %v217 = vld [vmem:[%s166 + $0x158] sm:$0xff]
      %v218 = vld [vmem:[%s166 + $0x160] sm:$0xff]
      %v219 = vld [vmem:[%s166 + $0x168] sm:$0xff]
      %v220 = vld [vmem:[%s166 + $0x170] sm:$0xff]
      %v221 = vld [vmem:[%s166 + $0x178] sm:$0xff]
      %v222 = vld [vmem:[%s166 + $0x180] sm:$0xff]
      %v223 = vld [vmem:[%s166 + $0x188] sm:$0xff]
      %v224 = vld [vmem:[%s166 + $0x190] sm:$0xff]
      %v225 = vld [vmem:[%s166 + $0x198] sm:$0xff]
      %v226 = vld [vmem:[%s166 + $0x1a0] sm:$0xff]
      %v227 = vld [vmem:[%s166 + $0x1a8] sm:$0xff]
      %v228 = vld [vmem:[%s166 + $0x1b0] sm:$0xff]
      %v229 = vld [vmem:[%s166 + $0x1b8] sm:$0xff]
      %v230 = vld [vmem:[%s166 + $0x1c0] sm:$0xff]
      %v231 = vld [vmem:[%s166 + $0x1c8] sm:$0xff]
      %v232 = vld [vmem:[%s166 + $0x1d0] sm:$0xff]
      %v233 = vld [vmem:[%s166 + $0x1d8] sm:$0xff]
      %v234 = vld [vmem:[%s166 + $0x1e0] sm:$0xff]
      %v235 = vld [vmem:[%s166 + $0x1e8] sm:$0xff]
      %v236 = vld [vmem:[%s166 + $0x1f0] sm:$0xff]
      %v237 = vld [vmem:[%s166 + $0x1f8] sm:$0xff]
      %v238 = vld [vmem:[%s166 + $0x200] sm:$0xff]
      %v239 = vld [vmem:[%s166 + $0x208] sm:$0xff]
      %v240 = vld [vmem:[%s166 + $0x210] sm:$0xff]
      %v241 = vld [vmem:[%s166 + $0x218] sm:$0xff]
      %v242 = vld [vmem:[%s166 + $0x220] sm:$0xff]
      %v243 = vld [vmem:[%s166 + $0x228] sm:$0xff]
      %v244 = vld [vmem:[%s166 + $0x230] sm:$0xff]
      %v245 = vld [vmem:[%s166 + $0x238] sm:$0xff]
      %v246 = vld [vmem:[%s166 + $0x240] sm:$0xff]
      %v247 = vld [vmem:[%s166 + $0x248] sm:$0xff]
      %v248 = vld [vmem:[%s166 + $0x250] sm:$0xff]
      %v249 = vld [vmem:[%s166 + $0x258] sm:$0xff]
      %v250 = vld [vmem:[%s166 + $0x260] sm:$0xff]
      %v251 = vld [vmem:[%s166 + $0x268] sm:$0xff]
      %v252 = vld [vmem:[%s166 + $0x270] sm:$0xff]
      %v253 = vld [vmem:[%s166 + $0x278] sm:$0xff]
      %v254 = vld [vmem:[%s166 + $0x280] sm:$0xff]
      %v255 = vld [vmem:[%s166 + $0x288] sm:$0xff]
      %v256 = vld [vmem:[%s166 + $0x290] sm:$0xff]
      %v257 = vld [vmem:[%s166 + $0x298] sm:$0xff]
      %v258 = vld [vmem:[%s166 + $0x2a0] sm:$0xff]
      %v259 = vld [vmem:[%s166 + $0x2a8] sm:$0xff]
      %v260 = vld [vmem:[%s166 + $0x2b0] sm:$0xff]
      %v261 = vld [vmem:[%s166 + $0x2b8] sm:$0xff]
      %v262 = vld [vmem:[%s166 + $0x2c0] sm:$0xff]
      %v263 = vld [vmem:[%s166 + $0x2c8] sm:$0xff]
      %v264 = vld [vmem:[%s166 + $0x2d0] sm:$0xff]
      %v265 = vld [vmem:[%s166 + $0x2d8] sm:$0xff]
      %v266 = vld [vmem:[%s166 + $0x2e0] sm:$0xff]
      %v267 = vld [vmem:[%s166 + $0x2e8] sm:$0xff]
      %v268 = vld [vmem:[%s166 + $0x2f0] sm:$0xff]
      %v269 = vld [vmem:[%s166 + $0x2f8] sm:$0xff]
      %v270 = vld [vmem:[%s166 + $0x300] sm:$0xff]
      %v271 = vld [vmem:[%s166 + $0x308] sm:$0xff]
      %v272 = vld [vmem:[%s166 + $0x310] sm:$0xff]
      %v273 = vld [vmem:[%s166 + $0x318] sm:$0xff]
      %v274 = vld [vmem:[%s166 + $0x320] sm:$0xff]
      %v275 = vld [vmem:[%s166 + $0x328] sm:$0xff]
      %v276 = vld [vmem:[%s166 + $0x330] sm:$0xff]
      %v277 = vld [vmem:[%s166 + $0x338] sm:$0xff]
      %v278 = vld [vmem:[%s166 + $0x340] sm:$0xff]
      %v279 = vld [vmem:[%s166 + $0x348] sm:$0xff]
      %v280 = vld [vmem:[%s166 + $0x350] sm:$0xff]
      %v281 = vld [vmem:[%s166 + $0x358] sm:$0xff]
      %v282 = vld [vmem:[%s166 + $0x360] sm:$0xff]
      %v283 = vld [vmem:[%s166 + $0x368] sm:$0xff]
      %v284 = vld [vmem:[%s166 + $0x370] sm:$0xff]
      %v285 = vld [vmem:[%s166 + $0x378] sm:$0xff]
      %v286 = vld [vmem:[%s166 + $0x380] sm:$0xff]
      %v287 = vld [vmem:[%s166 + $0x388] sm:$0xff]
      %v288 = vld [vmem:[%s166 + $0x390] sm:$0xff]
      %v289 = vld [vmem:[%s166 + $0x398] sm:$0xff]
      %v290 = vld [vmem:[%s166 + $0x3a0] sm:$0xff]
      %v291 = vld [vmem:[%s166 + $0x3a8] sm:$0xff]
      %v292 = vld [vmem:[%s166 + $0x3b0] sm:$0xff]
      %v293 = vld [vmem:[%s166 + $0x3b8] sm:$0xff]
      %v294 = vld [vmem:[%s166 + $0x3c0] sm:$0xff]
      %v295 = vld [vmem:[%s166 + $0x3c8] sm:$0xff]
      %v296 = vld [vmem:[%s166 + $0x3d0] sm:$0xff]
      %v297 = vld [vmem:[%s166 + $0x3d8] sm:$0xff]
      %v298 = vld [vmem:[%s166 + $0x3e0] sm:$0xff]
      %v299 = vld [vmem:[%s166 + $0x3e8] sm:$0xff]
      %v300 = vld [vmem:[%s166 + $0x3f0] sm:$0xff]
      %v301 = vld [vmem:[%s166 + $0x3f8] sm:$0xff]
      %v302 = vld [vmem:[%s1] sm:$0x1]
      %v304 = vlaneseq
      %v305 = vshrl.u32 %v304, 7
      %v306 = vsub.s32 0, %v305
      %v307 = vrot.slane %v302, %v306
      %v309 = vmul.f32 %v174, %v307
      %v310 = vmul.f32 %v175, %v307
      %v311 = vmul.f32 %v176, %v307
      %v312 = vmul.f32 %v177, %v307
      %v313 = vmul.f32 %v178, %v307
      %v314 = vmul.f32 %v179, %v307
      %v315 = vmul.f32 %v180, %v307
      %v316 = vmul.f32 %v181, %v307
      %v317 = vmul.f32 %v182, %v307
      %v318 = vmul.f32 %v183, %v307
      %v319 = vmul.f32 %v184, %v307
      %v320 = vmul.f32 %v185, %v307
      %v321 = vmul.f32 %v186, %v307
      %v322 = vmul.f32 %v187, %v307
      %v323 = vmul.f32 %v188, %v307
      %v324 = vmul.f32 %v189, %v307
      %v325 = vmul.f32 %v190, %v307
      %v326 = vmul.f32 %v191, %v307
      %v327 = vmul.f32 %v192, %v307
      %v328 = vmul.f32 %v193, %v307
      %v329 = vmul.f32 %v194, %v307
      %v330 = vmul.f32 %v195, %v307
      %v331 = vmul.f32 %v196, %v307
      %v332 = vmul.f32 %v197, %v307
      %v333 = vmul.f32 %v198, %v307
      %v334 = vmul.f32 %v199, %v307
      %v335 = vmul.f32 %v200, %v307
      %v336 = vmul.f32 %v201, %v307
      %v337 = vmul.f32 %v202, %v307
      %v338 = vmul.f32 %v203, %v307
      %v339 = vmul.f32 %v204, %v307
      %v340 = vmul.f32 %v205, %v307
      %v341 = vmul.f32 %v206, %v307
      %v342 = vmul.f32 %v207, %v307
      %v343 = vmul.f32 %v208, %v307
      %v344 = vmul.f32 %v209, %v307
      %v345 = vmul.f32 %v210, %v307
      %v346 = vmul.f32 %v211, %v307
      %v347 = vmul.f32 %v212, %v307
      %v348 = vmul.f32 %v213, %v307
      %v349 = vmul.f32 %v214, %v307
      %v350 = vmul.f32 %v215, %v307
      %v351 = vmul.f32 %v216, %v307
      %v352 = vmul.f32 %v217, %v307
      %v353 = vmul.f32 %v218, %v307
      %v354 = vmul.f32 %v219, %v307
      %v355 = vmul.f32 %v220, %v307
      %v356 = vmul.f32 %v221, %v307
      %v357 = vmul.f32 %v222, %v307
      %v358 = vmul.f32 %v223, %v307
      %v359 = vmul.f32 %v224, %v307
      %v360 = vmul.f32 %v225, %v307
      %v361 = vmul.f32 %v226, %v307
      %v362 = vmul.f32 %v227, %v307
      %v363 = vmul.f32 %v228, %v307
      %v364 = vmul.f32 %v229, %v307
      %v365 = vmul.f32 %v230, %v307
      %v366 = vmul.f32 %v231, %v307
      %v367 = vmul.f32 %v232, %v307
      %v368 = vmul.f32 %v233, %v307
      %v369 = vmul.f32 %v234, %v307
      %v370 = vmul.f32 %v235, %v307
      %v371 = vmul.f32 %v236, %v307
      %v372 = vmul.f32 %v237, %v307
      %v373 = vmul.f32 %v238, %v307
      %v374 = vmul.f32 %v239, %v307
      %v375 = vmul.f32 %v240, %v307
      %v376 = vmul.f32 %v241, %v307
      %v377 = vmul.f32 %v242, %v307
      %v378 = vmul.f32 %v243, %v307
      %v379 = vmul.f32 %v244, %v307
      %v380 = vmul.f32 %v245, %v307
      %v381 = vmul.f32 %v246, %v307
      %v382 = vmul.f32 %v247, %v307
      %v383 = vmul.f32 %v248, %v307
      %v384 = vmul.f32 %v249, %v307
      %v385 = vmul.f32 %v250, %v307
      %v386 = vmul.f32 %v251, %v307
      %v387 = vmul.f32 %v252, %v307
      %v388 = vmul.f32 %v253, %v307
      %v389 = vmul.f32 %v254, %v307
      %v390 = vmul.f32 %v255, %v307
      %v391 = vmul.f32 %v256, %v307
      %v392 = vmul.f32 %v257, %v307
      %v393 = vmul.f32 %v258, %v307
      %v394 = vmul.f32 %v259, %v307
      %v395 = vmul.f32 %v260, %v307
      %v396 = vmul.f32 %v261, %v307
      %v397 = vmul.f32 %v262, %v307
      %v398 = vmul.f32 %v263, %v307
      %v399 = vmul.f32 %v264, %v307
      %v400 = vmul.f32 %v265, %v307
      %v401 = vmul.f32 %v266, %v307
      %v402 = vmul.f32 %v267, %v307
      %v403 = vmul.f32 %v268, %v307
      %v404 = vmul.f32 %v269, %v307
      %v405 = vmul.f32 %v270, %v307
      %v406 = vmul.f32 %v271, %v307
      %v407 = vmul.f32 %v272, %v307
      %v408 = vmul.f32 %v273, %v307
      %v409 = vmul.f32 %v274, %v307
      %v410 = vmul.f32 %v275, %v307
      %v411 = vmul.f32 %v276, %v307
      %v412 = vmul.f32 %v277, %v307
      %v413 = vmul.f32 %v278, %v307
      %v414 = vmul.f32 %v279, %v307
      %v415 = vmul.f32 %v280, %v307
      %v416 = vmul.f32 %v281, %v307
      %v417 = vmul.f32 %v282, %v307
      %v418 = vmul.f32 %v283, %v307
      %v419 = vmul.f32 %v284, %v307
      %v420 = vmul.f32 %v285, %v307
      %v421 = vmul.f32 %v286, %v307
      %v422 = vmul.f32 %v287, %v307
      %v423 = vmul.f32 %v288, %v307
      %v424 = vmul.f32 %v289, %v307
      %v425 = vmul.f32 %v290, %v307
      %v426 = vmul.f32 %v291, %v307
      %v427 = vmul.f32 %v292, %v307
      %v428 = vmul.f32 %v293, %v307
      %v429 = vmul.f32 %v294, %v307
      %v430 = vmul.f32 %v295, %v307
      %v431 = vmul.f32 %v296, %v307
      %v432 = vmul.f32 %v297, %v307
      %v433 = vmul.f32 %v298, %v307
      %v434 = vmul.f32 %v299, %v307
      %v435 = vmul.f32 %v300, %v307
      %v436 = vmul.f32 %v301, %v307
      %v437 = vld [vmem:[%s2] sm:$0x1]
      %v439 = vlaneseq
      %v440 = vshrl.u32 %v439, 7
      %v441 = vsub.s32 0, %v440
      %v442 = vrot.slane %v437, %v441
      %v444 = vadd.f32 %v309, %v442
      %v445 = vadd.f32 %v310, %v442
      %v446 = vadd.f32 %v311, %v442
      %v447 = vadd.f32 %v312, %v442
      %v448 = vadd.f32 %v313, %v442
      %v449 = vadd.f32 %v314, %v442
      %v450 = vadd.f32 %v315, %v442
      %v451 = vadd.f32 %v316, %v442
      %v452 = vadd.f32 %v317, %v442
      %v453 = vadd.f32 %v318, %v442
      %v454 = vadd.f32 %v319, %v442
      %v455 = vadd.f32 %v320, %v442
      %v456 = vadd.f32 %v321, %v442
      %v457 = vadd.f32 %v322, %v442
      %v458 = vadd.f32 %v323, %v442
      %v459 = vadd.f32 %v324, %v442
      %v460 = vadd.f32 %v325, %v442
      %v461 = vadd.f32 %v326, %v442
      %v462 = vadd.f32 %v327, %v442
      %v463 = vadd.f32 %v328, %v442
      %v464 = vadd.f32 %v329, %v442
      %v465 = vadd.f32 %v330, %v442
      %v466 = vadd.f32 %v331, %v442
      %v467 = vadd.f32 %v332, %v442
      %v468 = vadd.f32 %v333, %v442
      %v469 = vadd.f32 %v334, %v442
      %v470 = vadd.f32 %v335, %v442
      %v471 = vadd.f32 %v336, %v442
      %v472 = vadd.f32 %v337, %v442
      %v473 = vadd.f32 %v338, %v442
      %v474 = vadd.f32 %v339, %v442
      %v475 = vadd.f32 %v340, %v442
      %v476 = vadd.f32 %v341, %v442
      %v477 = vadd.f32 %v342, %v442
      %v478 = vadd.f32 %v343, %v442
      %v479 = vadd.f32 %v344, %v442
      %v480 = vadd.f32 %v345, %v442
      %v481 = vadd.f32 %v346, %v442
      %v482 = vadd.f32 %v347, %v442
      %v483 = vadd.f32 %v348, %v442
      %v484 = vadd.f32 %v349, %v442
      %v485 = vadd.f32 %v350, %v442
      %v486 = vadd.f32 %v351, %v442
      %v487 = vadd.f32 %v352, %v442
      %v488 = vadd.f32 %v353, %v442
      %v489 = vadd.f32 %v354, %v442
      %v490 = vadd.f32 %v355, %v442
      %v491 = vadd.f32 %v356, %v442
      %v492 = vadd.f32 %v357, %v442
      %v493 = vadd.f32 %v358, %v442
      %v494 = vadd.f32 %v359, %v442
      %v495 = vadd.f32 %v360, %v442
      %v496 = vadd.f32 %v361, %v442
      %v497 = vadd.f32 %v362, %v442
      %v498 = vadd.f32 %v363, %v442
      %v499 = vadd.f32 %v364, %v442
      %v500 = vadd.f32 %v365, %v442
      %v501 = vadd.f32 %v366, %v442
      %v502 = vadd.f32 %v367, %v442
      %v503 = vadd.f32 %v368, %v442
      %v504 = vadd.f32 %v369, %v442
      %v505 = vadd.f32 %v370, %v442
      %v506 = vadd.f32 %v371, %v442
      %v507 = vadd.f32 %v372, %v442
      %v508 = vadd.f32 %v373, %v442
      %v509 = vadd.f32 %v374, %v442
      %v510 = vadd.f32 %v375, %v442
      %v511 = vadd.f32 %v376, %v442
      %v512 = vadd.f32 %v377, %v442
      %v513 = vadd.f32 %v378, %v442
      %v514 = vadd.f32 %v379, %v442
      %v515 = vadd.f32 %v380, %v442
      %v516 = vadd.f32 %v381, %v442
      %v517 = vadd.f32 %v382, %v442
      %v518 = vadd.f32 %v383, %v442
      %v519 = vadd.f32 %v384, %v442
      %v520 = vadd.f32 %v385, %v442
      %v521 = vadd.f32 %v386, %v442
      %v522 = vadd.f32 %v387, %v442
      %v523 = vadd.f32 %v388, %v442
      %v524 = vadd.f32 %v389, %v442
      %v525 = vadd.f32 %v390, %v442
      %v526 = vadd.f32 %v391, %v442
      %v527 = vadd.f32 %v392, %v442
      %v528 = vadd.f32 %v393, %v442
      %v529 = vadd.f32 %v394, %v442
      %v530 = vadd.f32 %v395, %v442
      %v531 = vadd.f32 %v396, %v442
      %v532 = vadd.f32 %v397, %v442
      %v533 = vadd.f32 %v398, %v442
      %v534 = vadd.f32 %v399, %v442
      %v535 = vadd.f32 %v400, %v442
      %v536 = vadd.f32 %v401, %v442
      %v537 = vadd.f32 %v402, %v442
      %v538 = vadd.f32 %v403, %v442
      %v539 = vadd.f32 %v404, %v442
      %v540 = vadd.f32 %v405, %v442
      %v541 = vadd.f32 %v406, %v442
      %v542 = vadd.f32 %v407, %v442
      %v543 = vadd.f32 %v408, %v442
      %v544 = vadd.f32 %v409, %v442
      %v545 = vadd.f32 %v410, %v442
      %v546 = vadd.f32 %v411, %v442
      %v547 = vadd.f32 %v412, %v442
      %v548 = vadd.f32 %v413, %v442
      %v549 = vadd.f32 %v414, %v442
      %v550 = vadd.f32 %v415, %v442
      %v551 = vadd.f32 %v416, %v442
      %v552 = vadd.f32 %v417, %v442
      %v553 = vadd.f32 %v418, %v442
      %v554 = vadd.f32 %v419, %v442
      %v555 = vadd.f32 %v420, %v442
      %v556 = vadd.f32 %v421, %v442
      %v557 = vadd.f32 %v422, %v442
      %v558 = vadd.f32 %v423, %v442
      %v559 = vadd.f32 %v424, %v442
      %v560 = vadd.f32 %v425, %v442
      %v561 = vadd.f32 %v426, %v442
      %v562 = vadd.f32 %v427, %v442
      %v563 = vadd.f32 %v428, %v442
      %v564 = vadd.f32 %v429, %v442
      %v565 = vadd.f32 %v430, %v442
      %v566 = vadd.f32 %v431, %v442
      %v567 = vadd.f32 %v432, %v442
      %v568 = vadd.f32 %v433, %v442
      %v569 = vadd.f32 %v434, %v442
      %v570 = vadd.f32 %v435, %v442
      %v571 = vadd.f32 %v436, %v442
      %v572 = vmax.f32 %v444, 0.0
      %v573 = vmax.f32 %v445, 0.0
      %v574 = vmax.f32 %v446, 0.0
      %v575 = vmax.f32 %v447, 0.0
      %v576 = vmax.f32 %v448, 0.0
      %v577 = vmax.f32 %v449, 0.0
      %v578 = vmax.f32 %v450, 0.0
      %v579 = vmax.f32 %v451, 0.0
      %v580 = vmax.f32 %v452, 0.0
      %v581 = vmax.f32 %v453, 0.0
      %v582 = vmax.f32 %v454, 0.0
      %v583 = vmax.f32 %v455, 0.0
      %v584 = vmax.f32 %v456, 0.0
      %v585 = vmax.f32 %v457, 0.0
      %v586 = vmax.f32 %v458, 0.0
      %v587 = vmax.f32 %v459, 0.0
      %v588 = vmax.f32 %v460, 0.0
      %v589 = vmax.f32 %v461, 0.0
      %v590 = vmax.f32 %v462, 0.0
      %v591 = vmax.f32 %v463, 0.0
      %v592 = vmax.f32 %v464, 0.0
      %v593 = vmax.f32 %v465, 0.0
      %v594 = vmax.f32 %v466, 0.0
      %v595 = vmax.f32 %v467, 0.0
      %v596 = vmax.f32 %v468, 0.0
      %v597 = vmax.f32 %v469, 0.0
      %v598 = vmax.f32 %v470, 0.0
      %v599 = vmax.f32 %v471, 0.0
      %v600 = vmax.f32 %v472, 0.0
      %v601 = vmax.f32 %v473, 0.0
      %v602 = vmax.f32 %v474, 0.0
      %v603 = vmax.f32 %v475, 0.0
      %v604 = vmax.f32 %v476, 0.0
      %v605 = vmax.f32 %v477, 0.0
      %v606 = vmax.f32 %v478, 0.0
      %v607 = vmax.f32 %v479, 0.0
      %v608 = vmax.f32 %v480, 0.0
      %v609 = vmax.f32 %v481, 0.0
      %v610 = vmax.f32 %v482, 0.0
      %v611 = vmax.f32 %v483, 0.0
      %v612 = vmax.f32 %v484, 0.0
      %v613 = vmax.f32 %v485, 0.0
      %v614 = vmax.f32 %v486, 0.0
      %v615 = vmax.f32 %v487, 0.0
      %v616 = vmax.f32 %v488, 0.0
      %v617 = vmax.f32 %v489, 0.0
      %v618 = vmax.f32 %v490, 0.0
      %v619 = vmax.f32 %v491, 0.0
      %v620 = vmax.f32 %v492, 0.0
      %v621 = vmax.f32 %v493, 0.0
      %v622 = vmax.f32 %v494, 0.0
      %v623 = vmax.f32 %v495, 0.0
      %v624 = vmax.f32 %v496, 0.0
      %v625 = vmax.f32 %v497, 0.0
      %v626 = vmax.f32 %v498, 0.0
      %v627 = vmax.f32 %v499, 0.0
      %v628 = vmax.f32 %v500, 0.0
      %v629 = vmax.f32 %v501, 0.0
      %v630 = vmax.f32 %v502, 0.0
      %v631 = vmax.f32 %v503, 0.0
      %v632 = vmax.f32 %v504, 0.0
      %v633 = vmax.f32 %v505, 0.0
      %v634 = vmax.f32 %v506, 0.0
      %v635 = vmax.f32 %v507, 0.0
      %v636 = vmax.f32 %v508, 0.0
      %v637 = vmax.f32 %v509, 0.0
      %v638 = vmax.f32 %v510, 0.0
      %v639 = vmax.f32 %v511, 0.0
      %v640 = vmax.f32 %v512, 0.0
      %v641 = vmax.f32 %v513, 0.0
      %v642 = vmax.f32 %v514, 0.0
      %v643 = vmax.f32 %v515, 0.0
      %v644 = vmax.f32 %v516, 0.0
      %v645 = vmax.f32 %v517, 0.0
      %v646 = vmax.f32 %v518, 0.0
      %v647 = vmax.f32 %v519, 0.0
      %v648 = vmax.f32 %v520, 0.0
      %v649 = vmax.f32 %v521, 0.0
      %v650 = vmax.f32 %v522, 0.0
      %v651 = vmax.f32 %v523, 0.0
      %v652 = vmax.f32 %v524, 0.0
      %v653 = vmax.f32 %v525, 0.0
      %v654 = vmax.f32 %v526, 0.0
      %v655 = vmax.f32 %v527, 0.0
      %v656 = vmax.f32 %v528, 0.0
      %v657 = vmax.f32 %v529, 0.0
      %v658 = vmax.f32 %v530, 0.0
      %v659 = vmax.f32 %v531, 0.0
      %v660 = vmax.f32 %v532, 0.0
      %v661 = vmax.f32 %v533, 0.0
      %v662 = vmax.f32 %v534, 0.0
      %v663 = vmax.f32 %v535, 0.0
      %v664 = vmax.f32 %v536, 0.0
      %v665 = vmax.f32 %v537, 0.0
      %v666 = vmax.f32 %v538, 0.0
      %v667 = vmax.f32 %v539, 0.0
      %v668 = vmax.f32 %v540, 0.0
      %v669 = vmax.f32 %v541, 0.0
      %v670 = vmax.f32 %v542, 0.0
      %v671 = vmax.f32 %v543, 0.0
      %v672 = vmax.f32 %v544, 0.0
      %v673 = vmax.f32 %v545, 0.0
      %v674 = vmax.f32 %v546, 0.0
      %v675 = vmax.f32 %v547, 0.0
      %v676 = vmax.f32 %v548, 0.0
      %v677 = vmax.f32 %v549, 0.0
      %v678 = vmax.f32 %v550, 0.0
      %v679 = vmax.f32 %v551, 0.0
      %v680 = vmax.f32 %v552, 0.0
      %v681 = vmax.f32 %v553, 0.0
      %v682 = vmax.f32 %v554, 0.0
      %v683 = vmax.f32 %v555, 0.0
      %v684 = vmax.f32 %v556, 0.0
      %v685 = vmax.f32 %v557, 0.0
      %v686 = vmax.f32 %v558, 0.0
      %v687 = vmax.f32 %v559, 0.0
      %v688 = vmax.f32 %v560, 0.0
      %v689 = vmax.f32 %v561, 0.0
      %v690 = vmax.f32 %v562, 0.0
      %v691 = vmax.f32 %v563, 0.0
      %v692 = vmax.f32 %v564, 0.0
      %v693 = vmax.f32 %v565, 0.0
      %v694 = vmax.f32 %v566, 0.0
      %v695 = vmax.f32 %v567, 0.0
      %v696 = vmax.f32 %v568, 0.0
      %v697 = vmax.f32 %v569, 0.0
      %v698 = vmax.f32 %v570, 0.0
      %v699 = vmax.f32 %v571, 0.0
      %700 = vst [vmem:[%s172] sm:$0xff] %v572
      %701 = vst [vmem:[%s172 + $0x8] sm:$0xff] %v573
      %702 = vst [vmem:[%s172 + $0x10] sm:$0xff] %v574
      %703 = vst [vmem:[%s172 + $0x18] sm:$0xff] %v575
      %704 = vst [vmem:[%s172 + $0x20] sm:$0xff] %v576
      %705 = vst [vmem:[%s172 + $0x28] sm:$0xff] %v577
      %706 = vst [vmem:[%s172 + $0x30] sm:$0xff] %v578
      %707 = vst [vmem:[%s172 + $0x38] sm:$0xff] %v579
      %708 = vst [vmem:[%s172 + $0x40] sm:$0xff] %v580
      %709 = vst [vmem:[%s172 + $0x48] sm:$0xff] %v581
      %710 = vst [vmem:[%s172 + $0x50] sm:$0xff] %v582
      %711 = vst [vmem:[%s172 + $0x58] sm:$0xff] %v583
      %712 = vst [vmem:[%s172 + $0x60] sm:$0xff] %v584
      %713 = vst [vmem:[%s172 + $0x68] sm:$0xff] %v585
      %714 = vst [vmem:[%s172 + $0x70] sm:$0xff] %v586
      %715 = vst [vmem:[%s172 + $0x78] sm:$0xff] %v587
      %716 = vst [vmem:[%s172 + $0x80] sm:$0xff] %v588
      %717 = vst [vmem:[%s172 + $0x88] sm:$0xff] %v589
      %718 = vst [vmem:[%s172 + $0x90] sm:$0xff] %v590
      %719 = vst [vmem:[%s172 + $0x98] sm:$0xff] %v591
      %720 = vst [vmem:[%s172 + $0xa0] sm:$0xff] %v592
      %721 = vst [vmem:[%s172 + $0xa8] sm:$0xff] %v593
      %722 = vst [vmem:[%s172 + $0xb0] sm:$0xff] %v594
      %723 = vst [vmem:[%s172 + $0xb8] sm:$0xff] %v595
      %724 = vst [vmem:[%s172 + $0xc0] sm:$0xff] %v596
      %725 = vst [vmem:[%s172 + $0xc8] sm:$0xff] %v597
      %726 = vst [vmem:[%s172 + $0xd0] sm:$0xff] %v598
      %727 = vst [vmem:[%s172 + $0xd8] sm:$0xff] %v599
      %728 = vst [vmem:[%s172 + $0xe0] sm:$0xff] %v600
      %729 = vst [vmem:[%s172 + $0xe8] sm:$0xff] %v601
      %730 = vst [vmem:[%s172 + $0xf0] sm:$0xff] %v602
      %731 = vst [vmem:[%s172 + $0xf8] sm:$0xff] %v603
      %732 = vst [vmem:[%s172 + $0x100] sm:$0xff] %v604
      %733 = vst [vmem:[%s172 + $0x108] sm:$0xff] %v605
      %734 = vst [vmem:[%s172 + $0x110] sm:$0xff] %v606
      %735 = vst [vmem:[%s172 + $0x118] sm:$0xff] %v607
      %736 = vst [vmem:[%s172 + $0x120] sm:$0xff] %v608
      %737 = vst [vmem:[%s172 + $0x128] sm:$0xff] %v609
      %738 = vst [vmem:[%s172 + $0x130] sm:$0xff] %v610
      %739 = vst [vmem:[%s172 + $0x138] sm:$0xff] %v611
      %740 = vst [vmem:[%s172 + $0x140] sm:$0xff] %v612
      %741 = vst [vmem:[%s172 + $0x148] sm:$0xff] %v613
      %742 = vst [vmem:[%s172 + $0x150] sm:$0xff] %v614
      %743 = vst [vmem:[%s172 + $0x158] sm:$0xff] %v615
      %744 = vst [vmem:[%s172 + $0x160] sm:$0xff] %v616
      %745 = vst [vmem:[%s172 + $0x168] sm:$0xff] %v617
      %746 = vst [vmem:[%s172 + $0x170] sm:$0xff] %v618
      %747 = vst [vmem:[%s172 + $0x178] sm:$0xff] %v619
      %748 = vst [vmem:[%s172 + $0x180] sm:$0xff] %v620
      %749 = vst [vmem:[%s172 + $0x188] sm:$0xff] %v621
      %750 = vst [vmem:[%s172 + $0x190] sm:$0xff] %v622
      %751 = vst [vmem:[%s172 + $0x198] sm:$0xff] %v623
      %752 = vst [vmem:[%s172 + $0x1a0] sm:$0xff] %v624
      %753 = vst [vmem:[%s172 + $0x1a8] sm:$0xff] %v625
      %754 = vst [vmem:[%s172 + $0x1b0] sm:$0xff] %v626
      %755 = vst [vmem:[%s172 + $0x1b8] sm:$0xff] %v627
      %756 = vst [vmem:[%s172 + $0x1c0] sm:$0xff] %v628
      %757 = vst [vmem:[%s172 + $0x1c8] sm:$0xff] %v629
      %758 = vst [vmem:[%s172 + $0x1d0] sm:$0xff] %v630
      %759 = vst [vmem:[%s172 + $0x1d8] sm:$0xff] %v631
      %760 = vst [vmem:[%s172 + $0x1e0] sm:$0xff] %v632
      %761 = vst [vmem:[%s172 + $0x1e8] sm:$0xff] %v633
      %762 = vst [vmem:[%s172 + $0x1f0] sm:$0xff] %v634
      %763 = vst [vmem:[%s172 + $0x1f8] sm:$0xff] %v635
      %764 = vst [vmem:[%s172 + $0x200] sm:$0xff] %v636
      %765 = vst [vmem:[%s172 + $0x208] sm:$0xff] %v637
      %766 = vst [vmem:[%s172 + $0x210] sm:$0xff] %v638
      %767 = vst [vmem:[%s172 + $0x218] sm:$0xff] %v639
      %768 = vst [vmem:[%s172 + $0x220] sm:$0xff] %v640
      %769 = vst [vmem:[%s172 + $0x228] sm:$0xff] %v641
      %770 = vst [vmem:[%s172 + $0x230] sm:$0xff] %v642
      %771 = vst [vmem:[%s172 + $0x238] sm:$0xff] %v643
      %772 = vst [vmem:[%s172 + $0x240] sm:$0xff] %v644
      %773 = vst [vmem:[%s172 + $0x248] sm:$0xff] %v645
      %774 = vst [vmem:[%s172 + $0x250] sm:$0xff] %v646
      %775 = vst [vmem:[%s172 + $0x258] sm:$0xff] %v647
      %776 = vst [vmem:[%s172 + $0x260] sm:$0xff] %v648
      %777 = vst [vmem:[%s172 + $0x268] sm:$0xff] %v649
      %778 = vst [vmem:[%s172 + $0x270] sm:$0xff] %v650
      %779 = vst [vmem:[%s172 + $0x278] sm:$0xff] %v651
      %780 = vst [vmem:[%s172 + $0x280] sm:$0xff] %v652
      %781 = vst [vmem:[%s172 + $0x288] sm:$0xff] %v653
      %782 = vst [vmem:[%s172 + $0x290] sm:$0xff] %v654
      %783 = vst [vmem:[%s172 + $0x298] sm:$0xff] %v655
      %784 = vst [vmem:[%s172 + $0x2a0] sm:$0xff] %v656
      %785 = vst [vmem:[%s172 + $0x2a8] sm:$0xff] %v657
      %786 = vst [vmem:[%s172 + $0x2b0] sm:$0xff] %v658
      %787 = vst [vmem:[%s172 + $0x2b8] sm:$0xff] %v659
      %788 = vst [vmem:[%s172 + $0x2c0] sm:$0xff] %v660
      %789 = vst [vmem:[%s172 + $0x2c8] sm:$0xff] %v661
      %790 = vst [vmem:[%s172 + $0x2d0] sm:$0xff] %v662
      %791 = vst [vmem:[%s172 + $0x2d8] sm:$0xff] %v663
      %792 = vst [vmem:[%s172 + $0x2e0] sm:$0xff] %v664
      %793 = vst [vmem:[%s172 + $0x2e8] sm:$0xff] %v665
      %794 = vst [vmem:[%s172 + $0x2f0] sm:$0xff] %v666
      %795 = vst [vmem:[%s172 + $0x2f8] sm:$0xff] %v667
      %796 = vst [vmem:[%s172 + $0x300] sm:$0xff] %v668
      %797 = vst [vmem:[%s172 + $0x308] sm:$0xff] %v669
      %798 = vst [vmem:[%s172 + $0x310] sm:$0xff] %v670
      %799 = vst [vmem:[%s172 + $0x318] sm:$0xff] %v671
      %800 = vst [vmem:[%s172 + $0x320] sm:$0xff] %v672
      %801 = vst [vmem:[%s172 + $0x328] sm:$0xff] %v673
      %802 = vst [vmem:[%s172 + $0x330] sm:$0xff] %v674
      %803 = vst [vmem:[%s172 + $0x338] sm:$0xff] %v675
      %804 = vst [vmem:[%s172 + $0x340] sm:$0xff] %v676
      %805 = vst [vmem:[%s172 + $0x348] sm:$0xff] %v677
      %806 = vst [vmem:[%s172 + $0x350] sm:$0xff] %v678
      %807 = vst [vmem:[%s172 + $0x358] sm:$0xff] %v679
      %808 = vst [vmem:[%s172 + $0x360] sm:$0xff] %v680
      %809 = vst [vmem:[%s172 + $0x368] sm:$0xff] %v681
      %810 = vst [vmem:[%s172 + $0x370] sm:$0xff] %v682
      %811 = vst [vmem:[%s172 + $0x378] sm:$0xff] %v683
      %812 = vst [vmem:[%s172 + $0x380] sm:$0xff] %v684
      %813 = vst [vmem:[%s172 + $0x388] sm:$0xff] %v685
      %814 = vst [vmem:[%s172 + $0x390] sm:$0xff] %v686
      %815 = vst [vmem:[%s172 + $0x398] sm:$0xff] %v687
      %816 = vst [vmem:[%s172 + $0x3a0] sm:$0xff] %v688
      %817 = vst [vmem:[%s172 + $0x3a8] sm:$0xff] %v689
      %818 = vst [vmem:[%s172 + $0x3b0] sm:$0xff] %v690
      %819 = vst [vmem:[%s172 + $0x3b8] sm:$0xff] %v691
      %820 = vst [vmem:[%s172 + $0x3c0] sm:$0xff] %v692
      %821 = vst [vmem:[%s172 + $0x3c8] sm:$0xff] %v693
      %822 = vst [vmem:[%s172 + $0x3d0] sm:$0xff] %v694
      %823 = vst [vmem:[%s172 + $0x3d8] sm:$0xff] %v695
      %824 = vst [vmem:[%s172 + $0x3e0] sm:$0xff] %v696
      %825 = vst [vmem:[%s172 + $0x3e8] sm:$0xff] %v697
      %826 = vst [vmem:[%s172 + $0x3f0] sm:$0xff] %v698
      %827 = vst [vmem:[%s172 + $0x3f8] sm:$0xff] %v699
      %s828 = smul.u32 128, %s14
      %p829 = scmp.lt.s32.totalorder %s828, 255
      %s830 = scalar_select %p829, %s828, 255
      %s831 = smul.addr %s830, 8
      %s832 = scalar_lea.vmem %s3, %s831
      // Predicated region
      $region33: #{up_block_forward.3} parent=31 // pred_check
        %p833 = pneg %p100
      $region34: #{up_block_forward.3} parent=31 // pred_check_branch
        %835 = sbr.rel (%p833) target = $region36
      $region35: #{up_block_forward.3} parent=31 // pred_region
        %s836 = smul.u32 128, %s14
      $region36: #{up_block_forward.3} parent=31 // pred_fallthru
        _
    $region32: #{up_block_forward.3} parent=5 // pred_fallthru
      _
    %p837 = scmp.le.s32.totalorder 2, %s9
    // Predicated region
    $region37: #{up_block_forward.3} parent=5 // pred_check
      %p838 = pneg %p837
    $region38: #{up_block_forward.3} parent=5 // pred_check_branch
      %840 = sbr.rel (%p838) target = $region40
    $region39: #{up_block_forward.3} parent=5 // pred_region
      %s841 = ssub.s32 %s9, 2
      // Predicated region
      $region41: #{up_block_forward.3} parent=39 // pred_check
        %p842 = pneg %p106
      $region42: #{up_block_forward.3} parent=39 // pred_check_branch
        %844 = sbr.rel (%p842) target = $region44
      $region43: #{up_block_forward.3} parent=39 // pred_region
        %s845 = smul.u32 128, %s15
        %p846 = scmp.lt.s32.totalorder %s845, 255
        %s847 = scalar_select %p846, %s845, 255
        %s848 = smul.addr %s847, 8
        %s849 = scalar_lea.vmem %s3, %s848
      $region44: #{up_block_forward.3} parent=39 // pred_fallthru
        _
    $region40: #{up_block_forward.3} parent=5 // pred_fallthru
      _
  $region6: #{up_block_forward.3} parent=0 // loop_footer
    %s13 = sadd.s32 1, %s9
  $region7: #{up_block_forward.3} parent=0 // loop_footer_branch
    %8 = sbr.rel target = $region3
  $region8: #{up_block_forward.3} parent=0 // loop_exit
    _

// kernel: up_block_forward.2
$region0: #{up_block_forward.2}
  #allocation0 [shape = 'u32[]', space=smem, size = 0x4, offset = 0x4, fixed_abs, tag = 'smem constant byte address 0x4 - core index']
  #allocation1 [shape = 'u32[144,128]{1,0:T(1,128)}', space=vmem, size = 0x12000, scoped, tag = 'internal scratch']
  %s0 = inlined_call_operand.vmem [shape: bf16[8,10,34,16], index: 0, kind: input, shape index: {}]
  %s1 = inlined_call_operand.vmem [shape: bf16[3,3,16,128], index: 1, kind: input, shape index: {}]
  %s2 = inlined_call_operand.vmem [shape: f32[8,256,128], index: 2, kind: output, shape index: {0}]
  %s3 = inlined_call_operand.vmem [shape: f32[8,1,128], index: 3, kind: output, shape index: {1}]
  %s4 = inlined_call_operand.vmem [shape: f32[8,1,128], index: 4, kind: output, shape index: {2}]
  %5 = xla_tuple %s2, %s3, %s4
  %s6 = sld [smem:[#allocation0]]
  $region57: #{up_block_forward.2} parent=0
    _
  %s8 = ssub.s32 1, %s6
  %s9 = scalar_select 0, %s8, %s6
  loop: start=0, step=1, limit=10
  $region2: #{up_block_forward.2} parent=0 // loop_pre_header
    _
  $region3: #{up_block_forward.2} parent=0 // loop_header
    %s11 = sphi 0, %s15
    %p12 = scmp.ge.s32.totalorder %s11, 10
    %s21 = sphi 0, %s23
    %s24 = sphi 0, %s21
    %s25 = sphi 0, %s24
    %s41 = sphi 0, %s25
    %s45 = sphi 0, %s45
    %s47 = sphi 0, %s45
    %s48 = sphi 0, %s47
    %s62 = sphi 0, %s48
    %s68 = sphi 0, %s70
    %s71 = sphi 0, %s68
    %s72 = sphi 0, %s71
    %s88 = sphi 0, %s72
    %s94 = sphi 0, %s96
    %s97 = sphi 0, %s94
    %s98 = sphi 0, %s97
    %s114 = sphi 0, %s98
    %s120 = sphi 0, %s122
    %s123 = sphi 0, %s120
    %s124 = sphi 0, %s123
    %s140 = sphi 0, %s124
  $region4: #{up_block_forward.2} parent=0 // loop_header_branch
    %14 = sbr.rel (%p12) target = $region8
  $region5: #{up_block_forward.2} parent=0 // loop_body
    %s16 = ssub.s32 %s11, 1
    %s17 = ssub.s32 %s11, 2
    %s18 = sadd.s32 %s11, 1
    %s19 = ssub.s32 %s11, %s18
    %p20 = scmp.eq.s32.totalorder %s19, 0
    %s22 = sadd.s32 %s21, 1
    %s23 = scalar_select %p20, %s21, %s22
    %p26 = pneg %p20
    %p27 = scmp.eq.s32.totalorder %s11, 7
    %p28 = por %p26, %p27
    %p29 = scmp.ne.s32.totalorder %s21, %s24
    %p30 = scmp.eq.s32.totalorder %s11, 0
    %p31 = por %p29, %p30
    %p32 = scmp.ne.s32.totalorder %s21, %s24
    %p33 = scmp.eq.s32.totalorder %s16, 7
    %p34 = por %p32, %p33
    %p35 = scmp.ne.s32.totalorder %s24, %s25
    %p36 = scmp.eq.s32.totalorder %s16, 0
    %p37 = por %p35, %p36
    %p38 = scmp.ne.s32.totalorder %s24, %s25
    %p39 = scmp.eq.s32.totalorder %s17, 7
    %p40 = por %p38, %p39
    %p42 = scmp.ne.s32.totalorder %s25, %s41
    %p43 = scmp.eq.s32.totalorder %s17, 0
    %p44 = por %p42, %p43
    %s46 = sadd.s32 %s45, 1
    %p49 = scmp.eq.s32.totalorder %s11, 7
    %p50 = scmp.ne.s32.totalorder %s45, %s47
    %p51 = scmp.eq.s32.totalorder %s11, 0
    %p52 = por %p50, %p51
    %p53 = scmp.ne.s32.totalorder %s45, %s47
    %p54 = scmp.eq.s32.totalorder %s16, 7
    %p55 = por %p53, %p54
    %p56 = scmp.ne.s32.totalorder %s47, %s48
    %p57 = scmp.eq.s32.totalorder %s16, 0
    %p58 = por %p56, %p57
    %p59 = scmp.ne.s32.totalorder %s47, %s48
    %p60 = scmp.eq.s32.totalorder %s17, 7
    %p61 = por %p59, %p60
    %p63 = scmp.ne.s32.totalorder %s48, %s62
    %p64 = scmp.eq.s32.totalorder %s17, 0
    %p65 = por %p63, %p64
    %s66 = ssub.s32 %s11, %s18
    %p67 = scmp.eq.s32.totalorder %s66, 0
    %s69 = sadd.s32 %s68, 1
    %s70 = scalar_select %p67, %s68, %s69
    %p73 = pneg %p67
    %p74 = scmp.eq.s32.totalorder %s11, 7
    %p75 = por %p73, %p74
    %p76 = scmp.ne.s32.totalorder %s68, %s71
    %p77 = scmp.eq.s32.totalorder %s11, 0
    %p78 = por %p76, %p77
    %p79 = scmp.ne.s32.totalorder %s68, %s71
    %p80 = scmp.eq.s32.totalorder %s16, 7
    %p81 = por %p79, %p80
    %p82 = scmp.ne.s32.totalorder %s71, %s72
    %p83 = scmp.eq.s32.totalorder %s16, 0
    %p84 = por %p82, %p83
    %p85 = scmp.ne.s32.totalorder %s71, %s72
    %p86 = scmp.eq.s32.totalorder %s17, 7
    %p87 = por %p85, %p86
    %p89 = scmp.ne.s32.totalorder %s72, %s88
    %p90 = scmp.eq.s32.totalorder %s17, 0
    %p91 = por %p89, %p90
    %s92 = ssub.s32 %s11, %s18
    %p93 = scmp.eq.s32.totalorder %s92, 0
    %s95 = sadd.s32 %s94, 1
    %s96 = scalar_select %p93, %s94, %s95
    %p99 = pneg %p93
    %p100 = scmp.eq.s32.totalorder %s11, 7
    %p101 = por %p99, %p100
    %p102 = scmp.ne.s32.totalorder %s94, %s97
    %p103 = scmp.eq.s32.totalorder %s11, 0
    %p104 = por %p102, %p103
    %p105 = scmp.ne.s32.totalorder %s94, %s97
    %p106 = scmp.eq.s32.totalorder %s16, 7
    %p107 = por %p105, %p106
    %p108 = scmp.ne.s32.totalorder %s97, %s98
    %p109 = scmp.eq.s32.totalorder %s16, 0
    %p110 = por %p108, %p109
    %p111 = scmp.ne.s32.totalorder %s97, %s98
    %p112 = scmp.eq.s32.totalorder %s17, 7
    %p113 = por %p111, %p112
    %p115 = scmp.ne.s32.totalorder %s98, %s114
    %p116 = scmp.eq.s32.totalorder %s17, 0
    %p117 = por %p115, %p116
    %s118 = ssub.s32 %s11, %s18
    %p119 = scmp.eq.s32.totalorder %s118, 0
    %s121 = sadd.s32 %s120, 1
    %s122 = scalar_select %p119, %s120, %s121
    %p125 = pneg %p119
    %p126 = scmp.eq.s32.totalorder %s11, 7
    %p127 = por %p125, %p126
    %p128 = scmp.ne.s32.totalorder %s120, %s123
    %p129 = scmp.eq.s32.totalorder %s11, 0
    %p130 = por %p128, %p129
    %p131 = scmp.ne.s32.totalorder %s120, %s123
    %p132 = scmp.eq.s32.totalorder %s16, 7
    %p133 = por %p131, %p132
    %p134 = scmp.ne.s32.totalorder %s123, %s124
    %p135 = scmp.eq.s32.totalorder %s16, 0
    %p136 = por %p134, %p135
    %p137 = scmp.ne.s32.totalorder %s123, %s124
    %p138 = scmp.eq.s32.totalorder %s17, 7
    %p139 = por %p137, %p138
    %p141 = scmp.ne.s32.totalorder %s124, %s140
    %p142 = scmp.eq.s32.totalorder %s17, 0
    %p143 = por %p141, %p142
    %p144 = scmp.le.s32.totalorder 1, %s11
    %p145 = scmp.lt.s32.totalorder %s11, 9
    %p146 = pnand %p144, %p145
    %p147 = pneg %p146
    // Predicated region
    $region9: #{up_block_forward.2} parent=5 // pred_check
      _
    $region10: #{up_block_forward.2} parent=5 // pred_check_branch
      %149 = sbr.rel (%p146) target = $region12
    $region11: #{up_block_forward.2} parent=5 // pred_region
      %s150 = ssub.s32 %s11, 1
      // Predicated region
      $region13: #{up_block_forward.2} parent=11 // pred_check
        %p151 = pneg %p58
      $region14: #{up_block_forward.2} parent=11 // pred_check_branch
        %153 = sbr.rel (%p151) target = $region16
      $region15: #{up_block_forward.2} parent=11 // pred_region
        _
      $region16: #{up_block_forward.2} parent=11 // pred_fallthru
        _
    $region12: #{up_block_forward.2} parent=5 // pred_fallthru
      _
    %p154 = scmp.lt.s32.totalorder %s11, 8
    // Predicated region
    $region17: #{up_block_forward.2} parent=5 // pred_check
      %p155 = pneg %p154
    $region18: #{up_block_forward.2} parent=5 // pred_check_branch
      %157 = sbr.rel (%p155) target = $region20
    $region19: #{up_block_forward.2} parent=5 // pred_region
      // Predicated region
      $region21: #{up_block_forward.2} parent=19 // pred_check
        %p158 = pneg %p31
      $region22: #{up_block_forward.2} parent=19 // pred_check_branch
        %160 = sbr.rel (%p158) target = $region24
      $region23: #{up_block_forward.2} parent=19 // pred_region
        %p161 = scmp.lt.s32.totalorder %s11, 7
        %s162 = scalar_select %p161, %s11, 7
        %s163 = smul.addr %s162, 50
        %s164 = smul.addr %s163, 4
        %s165 = scalar_lea.vmem %s0, %s164
      $region24: #{up_block_forward.2} parent=19 // pred_fallthru
        _
    $region20: #{up_block_forward.2} parent=5 // pred_fallthru
      _
    %p166 = scmp.le.s32.totalorder 1, %s11
    %p167 = scmp.lt.s32.totalorder %s11, 9
    %p168 = pnand %p166, %p167
    %p169 = pneg %p168
    // Predicated region
    $region25: #{up_block_forward.2} parent=5 // pred_check
      _
    $region26: #{up_block_forward.2} parent=5 // pred_check_branch
      %171 = sbr.rel (%p168) target = $region28
    $region27: #{up_block_forward.2} parent=5 // pred_region
      %s172 = ssub.s32 %s11, 1
      %p173 = scmp.lt.s32.totalorder %s16, 7
      %s174 = scalar_select %p173, %s16, 7
      %s175 = smul.addr %s174, 50
      %s176 = smul.addr %s175, 4
      %s177 = scalar_lea.vmem %s0, %s176
      %p178 = pneg %p37
      %p179 = pneg %p34
      %p180 = pneg %p58
      %p181 = pneg %p55
      %p182 = pneg %p84
      %p183 = pneg %p81
      %p184 = scmp.lt.s32.totalorder %s16, 7
      %s185 = scalar_select %p184, %s16, 7
      %s186 = smul.addr %s185, 32
      %s187 = smul.addr %s186, 8
      %s188 = scalar_lea.vmem %s2, %s187
      %p189 = pneg %p110
      %p190 = pneg %p107
      %p191 = scmp.lt.s32.totalorder %s16, 7
      %s192 = scalar_select %p191, %s16, 7
      %s193 = scalar_lea.vmem %s3, %s192
      %p194 = pneg %p136
      %p195 = pneg %p133
      %p196 = scmp.lt.s32.totalorder %s16, 7
      %s197 = scalar_select %p196, %s16, 7
      %s198 = scalar_lea.vmem %s4, %s197
      %p199 = scmp.lt.s32.totalorder %s16, 7
      %s200 = scalar_select %p199, %s16, 7
      %s201 = smul.addr %s200, 50
      %s202 = smul.addr %s201, 4
      %s203 = scalar_lea.vmem %s0, %s202
      %p204 = scmp.lt.s32.totalorder %s16, 7
      %s205 = scalar_select %p204, %s16, 7
      %s206 = smul.addr %s205, 32
      %s207 = smul.addr %s206, 8
      %s208 = scalar_lea.vmem %s2, %s207
      %p209 = scmp.lt.s32.totalorder %s16, 7
      %s210 = scalar_select %p209, %s16, 7
      %s211 = scalar_lea.vmem %s3, %s210
      %p212 = scmp.lt.s32.totalorder %s16, 7
      %s213 = scalar_select %p212, %s16, 7
      %s214 = scalar_lea.vmem %s4, %s213
      %v216 = vld [vmem:[%s203] sm:$0xf]
      %v217 = vld [vmem:[%s203 + $0x4] sm:$0xf]
      %v218 = vld [vmem:[%s203 + $0x8] sm:$0xf]
      %v219 = vld [vmem:[%s203 + $0xc] sm:$0xf]
      %v220 = vld [vmem:[%s203 + $0x14] sm:$0xf]
      %v221 = vld [vmem:[%s203 + $0x18] sm:$0xf]
      %v222 = vld [vmem:[%s203 + $0x1c] sm:$0xf]
      %v223 = vld [vmem:[%s203 + $0x20] sm:$0xf]
      %v224 = vld [vmem:[%s203 + $0x28] sm:$0xf]
      %v225 = vld [vmem:[%s203 + $0x2c] sm:$0xf]
      %v226 = vld [vmem:[%s203 + $0x30] sm:$0xf]
      %v227 = vld [vmem:[%s203 + $0x34] sm:$0xf]
      %v228 = vld [vmem:[%s203 + $0x3c] sm:$0xf]
      %v229 = vld [vmem:[%s203 + $0x40] sm:$0xf]
      %v230 = vld [vmem:[%s203 + $0x44] sm:$0xf]
      %v231 = vld [vmem:[%s203 + $0x48] sm:$0xf]
      %v232 = vld [vmem:[%s203 + $0x50] sm:$0xf]
      %v233 = vld [vmem:[%s203 + $0x54] sm:$0xf]
      %v234 = vld [vmem:[%s203 + $0x58] sm:$0xf]
      %v235 = vld [vmem:[%s203 + $0x5c] sm:$0xf]
      %v236 = vld [vmem:[%s203 + $0x64] sm:$0xf]
      %v237 = vld [vmem:[%s203 + $0x68] sm:$0xf]
      %v238 = vld [vmem:[%s203 + $0x6c] sm:$0xf]
      %v239 = vld [vmem:[%s203 + $0x70] sm:$0xf]
      %v240 = vld [vmem:[%s203 + $0x78] sm:$0xf]
      %v241 = vld [vmem:[%s203 + $0x7c] sm:$0xf]
      %v242 = vld [vmem:[%s203 + $0x80] sm:$0xf]
      %v243 = vld [vmem:[%s203 + $0x84] sm:$0xf]
      %v244 = vld [vmem:[%s203 + $0x8c] sm:$0xf]
      %v245 = vld [vmem:[%s203 + $0x90] sm:$0xf]
      %v246 = vld [vmem:[%s203 + $0x94] sm:$0xf]
      %v247 = vld [vmem:[%s203 + $0x98] sm:$0xf]
      %v248 = vld [vmem:[%s1] sm:$0xf]
      %v249 = vld [vmem:[%s1 + $0x4] sm:$0xf]
      %v250 = vld [vmem:[%s203 + $0x10] sm:$0x1]
      %v251 = vld [vmem:[%s203 + $0x24] sm:$0x1]
      %v252 = vld [vmem:[%s203 + $0x38] sm:$0x1]
      %v253 = vld [vmem:[%s203 + $0x4c] sm:$0x1]
      %v254 = vld [vmem:[%s203 + $0x60] sm:$0x1]
      %v255 = vld [vmem:[%s203 + $0x74] sm:$0x1]
      %v256 = vld [vmem:[%s203 + $0x88] sm:$0x1]
      %v257 = vld [vmem:[%s203 + $0x9c] sm:$0x1]
      %vm258 = vsmask.f32 3328
      %vm259 = vsmask.f32 7440
      %vm260 = vmor %vm258, %vm259
      %v262 = vshrl.u32 %v216, 16
      %v264 = vrot.slane %v262, 4
      %v265 = vshll.u32 %v216, 16
      %v267 = vrot.slane %v265, 5
      %v268 = vor.u32 %v264, %v267
      %v269 = vrot.slane %v268, 4
      %v271 = vshll.u32 %v217, 16
      %v273 = vrot.slane %v271, 5
      %v274 = vsel %vm260, %v269, %v273
      %v275 = vshrl.u32 %v217, 16
      %v277 = vrot.slane %v275, 4
      %v278 = vor.u32 %v277, %v273
      %v279 = vrot.slane %v278, 4
      %v281 = vshll.u32 %v218, 16
      %v283 = vrot.slane %v281, 5
      %v284 = vsel %vm260, %v279, %v283
      %v285 = vshrl.u32 %v218, 16
      %v287 = vrot.slane %v285, 4
      %v288 = vor.u32 %v287, %v283
      %v289 = vrot.slane %v288, 4
      %v291 = vshll.u32 %v219, 16
      %v293 = vrot.slane %v291, 5
      %v294 = vsel %vm260, %v289, %v293
      %v295 = vshrl.u32 %v219, 16
      %v297 = vrot.slane %v295, 4
      %v298 = vor.u32 %v297, %v293
      %v299 = vrot.slane %v298, 4
      %v301 = vshll.u32 %v250, 16
      %v303 = vrot.slane %v301, 5
      %v304 = vsel %vm260, %v299, %v303
      %v306 = vshrl.u32 %v220, 16
      %v308 = vrot.slane %v306, 4
      %v309 = vshll.u32 %v220, 16
      %v311 = vrot.slane %v309, 5
      %v312 = vor.u32 %v308, %v311
      %v313 = vrot.slane %v312, 4
      %v315 = vshll.u32 %v221, 16
      %v317 = vrot.slane %v315, 5
      %v318 = vsel %vm260, %v313, %v317
      %v319 = vshrl.u32 %v221, 16
      %v321 = vrot.slane %v319, 4
      %v322 = vor.u32 %v321, %v317
      %v323 = vrot.slane %v322, 4
      %v325 = vshll.u32 %v222, 16
      %v327 = vrot.slane %v325, 5
      %v328 = vsel %vm260, %v323, %v327
      %v329 = vshrl.u32 %v222, 16
      %v331 = vrot.slane %v329, 4
      %v332 = vor.u32 %v331, %v327
      %v333 = vrot.slane %v332, 4
      %v335 = vshll.u32 %v223, 16
      %v337 = vrot.slane %v335, 5
      %v338 = vsel %vm260, %v333, %v337
      %v339 = vshrl.u32 %v223, 16
      %v341 = vrot.slane %v339, 4
      %v342 = vor.u32 %v341, %v337
      %v343 = vrot.slane %v342, 4
      %v345 = vshll.u32 %v251, 16
      %v347 = vrot.slane %v345, 5
      %v348 = vsel %vm260, %v343, %v347
      %v350 = vshrl.u32 %v224, 16
      %v352 = vrot.slane %v350, 4
      %v353 = vshll.u32 %v224, 16
      %v355 = vrot.slane %v353, 5
      %v356 = vor.u32 %v352, %v355
      %v357 = vrot.slane %v356, 4
      %v359 = vshll.u32 %v225, 16
      %v361 = vrot.slane %v359, 5
      %v362 = vsel %vm260, %v357, %v361
      %v363 = vshrl.u32 %v225, 16
      %v365 = vrot.slane %v363, 4
      %v366 = vor.u32 %v365, %v361
      %v367 = vrot.slane %v366, 4
      %v369 = vshll.u32 %v226, 16
      %v371 = vrot.slane %v369, 5
      %v372 = vsel %vm260, %v367, %v371
      %v373 = vshrl.u32 %v226, 16
      %v375 = vrot.slane %v373, 4
      %v376 = vor.u32 %v375, %v371
      %v377 = vrot.slane %v376, 4
      %v379 = vshll.u32 %v227, 16
      %v381 = vrot.slane %v379, 5
      %v382 = vsel %vm260, %v377, %v381
      %v383 = vshrl.u32 %v227, 16
      %v385 = vrot.slane %v383, 4
      %v386 = vor.u32 %v385, %v381
      %v387 = vrot.slane %v386, 4
      %v389 = vshll.u32 %v252, 16
      %v391 = vrot.slane %v389, 5
      %v392 = vsel %vm260, %v387, %v391
      %v394 = vshrl.u32 %v228, 16
      %v396 = vrot.slane %v394, 4
      %v397 = vshll.u32 %v228, 16
      %v399 = vrot.slane %v397, 5
      %v400 = vor.u32 %v396, %v399
      %v401 = vrot.slane %v400, 4
      %v403 = vshll.u32 %v229, 16
      %v405 = vrot.slane %v403, 5
      %v406 = vsel %vm260, %v401, %v405
      %v407 = vshrl.u32 %v229, 16
      %v409 = vrot.slane %v407, 4
      %v410 = vor.u32 %v409, %v405
      %v411 = vrot.slane %v410, 4
      %v413 = vshll.u32 %v230, 16
      %v415 = vrot.slane %v413, 5
      %v416 = vsel %vm260, %v411, %v415
      %v417 = vshrl.u32 %v230, 16
      %v419 = vrot.slane %v417, 4
      %v420 = vor.u32 %v419, %v415
      %v421 = vrot.slane %v420, 4
      %v423 = vshll.u32 %v231, 16
      %v425 = vrot.slane %v423, 5
      %v426 = vsel %vm260, %v421, %v425
      %v427 = vshrl.u32 %v231, 16
      %v429 = vrot.slane %v427, 4
      %v430 = vor.u32 %v429, %v425
      %v431 = vrot.slane %v430, 4
      %v433 = vshll.u32 %v253, 16
      %v435 = vrot.slane %v433, 5
      %v436 = vsel %vm260, %v431, %v435
      %v438 = vshrl.u32 %v232, 16
      %v440 = vrot.slane %v438, 4
      %v441 = vshll.u32 %v232, 16
      %v443 = vrot.slane %v441, 5
      %v444 = vor.u32 %v440, %v443
      %v445 = vrot.slane %v444, 4
      %v447 = vshll.u32 %v233, 16
      %v449 = vrot.slane %v447, 5
      %v450 = vsel %vm260, %v445, %v449
      %v451 = vshrl.u32 %v233, 16
      %v453 = vrot.slane %v451, 4
      %v454 = vor.u32 %v453, %v449
      %v455 = vrot.slane %v454, 4
      %v457 = vshll.u32 %v234, 16
      %v459 = vrot.slane %v457, 5
      %v460 = vsel %vm260, %v455, %v459
      %v461 = vshrl.u32 %v234, 16
      %v463 = vrot.slane %v461, 4
      %v464 = vor.u32 %v463, %v459
      %v465 = vrot.slane %v464, 4
      %v467 = vshll.u32 %v235, 16
      %v469 = vrot.slane %v467, 5
      %v470 = vsel %vm260, %v465, %v469
      %v471 = vshrl.u32 %v235, 16
      %v473 = vrot.slane %v471, 4
      %v474 = vor.u32 %v473, %v469
      %v475 = vrot.slane %v474, 4
      %v477 = vshll.u32 %v254, 16
      %v479 = vrot.slane %v477, 5
      %v480 = vsel %vm260, %v475, %v479
      %v482 = vshrl.u32 %v236, 16
      %v484 = vrot.slane %v482, 4
      %v485 = vshll.u32 %v236, 16
      %v487 = vrot.slane %v485, 5
      %v488 = vor.u32 %v484, %v487
      %v489 = vrot.slane %v488, 4
      %v491 = vshll.u32 %v237, 16
      %v493 = vrot.slane %v491, 5
      %v494 = vsel %vm260, %v489, %v493
      %v495 = vshrl.u32 %v237, 16
      %v497 = vrot.slane %v495, 4
      %v498 = vor.u32 %v497, %v493
      %v499 = vrot.slane %v498, 4
      %v501 = vshll.u32 %v238, 16
      %v503 = vrot.slane %v501, 5
      %v504 = vsel %vm260, %v499, %v503
      %v505 = vshrl.u32 %v238, 16
      %v507 = vrot.slane %v505, 4
      %v508 = vor.u32 %v507, %v503
      %v509 = vrot.slane %v508, 4
      %v511 = vshll.u32 %v239, 16
      %v513 = vrot.slane %v511, 5
      %v514 = vsel %vm260, %v509, %v513
      %v515 = vshrl.u32 %v239, 16
      %v517 = vrot.slane %v515, 4
      %v518 = vor.u32 %v517, %v513
      %v519 = vrot.slane %v518, 4
      %v521 = vshll.u32 %v255, 16
      %v523 = vrot.slane %v521, 5
      %v524 = vsel %vm260, %v519, %v523
      %v526 = vshrl.u32 %v240, 16
      %v528 = vrot.slane %v526, 4
      %v529 = vshll.u32 %v240, 16
      %v531 = vrot.slane %v529, 5
      %v532 = vor.u32 %v528, %v531
      %v533 = vrot.slane %v532, 4
      %v535 = vshll.u32 %v241, 16
      %v537 = vrot.slane %v535, 5
      %v538 = vsel %vm260, %v533, %v537
      %v539 = vshrl.u32 %v241, 16
      %v541 = vrot.slane %v539, 4
      %v542 = vor.u32 %v541, %v537
      %v543 = vrot.slane %v542, 4
      %v545 = vshll.u32 %v242, 16
      %v547 = vrot.slane %v545, 5
      %v548 = vsel %vm260, %v543, %v547
      %v549 = vshrl.u32 %v242, 16
      %v551 = vrot.slane %v549, 4
      %v552 = vor.u32 %v551, %v547
      %v553 = vrot.slane %v552, 4
      %v555 = vshll.u32 %v243, 16
      %v557 = vrot.slane %v555, 5
      %v558 = vsel %vm260, %v553, %v557
      %v559 = vshrl.u32 %v243, 16
      %v561 = vrot.slane %v559, 4
      %v562 = vor.u32 %v561, %v557
      %v563 = vrot.slane %v562, 4
      %v565 = vshll.u32 %v256, 16
      %v567 = vrot.slane %v565, 5
      %v568 = vsel %vm260, %v563, %v567
      %v570 = vshrl.u32 %v244, 16
      %v572 = vrot.slane %v570, 4
      %v573 = vshll.u32 %v244, 16
      %v575 = vrot.slane %v573, 5
      %v576 = vor.u32 %v572, %v575
      %v577 = vrot.slane %v576, 4
      %v579 = vshll.u32 %v245, 16
      %v581 = vrot.slane %v579, 5
      %v582 = vsel %vm260, %v577, %v581
      %v583 = vshrl.u32 %v245, 16
      %v585 = vrot.slane %v583, 4
      %v586 = vor.u32 %v585, %v581
      %v587 = vrot.slane %v586, 4
      %v589 = vshll.u32 %v246, 16
      %v591 = vrot.slane %v589, 5
      %v592 = vsel %vm260, %v587, %v591
      %v593 = vshrl.u32 %v246, 16
      %v595 = vrot.slane %v593, 4
      %v596 = vor.u32 %v595, %v591
      %v597 = vrot.slane %v596, 4
      %v599 = vshll.u32 %v247, 16
      %v601 = vrot.slane %v599, 5
      %v602 = vsel %vm260, %v597, %v601
      %v603 = vshrl.u32 %v247, 16
      %v605 = vrot.slane %v603, 4
      %v606 = vor.u32 %v605, %v601
      %v607 = vrot.slane %v606, 4
      %v609 = vshll.u32 %v257, 16
      %v611 = vrot.slane %v609, 5
      %v612 = vsel %vm260, %v607, %v611
      %s613 = scalar_lea.vmem %s1, 8
      %v614 = vld [vmem:[%s613] sm:$0xf]
      %v615 = vld [vmem:[%s613 + $0x4] sm:$0xf]
      %v616 = vunpack.c.l.b16 %v274
      %v617 = vunpack.c.l.b16 %v284
      %v618 = vunpack.c.l.b16 %v294
      %v619 = vunpack.c.l.b16 %v304
      %v620 = vunpack.c.l.b16 %v318
      %v621 = vunpack.c.l.b16 %v328
      %v622 = vunpack.c.l.b16 %v338
      %v623 = vunpack.c.l.b16 %v348
      %v624 = vunpack.c.l.b16 %v362
      %v625 = vunpack.c.l.b16 %v372
      %v626 = vunpack.c.l.b16 %v382
      %v627 = vunpack.c.l.b16 %v392
      %v628 = vunpack.c.l.b16 %v406
      %v629 = vunpack.c.l.b16 %v416
      %v630 = vunpack.c.l.b16 %v426
      %v631 = vunpack.c.l.b16 %v436
      %v632 = vunpack.c.l.b16 %v450
      %v633 = vunpack.c.l.b16 %v460
      %v634 = vunpack.c.l.b16 %v470
      %v635 = vunpack.c.l.b16 %v480
      %v636 = vunpack.c.l.b16 %v494
      %v637 = vunpack.c.l.b16 %v504
      %v638 = vunpack.c.l.b16 %v514
      %v639 = vunpack.c.l.b16 %v524
      %v640 = vunpack.c.l.b16 %v538
      %v641 = vunpack.c.l.b16 %v548
      %v642 = vunpack.c.l.b16 %v558
      %v643 = vunpack.c.l.b16 %v568
      %v644 = vunpack.c.l.b16 %v582
      %v645 = vunpack.c.l.b16 %v592
      %v646 = vunpack.c.l.b16 %v602
      %v647 = vunpack.c.l.b16 %v612
      %v648 = vpack.c.b16 %v617, %v616
      %v649 = vpack.c.b16 %v619, %v618
      %v650 = vpack.c.b16 %v621, %v620
      %v651 = vpack.c.b16 %v623, %v622
      %v652 = vpack.c.b16 %v625, %v624
      %v653 = vpack.c.b16 %v627, %v626
      %v654 = vpack.c.b16 %v629, %v628
      %v655 = vpack.c.b16 %v631, %v630
      %v656 = vpack.c.b16 %v633, %v632
      %v657 = vpack.c.b16 %v635, %v634
      %v658 = vpack.c.b16 %v637, %v636
      %v659 = vpack.c.b16 %v639, %v638
      %v660 = vpack.c.b16 %v641, %v640
      %v661 = vpack.c.b16 %v643, %v642
      %v662 = vpack.c.b16 %v645, %v644
      %v663 = vpack.c.b16 %v647, %v646
      %v666 = vunpack.c.l.b16 %v614
      %v667 = vunpack.c.l.b16 %v615
      %v668 = vpack.c.b16 %v667, %v666
      %vm670 = vcmask 130048
      %v672 = vsel %vm670, %v648, 0
      %v675 = vsel %vm670, %v649, 0
      %v678 = vsel %vm670, %v650, 0
      %v681 = vsel %vm670, %v651, 0
      %v684 = vsel %vm670, %v652, 0
      %v687 = vsel %vm670, %v653, 0
      %v690 = vsel %vm670, %v654, 0
      %v693 = vsel %vm670, %v655, 0
      %v696 = vsel %vm670, %v656, 0
      %v699 = vsel %vm670, %v657, 0
      %v702 = vsel %vm670, %v658, 0
      %v705 = vsel %vm670, %v659, 0
      %v708 = vsel %vm670, %v660, 0
      %v711 = vsel %vm670, %v661, 0
      %v714 = vsel %vm670, %v662, 0
      %v717 = vsel %vm670, %v663, 0
      %719 = vmatprep.subr.bf16.mxu0 0
      %720 = vmatpush1.bf16.msra.mxu0 %v668
      %721 = vmatprep.subr.bf16.mxu0 0
      %722 = vmatpush1.bf16.msra.mxu0 0
      %723 = vmatprep.subr.bf16.mxu0 0
      %724 = vmatpush1.bf16.msra.mxu0 0
      %725 = vmatprep.subr.bf16.mxu0 0
      %726 = vmatpush1.bf16.msra.mxu0 0
      %727 = vmatprep.subr.bf16.mxu0 0
      %728 = vmatpush1.bf16.msra.mxu0 0
      %729 = vmatprep.subr.bf16.mxu0 0
      %730 = vmatpush1.bf16.msra.mxu0 0
      %731 = vmatprep.subr.bf16.mxu0 0
      %732 = vmatpush1.bf16.msra.mxu0 0
      %733 = vmatprep.subr.bf16.mxu0 0
      %734 = vmatpush1.bf16.msra.mxu0 0
      %735 = vmatprep.subr.bf16.mxu0 0
      %736 = vmatpush1.bf16.msra.mxu0 0
      %737 = vmatprep.subr.bf16.mxu0 0
      %738 = vmatpush1.bf16.msra.mxu0 0
      %739 = vmatprep.subr.bf16.mxu0 0
      %740 = vmatpush1.bf16.msra.mxu0 0
      %741 = vmatprep.subr.bf16.mxu0 0
      %742 = vmatpush1.bf16.msra.mxu0 0
      %743 = vmatprep.subr.bf16.mxu0 0
      %744 = vmatpush1.bf16.msra.mxu0 0
      %745 = vmatprep.subr.bf16.mxu0 0
      %746 = vmatpush1.bf16.msra.mxu0 0
      %747 = vmatprep.subr.bf16.mxu0 0
      %748 = vmatpush1.bf16.msra.mxu0 0
      %749 = vmatprep.subr.bf16.mxu0 0
      %750 = vmatpush1.bf16.msra.mxu0 0
      %751 = vmatprep.mubr.bf16.mxu0 0
      %752 = vmatmul.mubr.bf16.gmra.mrb[0].mxu0 %v672
      %v753 = vpop.f32.mrb[0].mxu0
      %v754 = vadd.f32 0.0, %v753
      %v755 = vpop.f32.mrb[0].mxu0
      %v756 = vpop.f32.mrb[0].mxu0
      %v757 = vadd.f32 0.0, %v756
      %v758 = vpop.f32.mrb[0].mxu0
      %759 = vmatprep.mubr.bf16.mxu0 0
      %760 = vmatmul.mubr.bf16.gmra.mrb[0].mxu0 %v675
      %v761 = vpop.f32.mrb[0].mxu0
      %v762 = vadd.f32 0.0, %v761
      %v763 = vpop.f32.mrb[0].mxu0
      %v764 = vpop.f32.mrb[0].mxu0
      %v765 = vadd.f32 0.0, %v764
      %v766 = vpop.f32.mrb[0].mxu0
      %767 = vmatprep.mubr.bf16.mxu0 0
      %768 = vmatmul.mubr.bf16.gmra.mrb[0].mxu0 %v678
      %v769 = vpop.f32.mrb[0].mxu0
      %v770 = vadd.f32 0.0, %v769
      %v771 = vpop.f32.mrb[0].mxu0
      %v772 = vpop.f32.mrb[0].mxu0
      %v773 = vadd.f32 0.0, %v772
      %v774 = vpop.f32.mrb[0].mxu0
      %775 = vmatprep.mubr.bf16.mxu0 0
      %776 = vmatmul.mubr.bf16.gmra.mrb[0].mxu0 %v681
      %v777 = vpop.f32.mrb[0].mxu0
      %v778 = vadd.f32 0.0, %v777
      %v779 = vpop.f32.mrb[0].mxu0
      %v780 = vpop.f32.mrb[0].mxu0
      %v781 = vadd.f32 0.0, %v780
      %v782 = vpop.f32.mrb[0].mxu0
      %783 = vmatprep.mubr.bf16.mxu0 0
      %784 = vmatmul.mubr.bf16.gmra.mrb[0].mxu0 %v684
      %v785 = vpop.f32.mrb[0].mxu0
      %v786 = vadd.f32 0.0, %v785
      %v787 = vpop.f32.mrb[0].mxu0
      %v788 = vpop.f32.mrb[0].mxu0
      %v789 = vadd.f32 0.0, %v788
      %v790 = vpop.f32.mrb[0].mxu0
      %791 = vmatprep.mubr.bf16.mxu0 0
      %792 = vmatmul.mubr.bf16.gmra.mrb[0].mxu0 %v687
      %v793 = vpop.f32.mrb[0].mxu0
      %v794 = vadd.f32 0.0, %v793
      %v795 = vpop.f32.mrb[0].mxu0
      %v796 = vpop.f32.mrb[0].mxu0
      %v797 = vadd.f32 0.0, %v796
      %v798 = vpop.f32.mrb[0].mxu0
      %799 = vmatprep.mubr.bf16.mxu0 0
      %800 = vmatmul.mubr.bf16.gmra.mrb[0].mxu0 %v690
      %v801 = vpop.f32.mrb[0].mxu0
      %v802 = vadd.f32 0.0, %v801
      %v803 = vpop.f32.mrb[0].mxu0
      %v804 = vpop.f32.mrb[0].mxu0
      %v805 = vadd.f32 0.0, %v804
      %v806 = vpop.f32.mrb[0].mxu0
      %807 = vmatprep.mubr.bf16.mxu0 0
      %808 = vmatmul.mubr.bf16.gmra.mrb[0].mxu0 %v693
      %v809 = vpop.f32.mrb[0].mxu0
      %v810 = vadd.f32 0.0, %v809
      %v811 = vpop.f32.mrb[0].mxu0
      %v812 = vpop.f32.mrb[0].mxu0
      %v813 = vadd.f32 0.0, %v812
      %v814 = vpop.f32.mrb[0].mxu0
      %815 = vmatprep.mubr.bf16.mxu0 0
      %816 = vmatmul.mubr.bf16.gmra.mrb[0].mxu0 %v696
      %v817 = vpop.f32.mrb[0].mxu0
      %v818 = vadd.f32 0.0, %v817
      %v819 = vpop.f32.mrb[0].mxu0
      %v820 = vpop.f32.mrb[0].mxu0
      %v821 = vadd.f32 0.0, %v820
      %v822 = vpop.f32.mrb[0].mxu0
      %823 = vmatprep.mubr.bf16.mxu0 0
      %824 = vmatmul.mubr.bf16.gmra.mrb[0].mxu0 %v699
      %v825 = vpop.f32.mrb[0].mxu0
      %v826 = vadd.f32 0.0, %v825
      %v827 = vpop.f32.mrb[0].mxu0
      %v828 = vpop.f32.mrb[0].mxu0
      %v829 = vadd.f32 0.0, %v828
      %v830 = vpop.f32.mrb[0].mxu0
      %831 = vmatprep.mubr.bf16.mxu0 0
      %832 = vmatmul.mubr.bf16.gmra.mrb[0].mxu0 %v702
      %v833 = vpop.f32.mrb[0].mxu0
      %v834 = vadd.f32 0.0, %v833
      %v835 = vpop.f32.mrb[0].mxu0
      %v836 = vpop.f32.mrb[0].mxu0
      %v837 = vadd.f32 0.0, %v836
      %v838 = vpop.f32.mrb[0].mxu0
      %839 = vmatprep.mubr.bf16.mxu0 0
      %840 = vmatmul.mubr.bf16.gmra.mrb[0].mxu0 %v705
      %v841 = vpop.f32.mrb[0].mxu0
      %v842 = vadd.f32 0.0, %v841
      %v843 = vpop.f32.mrb[0].mxu0
      %v844 = vpop.f32.mrb[0].mxu0
      %v845 = vadd.f32 0.0, %v844
      %v846 = vpop.f32.mrb[0].mxu0
      %847 = vmatprep.mubr.bf16.mxu0 0
      %848 = vmatmul.mubr.bf16.gmra.mrb[0].mxu0 %v708
      %v849 = vpop.f32.mrb[0].mxu0
      %v850 = vadd.f32 0.0, %v849
      %v851 = vpop.f32.mrb[0].mxu0
      %v852 = vpop.f32.mrb[0].mxu0
      %v853 = vadd.f32 0.0, %v852
      %v854 = vpop.f32.mrb[0].mxu0
      %855 = vmatprep.mubr.bf16.mxu0 0
      %856 = vmatmul.mubr.bf16.gmra.mrb[0].mxu0 %v711
      %v857 = vpop.f32.mrb[0].mxu0
      %v858 = vadd.f32 0.0, %v857
      %v859 = vpop.f32.mrb[0].mxu0
      %v860 = vpop.f32.mrb[0].mxu0
      %v861 = vadd.f32 0.0, %v860
      %v862 = vpop.f32.mrb[0].mxu0
      %863 = vmatprep.mubr.bf16.mxu0 0
      %864 = vmatmul.mubr.bf16.gmra.mrb[0].mxu0 %v714
      %v865 = vpop.f32.mrb[0].mxu0
      %v866 = vadd.f32 0.0, %v865
      %v867 = vpop.f32.mrb[0].mxu0
      %v868 = vpop.f32.mrb[0].mxu0
      %v869 = vadd.f32 0.0, %v868
      %v870 = vpop.f32.mrb[0].mxu0
      %871 = vmatprep.mubr.bf16.mxu0 0
      %872 = vmatmul.mubr.bf16.gmra.mrb[0].mxu0 %v717
      %v873 = vpop.f32.mrb[0].mxu0
      %v874 = vadd.f32 0.0, %v873
      %v875 = vpop.f32.mrb[0].mxu0
      %v876 = vpop.f32.mrb[0].mxu0
      %v877 = vadd.f32 0.0, %v876
      %v878 = vpop.f32.mrb[0].mxu0
      %879 = vdwg.mxu0
      %v912 = vunpack.c.l.b16 %v216
      %v913 = vunpack.c.l.b16 %v217
      %v914 = vunpack.c.l.b16 %v218
      %v915 = vunpack.c.l.b16 %v219
      %v916 = vunpack.c.l.b16 %v220
      %v917 = vunpack.c.l.b16 %v221
      %v918 = vunpack.c.l.b16 %v222
      %v919 = vunpack.c.l.b16 %v223
      %v920 = vunpack.c.l.b16 %v224
      %v921 = vunpack.c.l.b16 %v225
      %v922 = vunpack.c.l.b16 %v226
      %v923 = vunpack.c.l.b16 %v227
      %v924 = vunpack.c.l.b16 %v228
      %v925 = vunpack.c.l.b16 %v229
      %v926 = vunpack.c.l.b16 %v230
      %v927 = vunpack.c.l.b16 %v231
      %v928 = vunpack.c.l.b16 %v232
      %v929 = vunpack.c.l.b16 %v233
      %v930 = vunpack.c.l.b16 %v234
      %v931 = vunpack.c.l.b16 %v235
      %v932 = vunpack.c.l.b16 %v236
      %v933 = vunpack.c.l.b16 %v237
      %v934 = vunpack.c.l.b16 %v238
      %v935 = vunpack.c.l.b16 %v239
      %v936 = vunpack.c.l.b16 %v240
      %v937 = vunpack.c.l.b16 %v241
      %v938 = vunpack.c.l.b16 %v242
      %v939 = vunpack.c.l.b16 %v243
      %v940 = vunpack.c.l.b16 %v244
      %v941 = vunpack.c.l.b16 %v245
      %v942 = vunpack.c.l.b16 %v246
      %v943 = vunpack.c.l.b16 %v247
      %v944 = vpack.c.b16 %v913, %v912
      %v945 = vpack.c.b16 %v915, %v914
      %v946 = vpack.c.b16 %v917, %v916
      %v947 = vpack.c.b16 %v919, %v918
      %v948 = vpack.c.b16 %v921, %v920
      %v949 = vpack.c.b16 %v923, %v922
      %v950 = vpack.c.b16 %v925, %v924
      %v951 = vpack.c.b16 %v927, %v926
      %v952 = vpack.c.b16 %v929, %v928
      %v953 = vpack.c.b16 %v931, %v930
      %v954 = vpack.c.b16 %v933, %v932
      %v955 = vpack.c.b16 %v935, %v934
      %v956 = vpack.c.b16 %v937, %v936
      %v957 = vpack.c.b16 %v939, %v938
      %v958 = vpack.c.b16 %v941, %v940
      %v959 = vpack.c.b16 %v943, %v942
      %v962 = vunpack.c.l.b16 %v248
      %v963 = vunpack.c.l.b16 %v249
      %v964 = vpack.c.b16 %v963, %v962
      %v967 = vsel %vm670, %v944, 0
      %v970 = vsel %vm670, %v945, 0
      %v973 = vsel %vm670, %v946, 0
      %v976 = vsel %vm670, %v947, 0
      %v979 = vsel %vm670, %v948, 0
      %v982 = vsel %vm670, %v949, 0
      %v985 = vsel %vm670, %v950, 0
      %v988 = vsel %vm670, %v951, 0
      %v991 = vsel %vm670, %v952, 0
      %v994 = vsel %vm670, %v953, 0
      %v997 = vsel %vm670, %v954, 0
      %v1000 = vsel %vm670, %v955, 0
      %v1003 = vsel %vm670, %v956, 0
      %v1006 = vsel %vm670, %v957, 0
      %v1009 = vsel %vm670, %v958, 0
      %v1012 = vsel %vm670, %v959, 0
      %1014 = vmatprep.subr.bf16.mxu0 0
      %1015 = vmatpush1.bf16.msra.mxu0 %v964
      %1016 = vmatprep.subr.bf16.mxu0 0
      %1017 = vmatpush1.bf16.msra.mxu0 0
      %1018 = vmatprep.subr.bf16.mxu0 0
      %1019 = vmatpush1.bf16.msra.mxu0 0
      %1020 = vmatprep.subr.bf16.mxu0 0
      %1021 = vmatpush1.bf16.msra.mxu0 0
      %1022 = vmatprep.subr.bf16.mxu0 0
      %1023 = vmatpush1.bf16.msra.mxu0 0
      %1024 = vmatprep.subr.bf16.mxu0 0
      %1025 = vmatpush1.bf16.msra.mxu0 0
      %1026 = vmatprep.subr.bf16.mxu0 0
      %1027 = vmatpush1.bf16.msra.mxu0 0
      %1028 = vmatprep.subr.bf16.mxu0 0
      %1029 = vmatpush1.bf16.msra.mxu0 0
      %1030 = vmatprep.subr.bf16.mxu0 0
      %1031 = vmatpush1.bf16.msra.mxu0 0
      %1032 = vmatprep.subr.bf16.mxu0 0
      %1033 = vmatpush1.bf16.msra.mxu0 0
      %1034 = vmatprep.subr.bf16.mxu0 0
      %1035 = vmatpush1.bf16.msra.mxu0 0
      %1036 = vmatprep.subr.bf16.mxu0 0
      %1037 = vmatpush1.bf16.msra.mxu0 0
      %1038 = vmatprep.subr.bf16.mxu0 0
      %1039 = vmatpush1.bf16.msra.mxu0 0
      %1040 = vmatprep.subr.bf16.mxu0 0
      %1041 = vmatpush1.bf16.msra.mxu0 0
      %1042 = vmatprep.subr.bf16.mxu0 0
      %1043 = vmatpush1.bf16.msra.mxu0 0
      %1044 = vmatprep.subr.bf16.mxu0 0
      %1045 = vmatpush1.bf16.msra.mxu0 0
      %1046 = vmatprep.mubr.bf16.mxu0 0
      %1047 = vmatmul.mubr.bf16.gmra.mrb[0].mxu0 %v967
      %v1048 = vpop.f32.mrb[0].mxu0
      %v1049 = vadd.f32 %v754, %v1048
      %v1050 = vpop.f32.mrb[0].mxu0
      %v1051 = vpop.f32.mrb[0].mxu0
      %v1052 = vadd.f32 %v757, %v1051
      %v1053 = vpop.f32.mrb[0].mxu0
      %1054 = vmatprep.mubr.bf16.mxu0 0
      %1055 = vmatmul.mubr.bf16.gmra.mrb[0].mxu0 %v970
      %v1056 = vpop.f32.mrb[0].mxu0
      %v1057 = vadd.f32 %v762, %v1056
      %v1058 = vpop.f32.mrb[0].mxu0
      %v1059 = vpop.f32.mrb[0].mxu0
      %v1060 = vadd.f32 %v765, %v1059
      %v1061 = vpop.f32.mrb[0].mxu0
      %1062 = vmatprep.mubr.bf16.mxu0 0
      %1063 = vmatmul.mubr.bf16.gmra.mrb[0].mxu0 %v973
      %v1064 = vpop.f32.mrb[0].mxu0
      %v1065 = vadd.f32 %v770, %v1064
      %v1066 = vpop.f32.mrb[0].mxu0
      %v1067 = vpop.f32.mrb[0].mxu0
      %v1068 = vadd.f32 %v773, %v1067
      %v1069 = vpop.f32.mrb[0].mxu0
      %1070 = vmatprep.mubr.bf16.mxu0 0
      %1071 = vmatmul.mubr.bf16.gmra.mrb[0].mxu0 %v976
      %v1072 = vpop.f32.mrb[0].mxu0
      %v1073 = vadd.f32 %v778, %v1072
      %v1074 = vpop.f32.mrb[0].mxu0
      %v1075 = vpop.f32.mrb[0].mxu0
      %v1076 = vadd.f32 %v781, %v1075
      %v1077 = vpop.f32.mrb[0].mxu0
      %1078 = vmatprep.mubr.bf16.mxu0 0
      %1079 = vmatmul.mubr.bf16.gmra.mrb[0].mxu0 %v979
      %v1080 = vpop.f32.mrb[0].mxu0
      %v1081 = vadd.f32 %v786, %v1080
      %v1082 = vpop.f32.mrb[0].mxu0
      %v1083 = vpop.f32.mrb[0].mxu0
      %v1084 = vadd.f32 %v789, %v1083
      %v1085 = vpop.f32.mrb[0].mxu0
      %1086 = vmatprep.mubr.bf16.mxu0 0
      %1087 = vmatmul.mubr.bf16.gmra.mrb[0].mxu0 %v982
      %v1088 = vpop.f32.mrb[0].mxu0
      %v1089 = vadd.f32 %v794, %v1088
      %v1090 = vpop.f32.mrb[0].mxu0
      %v1091 = vpop.f32.mrb[0].mxu0
      %v1092 = vadd.f32 %v797, %v1091
      %v1093 = vpop.f32.mrb[0].mxu0
      %1094 = vmatprep.mubr.bf16.mxu0 0
      %1095 = vmatmul.mubr.bf16.gmra.mrb[0].mxu0 %v985
      %v1096 = vpop.f32.mrb[0].mxu0
      %v1097 = vadd.f32 %v802, %v1096
      %v1098 = vpop.f32.mrb[0].mxu0
      %v1099 = vpop.f32.mrb[0].mxu0
      %v1100 = vadd.f32 %v805, %v1099
      %v1101 = vpop.f32.mrb[0].mxu0
      %1102 = vmatprep.mubr.bf16.mxu0 0
      %1103 = vmatmul.mubr.bf16.gmra.mrb[0].mxu0 %v988
      %v1104 = vpop.f32.mrb[0].mxu0
      %v1105 = vadd.f32 %v810, %v1104
      %v1106 = vpop.f32.mrb[0].mxu0
      %v1107 = vpop.f32.mrb[0].mxu0
      %v1108 = vadd.f32 %v813, %v1107
      %v1109 = vpop.f32.mrb[0].mxu0
      %1110 = vmatprep.mubr.bf16.mxu0 0
      %1111 = vmatmul.mubr.bf16.gmra.mrb[0].mxu0 %v991
      %v1112 = vpop.f32.mrb[0].mxu0
      %v1113 = vadd.f32 %v818, %v1112
      %v1114 = vpop.f32.mrb[0].mxu0
      %v1115 = vpop.f32.mrb[0].mxu0
      %v1116 = vadd.f32 %v821, %v1115
      %v1117 = vpop.f32.mrb[0].mxu0
      %1118 = vmatprep.mubr.bf16.mxu0 0
      %1119 = vmatmul.mubr.bf16.gmra.mrb[0].mxu0 %v994
      %v1120 = vpop.f32.mrb[0].mxu0
      %v1121 = vadd.f32 %v826, %v1120
      %v1122 = vpop.f32.mrb[0].mxu0
      %v1123 = vpop.f32.mrb[0].mxu0
      %v1124 = vadd.f32 %v829, %v1123
      %v1125 = vpop.f32.mrb[0].mxu0
      %1126 = vmatprep.mubr.bf16.mxu0 0
      %1127 = vmatmul.mubr.bf16.gmra.mrb[0].mxu0 %v997
      %v1128 = vpop.f32.mrb[0].mxu0
      %v1129 = vadd.f32 %v834, %v1128
      %v1130 = vpop.f32.mrb[0].mxu0
      %v1131 = vpop.f32.mrb[0].mxu0
      %v1132 = vadd.f32 %v837, %v1131
      %v1133 = vpop.f32.mrb[0].mxu0
      %1134 = vmatprep.mubr.bf16.mxu0 0
      %1135 = vmatmul.mubr.bf16.gmra.mrb[0].mxu0 %v1000
      %v1136 = vpop.f32.mrb[0].mxu0
      %v1137 = vadd.f32 %v842, %v1136
      %v1138 = vpop.f32.mrb[0].mxu0
      %v1139 = vpop.f32.mrb[0].mxu0
      %v1140 = vadd.f32 %v845, %v1139
      %v1141 = vpop.f32.mrb[0].mxu0
      %1142 = vmatprep.mubr.bf16.mxu0 0
      %1143 = vmatmul.mubr.bf16.gmra.mrb[0].mxu0 %v1003
      %v1144 = vpop.f32.mrb[0].mxu0
      %v1145 = vadd.f32 %v850, %v1144
      %v1146 = vpop.f32.mrb[0].mxu0
      %v1147 = vpop.f32.mrb[0].mxu0
      %v1148 = vadd.f32 %v853, %v1147
      %v1149 = vpop.f32.mrb[0].mxu0
      %1150 = vmatprep.mubr.bf16.mxu0 0
      %1151 = vmatmul.mubr.bf16.gmra.mrb[0].mxu0 %v1006
      %v1152 = vpop.f32.mrb[0].mxu0
      %v1153 = vadd.f32 %v858, %v1152
      %v1154 = vpop.f32.mrb[0].mxu0
      %v1155 = vpop.f32.mrb[0].mxu0
      %v1156 = vadd.f32 %v861, %v1155
      %v1157 = vpop.f32.mrb[0].mxu0
      %1158 = vmatprep.mubr.bf16.mxu0 0
      %1159 = vmatmul.mubr.bf16.gmra.mrb[0].mxu0 %v1009
      %v1160 = vpop.f32.mrb[0].mxu0
      %v1161 = vadd.f32 %v866, %v1160
      %v1162 = vpop.f32.mrb[0].mxu0
      %v1163 = vpop.f32.mrb[0].mxu0
      %v1164 = vadd.f32 %v869, %v1163
      %v1165 = vpop.f32.mrb[0].mxu0
      %1166 = vmatprep.mubr.bf16.mxu0 0
      %1167 = vmatmul.mubr.bf16.gmra.mrb[0].mxu0 %v1012
      %v1168 = vpop.f32.mrb[0].mxu0
      %v1169 = vadd.f32 %v874, %v1168
      %v1170 = vpop.f32.mrb[0].mxu0
      %v1171 = vpop.f32.mrb[0].mxu0
      %v1172 = vadd.f32 %v877, %v1171
      %v1173 = vpop.f32.mrb[0].mxu0
      %1174 = vdwg.mxu0
      %v1175 = vld [vmem:[%s203] sm:$0xe]
      %v1176 = vld [vmem:[%s203 + $0x14] sm:$0xe]
      %v1177 = vld [vmem:[%s203 + $0x28] sm:$0xe]
      %v1178 = vld [vmem:[%s203 + $0x3c] sm:$0xe]
      %v1179 = vld [vmem:[%s203 + $0x50] sm:$0xe]
      %v1180 = vld [vmem:[%s203 + $0x64] sm:$0xe]
      %v1181 = vld [vmem:[%s203 + $0x78] sm:$0xe]
      %v1182 = vld [vmem:[%s203 + $0x8c] sm:$0xe]
      %vm1199 = vcmask 1042432
      %vm1200 = vcmask 1046532
      %vm1201 = vmor %vm1199, %vm1200
      %v1202 = vrot.slane %v1175, 5
      %v1203 = vrot.slane %v1202, 4
      %v1204 = vrot.slane %v217, 5
      %v1205 = vsel %vm1201, %v1203, %v1204
      %v1206 = vrot.slane %v1204, 4
      %v1207 = vrot.slane %v218, 5
      %v1208 = vsel %vm1201, %v1206, %v1207
      %v1209 = vrot.slane %v1207, 4
      %v1210 = vrot.slane %v219, 5
      %v1211 = vsel %vm1201, %v1209, %v1210
      %v1212 = vrot.slane %v1210, 4
      %v1213 = vrot.slane %v250, 5
      %v1214 = vsel %vm1201, %v1212, %v1213
      %v1215 = vrot.slane %v1176, 5
      %v1216 = vrot.slane %v1215, 4
      %v1217 = vrot.slane %v221, 5
      %v1218 = vsel %vm1201, %v1216, %v1217
      %v1219 = vrot.slane %v1217, 4
      %v1220 = vrot.slane %v222, 5
      %v1221 = vsel %vm1201, %v1219, %v1220
      %v1222 = vrot.slane %v1220, 4
      %v1223 = vrot.slane %v223, 5
      %v1224 = vsel %vm1201, %v1222, %v1223
      %v1225 = vrot.slane %v1223, 4
      %v1226 = vrot.slane %v251, 5
      %v1227 = vsel %vm1201, %v1225, %v1226
      %v1228 = vrot.slane %v1177, 5
      %v1229 = vrot.slane %v1228, 4
      %v1230 = vrot.slane %v225, 5
      %v1231 = vsel %vm1201, %v1229, %v1230
      %v1232 = vrot.slane %v1230, 4
      %v1233 = vrot.slane %v226, 5
      %v1234 = vsel %vm1201, %v1232, %v1233
      %v1235 = vrot.slane %v1233, 4
      %v1236 = vrot.slane %v227, 5
      %v1237 = vsel %vm1201, %v1235, %v1236
      %v1238 = vrot.slane %v1236, 4
      %v1239 = vrot.slane %v252, 5
      %v1240 = vsel %vm1201, %v1238, %v1239
      %v1241 = vrot.slane %v1178, 5
      %v1242 = vrot.slane %v1241, 4
      %v1243 = vrot.slane %v229, 5
      %v1244 = vsel %vm1201, %v1242, %v1243
      %v1245 = vrot.slane %v1243, 4
      %v1246 = vrot.slane %v230, 5
      %v1247 = vsel %vm1201, %v1245, %v1246
      %v1248 = vrot.slane %v1246, 4
      %v1249 = vrot.slane %v231, 5
      %v1250 = vsel %vm1201, %v1248, %v1249
      %v1251 = vrot.slane %v1249, 4
      %v1252 = vrot.slane %v253, 5
      %v1253 = vsel %vm1201, %v1251, %v1252
      %v1254 = vrot.slane %v1179, 5
      %v1255 = vrot.slane %v1254, 4
      %v1256 = vrot.slane %v233, 5
      %v1257 = vsel %vm1201, %v1255, %v1256
      %v1258 = vrot.slane %v1256, 4
      %v1259 = vrot.slane %v234, 5
      %v1260 = vsel %vm1201, %v1258, %v1259
      %v1261 = vrot.slane %v1259, 4
      %v1262 = vrot.slane %v235, 5
      %v1263 = vsel %vm1201, %v1261, %v1262
      %v1264 = vrot.slane %v1262, 4
      %v1265 = vrot.slane %v254, 5
      %v1266 = vsel %vm1201, %v1264, %v1265
      %v1267 = vrot.slane %v1180, 5
      %v1268 = vrot.slane %v1267, 4
      %v1269 = vrot.slane %v237, 5
      %v1270 = vsel %vm1201, %v1268, %v1269
      %v1271 = vrot.slane %v1269, 4
      %v1272 = vrot.slane %v238, 5
      %v1273 = vsel %vm1201, %v1271, %v1272
      %v1274 = vrot.slane %v1272, 4
      %v1275 = vrot.slane %v239, 5
      %v1276 = vsel %vm1201, %v1274, %v1275
      %v1277 = vrot.slane %v1275, 4
      %v1278 = vrot.slane %v255, 5
      %v1279 = vsel %vm1201, %v1277, %v1278
      %v1280 = vrot.slane %v1181, 5
      %v1281 = vrot.slane %v1280, 4
      %v1282 = vrot.slane %v241, 5
      %v1283 = vsel %vm1201, %v1281, %v1282
      %v1284 = vrot.slane %v1282, 4
      %v1285 = vrot.slane %v242, 5
      %v1286 = vsel %vm1201, %v1284, %v1285
      %v1287 = vrot.slane %v1285, 4
      %v1288 = vrot.slane %v243, 5
      %v1289 = vsel %vm1201, %v1287, %v1288
      %v1290 = vrot.slane %v1288, 4
      %v1291 = vrot.slane %v256, 5
      %v1292 = vsel %vm1201, %v1290, %v1291
      %v1293 = vrot.slane %v1182, 5
      %v1294 = vrot.slane %v1293, 4
      %v1295 = vrot.slane %v245, 5
      %v1296 = vsel %vm1201, %v1294, %v1295
      %v1297 = vrot.slane %v1295, 4
      %v1298 = vrot.slane %v246, 5
      %v1299 = vsel %vm1201, %v1297, %v1298
      %v1300 = vrot.slane %v1298, 4
      %v1301 = vrot.slane %v247, 5
      %v1302 = vsel %vm1201, %v1300, %v1301
      %v1303 = vrot.slane %v1301, 4
      %v1304 = vrot.slane %v257, 5
      %v1305 = vsel %vm1201, %v1303, %v1304
      %s1306 = scalar_lea.vmem %s1, 16
      %v1307 = vld [vmem:[%s1306] sm:$0xf]
      %v1308 = vld [vmem:[%s1306 + $0x4] sm:$0xf]
      %v1309 = vunpack.c.l.b16 %v1205
      %v1310 = vunpack.c.l.b16 %v1208
      %v1311 = vunpack.c.l.b16 %v1211
      %v1312 = vunpack.c.l.b16 %v1214
      %v1313 = vunpack.c.l.b16 %v1218
      %v1314 = vunpack.c.l.b16 %v1221
      %v1315 = vunpack.c.l.b16 %v1224
      %v1316 = vunpack.c.l.b16 %v1227
      %v1317 = vunpack.c.l.b16 %v1231
      %v1318 = vunpack.c.l.b16 %v1234
      %v1319 = vunpack.c.l.b16 %v1237
      %v1320 = vunpack.c.l.b16 %v1240
      %v1321 = vunpack.c.l.b16 %v1244
      %v1322 = vunpack.c.l.b16 %v1247
      %v1323 = vunpack.c.l.b16 %v1250
      %v1324 = vunpack.c.l.b16 %v1253
      %v1325 = vunpack.c.l.b16 %v1257
      %v1326 = vunpack.c.l.b16 %v1260
      %v1327 = vunpack.c.l.b16 %v1263
      %v1328 = vunpack.c.l.b16 %v1266
      %v1329 = vunpack.c.l.b16 %v1270
      %v1330 = vunpack.c.l.b16 %v1273
      %v1331 = vunpack.c.l.b16 %v1276
      %v1332 = vunpack.c.l.b16 %v1279
      %v1333 = vunpack.c.l.b16 %v1283
      %v1334 = vunpack.c.l.b16 %v1286
      %v1335 = vunpack.c.l.b16 %v1289
      %v1336 = vunpack.c.l.b16 %v1292
      %v1337 = vunpack.c.l.b16 %v1296
      %v1338 = vunpack.c.l.b16 %v1299
      %v1339 = vunpack.c.l.b16 %v1302
      %v1340 = vunpack.c.l.b16 %v1305
      %v1341 = vpack.c.b16 %v1310, %v1309
      %v1342 = vpack.c.b16 %v1312, %v1311
      %v1343 = vpack.c.b16 %v1314, %v1313
      %v1344 = vpack.c.b16 %v1316, %v1315
      %v1345 = vpack.c.b16 %v1318, %v1317
      %v1346 = vpack.c.b16 %v1320, %v1319
      %v1347 = vpack.c.b16 %v1322, %v1321
      %v1348 = vpack.c.b16 %v1324, %v1323
      %v1349 = vpack.c.b16 %v1326, %v1325
      %v1350 = vpack.c.b16 %v1328, %v1327
      %v1351 = vpack.c.b16 %v1330, %v1329
      %v1352 = vpack.c.b16 %v1332, %v1331
      %v1353 = vpack.c.b16 %v1334, %v1333
      %v1354 = vpack.c.b16 %v1336, %v1335
      %v1355 = vpack.c.b16 %v1338, %v1337
      %v1356 = vpack.c.b16 %v1340, %v1339
      %v1359 = vunpack.c.l.b16 %v1307
      %v1360 = vunpack.c.l.b16 %v1308
      %v1361 = vpack.c.b16 %v1360, %v1359
      %v1364 = vsel %vm670, %v1341, 0
      %v1367 = vsel %vm670, %v1342, 0
      %v1370 = vsel %vm670, %v1343, 0
      %v1373 = vsel %vm670, %v1344, 0
      %v1376 = vsel %vm670, %v1345, 0
      %v1379 = vsel %vm670, %v1346, 0
      %v1382 = vsel %vm670, %v1347, 0
      %v1385 = vsel %vm670, %v1348, 0
      %v1388 = vsel %vm670, %v1349, 0
      %v1391 = vsel %vm670, %v1350, 0
      %v1394 = vsel %vm670, %v1351, 0
      %v1397 = vsel %vm670, %v1352, 0
      %v1400 = vsel %vm670, %v1353, 0
      %v1403 = vsel %vm670, %v1354, 0
      %v1406 = vsel %vm670, %v1355, 0
      %v1409 = vsel %vm670, %v1356, 0
      %1411 = vmatprep.subr.bf16.mxu0 0
      %1412 = vmatpush1.bf16.msra.mxu0 %v1361
      %1413 = vmatprep.subr.bf16.mxu0 0
      %1414 = vmatpush1.bf16.msra.mxu0 0
      %1415 = vmatprep.subr.bf16.mxu0 0
      %1416 = vmatpush1.bf16.msra.mxu0 0
      %1417 = vmatprep.subr.bf16.mxu0 0
      %1418 = vmatpush1.bf16.msra.mxu0 0
      %1419 = vmatprep.subr.bf16.mxu0 0
      %1420 = vmatpush1.bf16.msra.mxu0 0
      %1421 = vmatprep.subr.bf16.mxu0 0
      %1422 = vmatpush1.bf16.msra.mxu0 0
      %1423 = vmatprep.subr.bf16.mxu0 0
      %1424 = vmatpush1.bf16.msra.mxu0 0
      %1425 = vmatprep.subr.bf16.mxu0 0
      %1426 = vmatpush1.bf16.msra.mxu0 0
      %1427 = vmatprep.subr.bf16.mxu0 0
      %1428 = vmatpush1.bf16.msra.mxu0 0
      %1429 = vmatprep.subr.bf16.mxu0 0
      %1430 = vmatpush1.bf16.msra.mxu0 0
      %1431 = vmatprep.subr.bf16.mxu0 0
      %1432 = vmatpush1.bf16.msra.mxu0 0
      %1433 = vmatprep.subr.bf16.mxu0 0
      %1434 = vmatpush1.bf16.msra.mxu0 0
      %1435 = vmatprep.subr.bf16.mxu0 0
      %1436 = vmatpush1.bf16.msra.mxu0 0
      %1437 = vmatprep.subr.bf16.mxu0 0
      %1438 = vmatpush1.bf16.msra.mxu0 0
      %1439 = vmatprep.subr.bf16.mxu0 0
      %1440 = vmatpush1.bf16.msra.mxu0 0
      %1441 = vmatprep.subr.bf16.mxu0 0
      %1442 = vmatpush1.bf16.msra.mxu0 0
      %1443 = vmatprep.mubr.bf16.mxu0 0
      %1444 = vmatmul.mubr.bf16.gmra.mrb[0].mxu0 %v1364
      %v1445 = vpop.f32.mrb[0].mxu0
      %v1446 = vadd.f32 0.0, %v1445
      %v1447 = vpop.f32.mrb[0].mxu0
      %v1448 = vpop.f32.mrb[0].mxu0
      %v1449 = vadd.f32 0.0, %v1448
      %v1450 = vpop.f32.mrb[0].mxu0
      %1451 = vmatprep.mubr.bf16.mxu0 0
      %1452 = vmatmul.mubr.bf16.gmra.mrb[0].mxu0 %v1367
      %v1453 = vpop.f32.mrb[0].mxu0
      %v1454 = vadd.f32 0.0, %v1453
      %v1455 = vpop.f32.mrb[0].mxu0
      %v1456 = vpop.f32.mrb[0].mxu0
      %v1457 = vadd.f32 0.0, %v1456
      %v1458 = vpop.f32.mrb[0].mxu0
      %1459 = vmatprep.mubr.bf16.mxu0 0
      %1460 = vmatmul.mubr.bf16.gmra.mrb[0].mxu0 %v1370
      %v1461 = vpop.f32.mrb[0].mxu0
      %v1462 = vadd.f32 0.0, %v1461
      %v1463 = vpop.f32.mrb[0].mxu0
      %v1464 = vpop.f32.mrb[0].mxu0
      %v1465 = vadd.f32 0.0, %v1464
      %v1466 = vpop.f32.mrb[0].mxu0
      %1467 = vmatprep.mubr.bf16.mxu0 0
      %1468 = vmatmul.mubr.bf16.gmra.mrb[0].mxu0 %v1373
      %v1469 = vpop.f32.mrb[0].mxu0
      %v1470 = vadd.f32 0.0, %v1469
      %v1471 = vpop.f32.mrb[0].mxu0
      %v1472 = vpop.f32.mrb[0].mxu0
      %v1473 = vadd.f32 0.0, %v1472
      %v1474 = vpop.f32.mrb[0].mxu0
      %1475 = vmatprep.mubr.bf16.mxu0 0
      %1476 = vmatmul.mubr.bf16.gmra.mrb[0].mxu0 %v1376
      %v1477 = vpop.f32.mrb[0].mxu0
      %v1478 = vadd.f32 0.0, %v1477
      %v1479 = vpop.f32.mrb[0].mxu0
      %v1480 = vpop.f32.mrb[0].mxu0
      %v1481 = vadd.f32 0.0, %v1480
      %v1482 = vpop.f32.mrb[0].mxu0
      %1483 = vmatprep.mubr.bf16.mxu0 0
      %1484 = vmatmul.mubr.bf16.gmra.mrb[0].mxu0 %v1379
      %v1485 = vpop.f32.mrb[0].mxu0
      %v1486 = vadd.f32 0.0, %v1485
      %v1487 = vpop.f32.mrb[0].mxu0
      %v1488 = vpop.f32.mrb[0].mxu0
      %v1489 = vadd.f32 0.0, %v1488
      %v1490 = vpop.f32.mrb[0].mxu0
      %1491 = vmatprep.mubr.bf16.mxu0 0
      %1492 = vmatmul.mubr.bf16.gmra.mrb[0].mxu0 %v1382
      %v1493 = vpop.f32.mrb[0].mxu0
      %v1494 = vadd.f32 0.0, %v1493
      %v1495 = vpop.f32.mrb[0].mxu0
      %v1496 = vpop.f32.mrb[0].mxu0
      %v1497 = vadd.f32 0.0, %v1496
      %v1498 = vpop.f32.mrb[0].mxu0
      %1499 = vmatprep.mubr.bf16.mxu0 0
      %1500 = vmatmul.mubr.bf16.gmra.mrb[0].mxu0 %v1385
      %v1501 = vpop.f32.mrb[0].mxu0
      %v1502 = vadd.f32 0.0, %v1501
      %v1503 = vpop.f32.mrb[0].mxu0
      %v1504 = vpop.f32.mrb[0].mxu0
      %v1505 = vadd.f32 0.0, %v1504
      %v1506 = vpop.f32.mrb[0].mxu0
      %1507 = vmatprep.mubr.bf16.mxu0 0
      %1508 = vmatmul.mubr.bf16.gmra.mrb[0].mxu0 %v1388
      %v1509 = vpop.f32.mrb[0].mxu0
      %v1510 = vadd.f32 0.0, %v1509
      %v1511 = vpop.f32.mrb[0].mxu0
      %v1512 = vpop.f32.mrb[0].mxu0
      %v1513 = vadd.f32 0.0, %v1512
      %v1514 = vpop.f32.mrb[0].mxu0
      %1515 = vmatprep.mubr.bf16.mxu0 0
      %1516 = vmatmul.mubr.bf16.gmra.mrb[0].mxu0 %v1391
      %v1517 = vpop.f32.mrb[0].mxu0
      %v1518 = vadd.f32 0.0, %v1517
      %v1519 = vpop.f32.mrb[0].mxu0
      %v1520 = vpop.f32.mrb[0].mxu0
      %v1521 = vadd.f32 0.0, %v1520
      %v1522 = vpop.f32.mrb[0].mxu0
      %1523 = vmatprep.mubr.bf16.mxu0 0
      %1524 = vmatmul.mubr.bf16.gmra.mrb[0].mxu0 %v1394
      %v1525 = vpop.f32.mrb[0].mxu0
      %v1526 = vadd.f32 0.0, %v1525
      %v1527 = vpop.f32.mrb[0].mxu0
      %v1528 = vpop.f32.mrb[0].mxu0
      %v1529 = vadd.f32 0.0, %v1528
      %v1530 = vpop.f32.mrb[0].mxu0
      %1531 = vmatprep.mubr.bf16.mxu0 0
      %1532 = vmatmul.mubr.bf16.gmra.mrb[0].mxu0 %v1397
      %v1533 = vpop.f32.mrb[0].mxu0
      %v1534 = vadd.f32 0.0, %v1533
      %v1535 = vpop.f32.mrb[0].mxu0
      %v1536 = vpop.f32.mrb[0].mxu0
      %v1537 = vadd.f32 0.0, %v1536
      %v1538 = vpop.f32.mrb[0].mxu0
      %1539 = vmatprep.mubr.bf16.mxu0 0
      %1540 = vmatmul.mubr.bf16.gmra.mrb[0].mxu0 %v1400
      %v1541 = vpop.f32.mrb[0].mxu0
      %v1542 = vadd.f32 0.0, %v1541
      %v1543 = vpop.f32.mrb[0].mxu0
      %v1544 = vpop.f32.mrb[0].mxu0
      %v1545 = vadd.f32 0.0, %v1544
      %v1546 = vpop.f32.mrb[0].mxu0
      %1547 = vmatprep.mubr.bf16.mxu0 0
      %1548 = vmatmul.mubr.bf16.gmra.mrb[0].mxu0 %v1403
      %v1549 = vpop.f32.mrb[0].mxu0
      %v1550 = vadd.f32 0.0, %v1549
      %v1551 = vpop.f32.mrb[0].mxu0
      %v1552 = vpop.f32.mrb[0].mxu0
      %v1553 = vadd.f32 0.0, %v1552
      %v1554 = vpop.f32.mrb[0].mxu0
      %1555 = vmatprep.mubr.bf16.mxu0 0
      %1556 = vmatmul.mubr.bf16.gmra.mrb[0].mxu0 %v1406
      %v1557 = vpop.f32.mrb[0].mxu0
      %v1558 = vadd.f32 0.0, %v1557
      %v1559 = vpop.f32.mrb[0].mxu0
      %v1560 = vpop.f32.mrb[0].mxu0
      %v1561 = vadd.f32 0.0, %v1560
      %v1562 = vpop.f32.mrb[0].mxu0
      %1563 = vmatprep.mubr.bf16.mxu0 0
      %1564 = vmatmul.mubr.bf16.gmra.mrb[0].mxu0 %v1409
      %v1565 = vpop.f32.mrb[0].mxu0
      %v1566 = vadd.f32 0.0, %v1565
      %v1567 = vpop.f32.mrb[0].mxu0
      %v1568 = vpop.f32.mrb[0].mxu0
      %v1569 = vadd.f32 0.0, %v1568
      %v1570 = vpop.f32.mrb[0].mxu0
      %1571 = vdwg.mxu0
      %v1572 = vadd.f32 %v1049, %v1446
      %v1573 = vadd.f32 %v1052, %v1449
      %v1574 = vadd.f32 %v1057, %v1454
      %v1575 = vadd.f32 %v1060, %v1457
      %v1576 = vadd.f32 %v1065, %v1462
      %v1577 = vadd.f32 %v1068, %v1465
      %v1578 = vadd.f32 %v1073, %v1470
      %v1579 = vadd.f32 %v1076, %v1473
      %v1580 = vadd.f32 %v1081, %v1478
      %v1581 = vadd.f32 %v1084, %v1481
      %v1582 = vadd.f32 %v1089, %v1486
      %v1583 = vadd.f32 %v1092, %v1489
      %v1584 = vadd.f32 %v1097, %v1494
      %v1585 = vadd.f32 %v1100, %v1497
      %v1586 = vadd.f32 %v1105, %v1502
      %v1587 = vadd.f32 %v1108, %v1505
      %v1588 = vadd.f32 %v1113, %v1510
      %v1589 = vadd.f32 %v1116, %v1513
      %v1590 = vadd.f32 %v1121, %v1518
      %v1591 = vadd.f32 %v1124, %v1521
      %v1592 = vadd.f32 %v1129, %v1526
      %v1593 = vadd.f32 %v1132, %v1529
      %v1594 = vadd.f32 %v1137, %v1534
      %v1595 = vadd.f32 %v1140, %v1537
      %v1596 = vadd.f32 %v1145, %v1542
      %v1597 = vadd.f32 %v1148, %v1545
      %v1598 = vadd.f32 %v1153, %v1550
      %v1599 = vadd.f32 %v1156, %v1553
      %v1600 = vadd.f32 %v1161, %v1558
      %v1601 = vadd.f32 %v1164, %v1561
      %v1602 = vadd.f32 %v1169, %v1566
      %v1603 = vadd.f32 %v1172, %v1569
      %s1604 = scalar_lea.vmem %s203, 20
      %v1605 = vld [vmem:[%s1604] sm:$0xf]
      %v1606 = vld [vmem:[%s1604 + $0x4] sm:$0xf]
      %v1607 = vld [vmem:[%s1604 + $0x8] sm:$0xf]
      %v1608 = vld [vmem:[%s1604 + $0xc] sm:$0xf]
      %v1609 = vld [vmem:[%s1604 + $0x14] sm:$0xf]
      %v1610 = vld [vmem:[%s1604 + $0x18] sm:$0xf]
      %v1611 = vld [vmem:[%s1604 + $0x1c] sm:$0xf]
      %v1612 = vld [vmem:[%s1604 + $0x20] sm:$0xf]
      %v1613 = vld [vmem:[%s1604 + $0x28] sm:$0xf]
      %v1614 = vld [vmem:[%s1604 + $0x2c] sm:$0xf]
      %v1615 = vld [vmem:[%s1604 + $0x30] sm:$0xf]
      %v1616 = vld [vmem:[%s1604 + $0x34] sm:$0xf]
      %v1617 = vld [vmem:[%s1604 + $0x3c] sm:$0xf]
      %v1618 = vld [vmem:[%s1604 + $0x40] sm:$0xf]
      %v1619 = vld [vmem:[%s1604 + $0x44] sm:$0xf]
      %v1620 = vld [vmem:[%s1604 + $0x48] sm:$0xf]
      %v1621 = vld [vmem:[%s1604 + $0x50] sm:$0xf]
      %v1622 = vld [vmem:[%s1604 + $0x54] sm:$0xf]
      %v1623 = vld [vmem:[%s1604 + $0x58] sm:$0xf]
      %v1624 = vld [vmem:[%s1604 + $0x5c] sm:$0xf]
      %v1625 = vld [vmem:[%s1604 + $0x64] sm:$0xf]
      %v1626 = vld [vmem:[%s1604 + $0x68] sm:$0xf]
      %v1627 = vld [vmem:[%s1604 + $0x6c] sm:$0xf]
      %v1628 = vld [vmem:[%s1604 + $0x70] sm:$0xf]
      %v1629 = vld [vmem:[%s1604 + $0x78] sm:$0xf]
      %v1630 = vld [vmem:[%s1604 + $0x7c] sm:$0xf]
      %v1631 = vld [vmem:[%s1604 + $0x80] sm:$0xf]
      %v1632 = vld [vmem:[%s1604 + $0x84] sm:$0xf]
      %v1633 = vld [vmem:[%s1604 + $0x8c] sm:$0xf]
      %v1634 = vld [vmem:[%s1604 + $0x90] sm:$0xf]
      %v1635 = vld [vmem:[%s1604 + $0x94] sm:$0xf]
      %v1636 = vld [vmem:[%s1604 + $0x98] sm:$0xf]
      %s1637 = scalar_lea.vmem %s1, 24
      %v1638 = vld [vmem:[%s1637] sm:$0xf]
      %v1639 = vld [vmem:[%s1637 + $0x4] sm:$0xf]
      %v1672 = vunpack.c.l.b16 %v1605
      %v1673 = vunpack.c.l.b16 %v1606
      %v1674 = vunpack.c.l.b16 %v1607
      %v1675 = vunpack.c.l.b16 %v1608
      %v1676 = vunpack.c.l.b16 %v1609
      %v1677 = vunpack.c.l.b16 %v1610
      %v1678 = vunpack.c.l.b16 %v1611
      %v1679 = vunpack.c.l.b16 %v1612
      %v1680 = vunpack.c.l.b16 %v1613
      %v1681 = vunpack.c.l.b16 %v1614
      %v1682 = vunpack.c.l.b16 %v1615
      %v1683 = vunpack.c.l.b16 %v1616
      %v1684 = vunpack.c.l.b16 %v1617
      %v1685 = vunpack.c.l.b16 %v1618
      %v1686 = vunpack.c.l.b16 %v1619
      %v1687 = vunpack.c.l.b16 %v1620
      %v1688 = vunpack.c.l.b16 %v1621
      %v1689 = vunpack.c.l.b16 %v1622
      %v1690 = vunpack.c.l.b16 %v1623
      %v1691 = vunpack.c.l.b16 %v1624
      %v1692 = vunpack.c.l.b16 %v1625
      %v1693 = vunpack.c.l.b16 %v1626
      %v1694 = vunpack.c.l.b16 %v1627
      %v1695 = vunpack.c.l.b16 %v1628
      %v1696 = vunpack.c.l.b16 %v1629
      %v1697 = vunpack.c.l.b16 %v1630
      %v1698 = vunpack.c.l.b16 %v1631
      %v1699 = vunpack.c.l.b16 %v1632
      %v1700 = vunpack.c.l.b16 %v1633
      %v1701 = vunpack.c.l.b16 %v1634
      %v1702 = vunpack.c.l.b16 %v1635
      %v1703 = vunpack.c.l.b16 %v1636
      %v1704 = vpack.c.b16 %v1673, %v1672
      %v1705 = vpack.c.b16 %v1675, %v1674
      %v1706 = vpack.c.b16 %v1677, %v1676
      %v1707 = vpack.c.b16 %v1679, %v1678
      %v1708 = vpack.c.b16 %v1681, %v1680
      %v1709 = vpack.c.b16 %v1683, %v1682
      %v1710 = vpack.c.b16 %v1685, %v1684
      %v1711 = vpack.c.b16 %v1687, %v1686
      %v1712 = vpack.c.b16 %v1689, %v1688
      %v1713 = vpack.c.b16 %v1691, %v1690
      %v1714 = vpack.c.b16 %v1693, %v1692
      %v1715 = vpack.c.b16 %v1695, %v1694
      %v1716 = vpack.c.b16 %v1697, %v1696
      %v1717 = vpack.c.b16 %v1699, %v1698
      %v1718 = vpack.c.b16 %v1701, %v1700
      %v1719 = vpack.c.b16 %v1703, %v1702
      %v1722 = vunpack.c.l.b16 %v1638
      %v1723 = vunpack.c.l.b16 %v1639
      %v1724 = vpack.c.b16 %v1723, %v1722
      %v1727 = vsel %vm670, %v1704, 0
      %v1730 = vsel %vm670, %v1705, 0
      %v1733 = vsel %vm670, %v1706, 0
      %v1736 = vsel %vm670, %v1707, 0
      %v1739 = vsel %vm670, %v1708, 0
      %v1742 = vsel %vm670, %v1709, 0
      %v1745 = vsel %vm670, %v1710, 0
      %v1748 = vsel %vm670, %v1711, 0
      %v1751 = vsel %vm670, %v1712, 0
      %v1754 = vsel %vm670, %v1713, 0
      %v1757 = vsel %vm670, %v1714, 0
      %v1760 = vsel %vm670, %v1715, 0
      %v1763 = vsel %vm670, %v1716, 0
      %v1766 = vsel %vm670, %v1717, 0
      %v1769 = vsel %vm670, %v1718, 0
      %v1772 = vsel %vm670, %v1719, 0
      %1774 = vmatprep.subr.bf16.mxu0 0
      %1775 = vmatpush1.bf16.msra.mxu0 %v1724
      %1776 = vmatprep.subr.bf16.mxu0 0
      %1777 = vmatpush1.bf16.msra.mxu0 0
      %1778 = vmatprep.subr.bf16.mxu0 0
      %1779 = vmatpush1.bf16.msra.mxu0 0
      %1780 = vmatprep.subr.bf16.mxu0 0
      %1781 = vmatpush1.bf16.msra.mxu0 0
      %1782 = vmatprep.subr.bf16.mxu0 0
      %1783 = vmatpush1.bf16.msra.mxu0 0
      %1784 = vmatprep.subr.bf16.mxu0 0
      %1785 = vmatpush1.bf16.msra.mxu0 0
      %1786 = vmatprep.subr.bf16.mxu0 0
      %1787 = vmatpush1.bf16.msra.mxu0 0
      %1788 = vmatprep.subr.bf16.mxu0 0
      %1789 = vmatpush1.bf16.msra.mxu0 0
      %1790 = vmatprep.subr.bf16.mxu0 0
      %1791 = vmatpush1.bf16.msra.mxu0 0
      %1792 = vmatprep.subr.bf16.mxu0 0
      %1793 = vmatpush1.bf16.msra.mxu0 0
      %1794 = vmatprep.subr.bf16.mxu0 0
      %1795 = vmatpush1.bf16.msra.mxu0 0
      %1796 = vmatprep.subr.bf16.mxu0 0
      %1797 = vmatpush1.bf16.msra.mxu0 0
      %1798 = vmatprep.subr.bf16.mxu0 0
      %1799 = vmatpush1.bf16.msra.mxu0 0
      %1800 = vmatprep.subr.bf16.mxu0 0
      %1801 = vmatpush1.bf16.msra.mxu0 0
      %1802 = vmatprep.subr.bf16.mxu0 0
      %1803 = vmatpush1.bf16.msra.mxu0 0
      %1804 = vmatprep.subr.bf16.mxu0 0
      %1805 = vmatpush1.bf16.msra.mxu0 0
      %1806 = vmatprep.mubr.bf16.mxu0 0
      %1807 = vmatmul.mubr.bf16.gmra.mrb[0].mxu0 %v1727
      %v1808 = vpop.f32.mrb[0].mxu0
      %v1809 = vadd.f32 0.0, %v1808
      %v1810 = vpop.f32.mrb[0].mxu0
      %v1811 = vpop.f32.mrb[0].mxu0
      %v1812 = vadd.f32 0.0, %v1811
      %v1813 = vpop.f32.mrb[0].mxu0
      %1814 = vmatprep.mubr.bf16.mxu0 0
      %1815 = vmatmul.mubr.bf16.gmra.mrb[0].mxu0 %v1730
      %v1816 = vpop.f32.mrb[0].mxu0
      %v1817 = vadd.f32 0.0, %v1816
      %v1818 = vpop.f32.mrb[0].mxu0
      %v1819 = vpop.f32.mrb[0].mxu0
      %v1820 = vadd.f32 0.0, %v1819
      %v1821 = vpop.f32.mrb[0].mxu0
      %1822 = vmatprep.mubr.bf16.mxu0 0
      %1823 = vmatmul.mubr.bf16.gmra.mrb[0].mxu0 %v1733
      %v1824 = vpop.f32.mrb[0].mxu0
      %v1825 = vadd.f32 0.0, %v1824
      %v1826 = vpop.f32.mrb[0].mxu0
      %v1827 = vpop.f32.mrb[0].mxu0
      %v1828 = vadd.f32 0.0, %v1827
      %v1829 = vpop.f32.mrb[0].mxu0
      %1830 = vmatprep.mubr.bf16.mxu0 0
      %1831 = vmatmul.mubr.bf16.gmra.mrb[0].mxu0 %v1736
      %v1832 = vpop.f32.mrb[0].mxu0
      %v1833 = vadd.f32 0.0, %v1832
      %v1834 = vpop.f32.mrb[0].mxu0
      %v1835 = vpop.f32.mrb[0].mxu0
      %v1836 = vadd.f32 0.0, %v1835
      %v1837 = vpop.f32.mrb[0].mxu0
      %1838 = vmatprep.mubr.bf16.mxu0 0
      %1839 = vmatmul.mubr.bf16.gmra.mrb[0].mxu0 %v1739
      %v1840 = vpop.f32.mrb[0].mxu0
      %v1841 = vadd.f32 0.0, %v1840
      %v1842 = vpop.f32.mrb[0].mxu0
      %v1843 = vpop.f32.mrb[0].mxu0
      %v1844 = vadd.f32 0.0, %v1843
      %v1845 = vpop.f32.mrb[0].mxu0
      %1846 = vmatprep.mubr.bf16.mxu0 0
      %1847 = vmatmul.mubr.bf16.gmra.mrb[0].mxu0 %v1742
      %v1848 = vpop.f32.mrb[0].mxu0
      %v1849 = vadd.f32 0.0, %v1848
      %v1850 = vpop.f32.mrb[0].mxu0
      %v1851 = vpop.f32.mrb[0].mxu0
      %v1852 = vadd.f32 0.0, %v1851
      %v1853 = vpop.f32.mrb[0].mxu0
      %1854 = vmatprep.mubr.bf16.mxu0 0
      %1855 = vmatmul.mubr.bf16.gmra.mrb[0].mxu0 %v1745
      %v1856 = vpop.f32.mrb[0].mxu0
      %v1857 = vadd.f32 0.0, %v1856
      %v1858 = vpop.f32.mrb[0].mxu0
      %v1859 = vpop.f32.mrb[0].mxu0
      %v1860 = vadd.f32 0.0, %v1859
      %v1861 = vpop.f32.mrb[0].mxu0
      %1862 = vmatprep.mubr.bf16.mxu0 0
      %1863 = vmatmul.mubr.bf16.gmra.mrb[0].mxu0 %v1748
      %v1864 = vpop.f32.mrb[0].mxu0
      %v1865 = vadd.f32 0.0, %v1864
      %v1866 = vpop.f32.mrb[0].mxu0
      %v1867 = vpop.f32.mrb[0].mxu0
      %v1868 = vadd.f32 0.0, %v1867
      %v1869 = vpop.f32.mrb[0].mxu0
      %1870 = vmatprep.mubr.bf16.mxu0 0
      %1871 = vmatmul.mubr.bf16.gmra.mrb[0].mxu0 %v1751
      %v1872 = vpop.f32.mrb[0].mxu0
      %v1873 = vadd.f32 0.0, %v1872
      %v1874 = vpop.f32.mrb[0].mxu0
      %v1875 = vpop.f32.mrb[0].mxu0
      %v1876 = vadd.f32 0.0, %v1875
      %v1877 = vpop.f32.mrb[0].mxu0
      %1878 = vmatprep.mubr.bf16.mxu0 0
      %1879 = vmatmul.mubr.bf16.gmra.mrb[0].mxu0 %v1754
      %v1880 = vpop.f32.mrb[0].mxu0
      %v1881 = vadd.f32 0.0, %v1880
      %v1882 = vpop.f32.mrb[0].mxu0
      %v1883 = vpop.f32.mrb[0].mxu0
      %v1884 = vadd.f32 0.0, %v1883
      %v1885 = vpop.f32.mrb[0].mxu0
      %1886 = vmatprep.mubr.bf16.mxu0 0
      %1887 = vmatmul.mubr.bf16.gmra.mrb[0].mxu0 %v1757
      %v1888 = vpop.f32.mrb[0].mxu0
      %v1889 = vadd.f32 0.0, %v1888
      %v1890 = vpop.f32.mrb[0].mxu0
      %v1891 = vpop.f32.mrb[0].mxu0
      %v1892 = vadd.f32 0.0, %v1891
      %v1893 = vpop.f32.mrb[0].mxu0
      %1894 = vmatprep.mubr.bf16.mxu0 0
      %1895 = vmatmul.mubr.bf16.gmra.mrb[0].mxu0 %v1760
      %v1896 = vpop.f32.mrb[0].mxu0
      %v1897 = vadd.f32 0.0, %v1896
      %v1898 = vpop.f32.mrb[0].mxu0
      %v1899 = vpop.f32.mrb[0].mxu0
      %v1900 = vadd.f32 0.0, %v1899
      %v1901 = vpop.f32.mrb[0].mxu0
      %1902 = vmatprep.mubr.bf16.mxu0 0
      %1903 = vmatmul.mubr.bf16.gmra.mrb[0].mxu0 %v1763
      %v1904 = vpop.f32.mrb[0].mxu0
      %v1905 = vadd.f32 0.0, %v1904
      %v1906 = vpop.f32.mrb[0].mxu0
      %v1907 = vpop.f32.mrb[0].mxu0
      %v1908 = vadd.f32 0.0, %v1907
      %v1909 = vpop.f32.mrb[0].mxu0
      %1910 = vmatprep.mubr.bf16.mxu0 0
      %1911 = vmatmul.mubr.bf16.gmra.mrb[0].mxu0 %v1766
      %v1912 = vpop.f32.mrb[0].mxu0
      %v1913 = vadd.f32 0.0, %v1912
      %v1914 = vpop.f32.mrb[0].mxu0
      %v1915 = vpop.f32.mrb[0].mxu0
      %v1916 = vadd.f32 0.0, %v1915
      %v1917 = vpop.f32.mrb[0].mxu0
      %1918 = vmatprep.mubr.bf16.mxu0 0
      %1919 = vmatmul.mubr.bf16.gmra.mrb[0].mxu0 %v1769
      %v1920 = vpop.f32.mrb[0].mxu0
      %v1921 = vadd.f32 0.0, %v1920
      %v1922 = vpop.f32.mrb[0].mxu0
      %v1923 = vpop.f32.mrb[0].mxu0
      %v1924 = vadd.f32 0.0, %v1923
      %v1925 = vpop.f32.mrb[0].mxu0
      %1926 = vmatprep.mubr.bf16.mxu0 0
      %1927 = vmatmul.mubr.bf16.gmra.mrb[0].mxu0 %v1772
      %v1928 = vpop.f32.mrb[0].mxu0
      %v1929 = vadd.f32 0.0, %v1928
      %v1930 = vpop.f32.mrb[0].mxu0
      %v1931 = vpop.f32.mrb[0].mxu0
      %v1932 = vadd.f32 0.0, %v1931
      %v1933 = vpop.f32.mrb[0].mxu0
      %1934 = vdwg.mxu0
      %v1935 = vadd.f32 %v1572, %v1809
      %v1936 = vadd.f32 %v1573, %v1812
      %v1937 = vadd.f32 %v1574, %v1817
      %v1938 = vadd.f32 %v1575, %v1820
      %v1939 = vadd.f32 %v1576, %v1825
      %v1940 = vadd.f32 %v1577, %v1828
      %v1941 = vadd.f32 %v1578, %v1833
      %v1942 = vadd.f32 %v1579, %v1836
      %v1943 = vadd.f32 %v1580, %v1841
      %v1944 = vadd.f32 %v1581, %v1844
      %v1945 = vadd.f32 %v1582, %v1849
      %v1946 = vadd.f32 %v1583, %v1852
      %v1947 = vadd.f32 %v1584, %v1857
      %v1948 = vadd.f32 %v1585, %v1860
      %v1949 = vadd.f32 %v1586, %v1865
      %v1950 = vadd.f32 %v1587, %v1868
      %v1951 = vadd.f32 %v1588, %v1873
      %v1952 = vadd.f32 %v1589, %v1876
      %v1953 = vadd.f32 %v1590, %v1881
      %v1954 = vadd.f32 %v1591, %v1884
      %v1955 = vadd.f32 %v1592, %v1889
      %v1956 = vadd.f32 %v1593, %v1892
      %v1957 = vadd.f32 %v1594, %v1897
      %v1958 = vadd.f32 %v1595, %v1900
      %v1959 = vadd.f32 %v1596, %v1905
      %v1960 = vadd.f32 %v1597, %v1908
      %v1961 = vadd.f32 %v1598, %v1913
      %v1962 = vadd.f32 %v1599, %v1916
      %v1963 = vadd.f32 %v1600, %v1921
      %v1964 = vadd.f32 %v1601, %v1924
      %v1965 = vadd.f32 %v1602, %v1929
      %v1966 = vadd.f32 %v1603, %v1932
      %v1967 = vld [vmem:[%s1604] sm:$0xf]
      %v1968 = vld [vmem:[%s1604 + $0x4] sm:$0xf]
      %v1969 = vld [vmem:[%s1604 + $0x8] sm:$0xf]
      %v1970 = vld [vmem:[%s1604 + $0xc] sm:$0xf]
      %v1971 = vld [vmem:[%s1604 + $0x10] sm:$0x1]
      %v1972 = vld [vmem:[%s1604 + $0x14] sm:$0xf]
      %v1973 = vld [vmem:[%s1604 + $0x18] sm:$0xf]
      %v1974 = vld [vmem:[%s1604 + $0x1c] sm:$0xf]
      %v1975 = vld [vmem:[%s1604 + $0x20] sm:$0xf]
      %v1976 = vld [vmem:[%s1604 + $0x24] sm:$0x1]
      %v1977 = vld [vmem:[%s1604 + $0x28] sm:$0xf]
      %v1978 = vld [vmem:[%s1604 + $0x2c] sm:$0xf]
      %v1979 = vld [vmem:[%s1604 + $0x30] sm:$0xf]
      %v1980 = vld [vmem:[%s1604 + $0x34] sm:$0xf]
      %v1981 = vld [vmem:[%s1604 + $0x38] sm:$0x1]
      %v1982 = vld [vmem:[%s1604 + $0x3c] sm:$0xf]
      %v1983 = vld [vmem:[%s1604 + $0x40] sm:$0xf]
      %v1984 = vld [vmem:[%s1604 + $0x44] sm:$0xf]
      %v1985 = vld [vmem:[%s1604 + $0x48] sm:$0xf]
      %v1986 = vld [vmem:[%s1604 + $0x4c] sm:$0x1]
      %v1987 = vld [vmem:[%s1604 + $0x50] sm:$0xf]
      %v1988 = vld [vmem:[%s1604 + $0x54] sm:$0xf]
      %v1989 = vld [vmem:[%s1604 + $0x58] sm:$0xf]
      %v1990 = vld [vmem:[%s1604 + $0x5c] sm:$0xf]
      %v1991 = vld [vmem:[%s1604 + $0x60] sm:$0x1]
      %v1992 = vld [vmem:[%s1604 + $0x64] sm:$0xf]
      %v1993 = vld [vmem:[%s1604 + $0x68] sm:$0xf]
      %v1994 = vld [vmem:[%s1604 + $0x6c] sm:$0xf]
      %v1995 = vld [vmem:[%s1604 + $0x70] sm:$0xf]
      %v1996 = vld [vmem:[%s1604 + $0x74] sm:$0x1]
      %v1997 = vld [vmem:[%s1604 + $0x78] sm:$0xf]
      %v1998 = vld [vmem:[%s1604 + $0x7c] sm:$0xf]
      %v1999 = vld [vmem:[%s1604 + $0x80] sm:$0xf]
      %v2000 = vld [vmem:[%s1604 + $0x84] sm:$0xf]
      %v2001 = vld [vmem:[%s1604 + $0x88] sm:$0x1]
      %v2002 = vld [vmem:[%s1604 + $0x8c] sm:$0xf]
      %v2003 = vld [vmem:[%s1604 + $0x90] sm:$0xf]
      %v2004 = vld [vmem:[%s1604 + $0x94] sm:$0xf]
      %v2005 = vld [vmem:[%s1604 + $0x98] sm:$0xf]
      %v2006 = vld [vmem:[%s1604 + $0x9c] sm:$0x1]
      %v2008 = vshrl.u32 %v1967, 16
      %v2010 = vrot.slane %v2008, 4
      %v2011 = vshll.u32 %v1967, 16
      %v2013 = vrot.slane %v2011, 5
      %v2014 = vor.u32 %v2010, %v2013
      %v2015 = vrot.slane %v2014, 4
      %v2017 = vshll.u32 %v1968, 16
      %v2019 = vrot.slane %v2017, 5
      %v2020 = vsel %vm260, %v2015, %v2019
      %v2021 = vshrl.u32 %v1968, 16
      %v2023 = vrot.slane %v2021, 4
      %v2024 = vor.u32 %v2023, %v2019
      %v2025 = vrot.slane %v2024, 4
      %v2027 = vshll.u32 %v1969, 16
      %v2029 = vrot.slane %v2027, 5
      %v2030 = vsel %vm260, %v2025, %v2029
      %v2031 = vshrl.u32 %v1969, 16
      %v2033 = vrot.slane %v2031, 4
      %v2034 = vor.u32 %v2033, %v2029
      %v2035 = vrot.slane %v2034, 4
      %v2037 = vshll.u32 %v1970, 16
      %v2039 = vrot.slane %v2037, 5
      %v2040 = vsel %vm260, %v2035, %v2039
      %v2041 = vshrl.u32 %v1970, 16
      %v2043 = vrot.slane %v2041, 4
      %v2044 = vor.u32 %v2043, %v2039
      %v2045 = vrot.slane %v2044, 4
      %v2047 = vshll.u32 %v1971, 16
      %v2049 = vrot.slane %v2047, 5
      %v2050 = vsel %vm260, %v2045, %v2049
      %v2052 = vshrl.u32 %v1972, 16
      %v2054 = vrot.slane %v2052, 4
      %v2055 = vshll.u32 %v1972, 16
      %v2057 = vrot.slane %v2055, 5
      %v2058 = vor.u32 %v2054, %v2057
      %v2059 = vrot.slane %v2058, 4
      %v2061 = vshll.u32 %v1973, 16
      %v2063 = vrot.slane %v2061, 5
      %v2064 = vsel %vm260, %v2059, %v2063
      %v2065 = vshrl.u32 %v1973, 16
      %v2067 = vrot.slane %v2065, 4
      %v2068 = vor.u32 %v2067, %v2063
      %v2069 = vrot.slane %v2068, 4
      %v2071 = vshll.u32 %v1974, 16
      %v2073 = vrot.slane %v2071, 5
      %v2074 = vsel %vm260, %v2069, %v2073
      %v2075 = vshrl.u32 %v1974, 16
      %v2077 = vrot.slane %v2075, 4
      %v2078 = vor.u32 %v2077, %v2073
      %v2079 = vrot.slane %v2078, 4
      %v2081 = vshll.u32 %v1975, 16
      %v2083 = vrot.slane %v2081, 5
      %v2084 = vsel %vm260, %v2079, %v2083
      %v2085 = vshrl.u32 %v1975, 16
      %v2087 = vrot.slane %v2085, 4
      %v2088 = vor.u32 %v2087, %v2083
      %v2089 = vrot.slane %v2088, 4
      %v2091 = vshll.u32 %v1976, 16
      %v2093 = vrot.slane %v2091, 5
      %v2094 = vsel %vm260, %v2089, %v2093
      %v2096 = vshrl.u32 %v1977, 16
      %v2098 = vrot.slane %v2096, 4
      %v2099 = vshll.u32 %v1977, 16
      %v2101 = vrot.slane %v2099, 5
      %v2102 = vor.u32 %v2098, %v2101
      %v2103 = vrot.slane %v2102, 4
      %v2105 = vshll.u32 %v1978, 16
      %v2107 = vrot.slane %v2105, 5
      %v2108 = vsel %vm260, %v2103, %v2107
      %v2109 = vshrl.u32 %v1978, 16
      %v2111 = vrot.slane %v2109, 4
      %v2112 = vor.u32 %v2111, %v2107
      %v2113 = vrot.slane %v2112, 4
      %v2115 = vshll.u32 %v1979, 16
      %v2117 = vrot.slane %v2115, 5
      %v2118 = vsel %vm260, %v2113, %v2117
      %v2119 = vshrl.u32 %v1979, 16
      %v2121 = vrot.slane %v2119, 4
      %v2122 = vor.u32 %v2121, %v2117
      %v2123 = vrot.slane %v2122, 4
      %v2125 = vshll.u32 %v1980, 16
      %v2127 = vrot.slane %v2125, 5
      %v2128 = vsel %vm260, %v2123, %v2127
      %v2129 = vshrl.u32 %v1980, 16
      %v2131 = vrot.slane %v2129, 4
      %v2132 = vor.u32 %v2131, %v2127
      %v2133 = vrot.slane %v2132, 4
      %v2135 = vshll.u32 %v1981, 16
      %v2137 = vrot.slane %v2135, 5
      %v2138 = vsel %vm260, %v2133, %v2137
      %v2140 = vshrl.u32 %v1982, 16
      %v2142 = vrot.slane %v2140, 4
      %v2143 = vshll.u32 %v1982, 16
      %v2145 = vrot.slane %v2143, 5
      %v2146 = vor.u32 %v2142, %v2145
      %v2147 = vrot.slane %v2146, 4
      %v2149 = vshll.u32 %v1983, 16
      %v2151 = vrot.slane %v2149, 5
      %v2152 = vsel %vm260, %v2147, %v2151
      %v2153 = vshrl.u32 %v1983, 16
      %v2155 = vrot.slane %v2153, 4
      %v2156 = vor.u32 %v2155, %v2151
      %v2157 = vrot.slane %v2156, 4
      %v2159 = vshll.u32 %v1984, 16
      %v2161 = vrot.slane %v2159, 5
      %v2162 = vsel %vm260, %v2157, %v2161
      %v2163 = vshrl.u32 %v1984, 16
      %v2165 = vrot.slane %v2163, 4
      %v2166 = vor.u32 %v2165, %v2161
      %v2167 = vrot.slane %v2166, 4
      %v2169 = vshll.u32 %v1985, 16
      %v2171 = vrot.slane %v2169, 5
      %v2172 = vsel %vm260, %v2167, %v2171
      %v2173 = vshrl.u32 %v1985, 16
      %v2175 = vrot.slane %v2173, 4
      %v2176 = vor.u32 %v2175, %v2171
      %v2177 = vrot.slane %v2176, 4
      %v2179 = vshll.u32 %v1986, 16
      %v2181 = vrot.slane %v2179, 5
      %v2182 = vsel %vm260, %v2177, %v2181
      %v2184 = vshrl.u32 %v1987, 16
      %v2186 = vrot.slane %v2184, 4
      %v2187 = vshll.u32 %v1987, 16
      %v2189 = vrot.slane %v2187, 5
      %v2190 = vor.u32 %v2186, %v2189
      %v2191 = vrot.slane %v2190, 4
      %v2193 = vshll.u32 %v1988, 16
      %v2195 = vrot.slane %v2193, 5
      %v2196 = vsel %vm260, %v2191, %v2195
      %v2197 = vshrl.u32 %v1988, 16
      %v2199 = vrot.slane %v2197, 4
      %v2200 = vor.u32 %v2199, %v2195
      %v2201 = vrot.slane %v2200, 4
      %v2203 = vshll.u32 %v1989, 16
      %v2205 = vrot.slane %v2203, 5
      %v2206 = vsel %vm260, %v2201, %v2205
      %v2207 = vshrl.u32 %v1989, 16
      %v2209 = vrot.slane %v2207, 4
      %v2210 = vor.u32 %v2209, %v2205
      %v2211 = vrot.slane %v2210, 4
      %v2213 = vshll.u32 %v1990, 16
      %v2215 = vrot.slane %v2213, 5
      %v2216 = vsel %vm260, %v2211, %v2215
      %v2217 = vshrl.u32 %v1990, 16
      %v2219 = vrot.slane %v2217, 4
      %v2220 = vor.u32 %v2219, %v2215
      %v2221 = vrot.slane %v2220, 4
      %v2223 = vshll.u32 %v1991, 16
      %v2225 = vrot.slane %v2223, 5
      %v2226 = vsel %vm260, %v2221, %v2225
      %v2228 = vshrl.u32 %v1992, 16
      %v2230 = vrot.slane %v2228, 4
      %v2231 = vshll.u32 %v1992, 16
      %v2233 = vrot.slane %v2231, 5
      %v2234 = vor.u32 %v2230, %v2233
      %v2235 = vrot.slane %v2234, 4
      %v2237 = vshll.u32 %v1993, 16
      %v2239 = vrot.slane %v2237, 5
      %v2240 = vsel %vm260, %v2235, %v2239
      %v2241 = vshrl.u32 %v1993, 16
      %v2243 = vrot.slane %v2241, 4
      %v2244 = vor.u32 %v2243, %v2239
      %v2245 = vrot.slane %v2244, 4
      %v2247 = vshll.u32 %v1994, 16
      %v2249 = vrot.slane %v2247, 5
      %v2250 = vsel %vm260, %v2245, %v2249
      %v2251 = vshrl.u32 %v1994, 16
      %v2253 = vrot.slane %v2251, 4
      %v2254 = vor.u32 %v2253, %v2249
      %v2255 = vrot.slane %v2254, 4
      %v2257 = vshll.u32 %v1995, 16
      %v2259 = vrot.slane %v2257, 5
      %v2260 = vsel %vm260, %v2255, %v2259
      %v2261 = vshrl.u32 %v1995, 16
      %v2263 = vrot.slane %v2261, 4
      %v2264 = vor.u32 %v2263, %v2259
      %v2265 = vrot.slane %v2264, 4
      %v2267 = vshll.u32 %v1996, 16
      %v2269 = vrot.slane %v2267, 5
      %v2270 = vsel %vm260, %v2265, %v2269
      %v2272 = vshrl.u32 %v1997, 16
      %v2274 = vrot.slane %v2272, 4
      %v2275 = vshll.u32 %v1997, 16
      %v2277 = vrot.slane %v2275, 5
      %v2278 = vor.u32 %v2274, %v2277
      %v2279 = vrot.slane %v2278, 4
      %v2281 = vshll.u32 %v1998, 16
      %v2283 = vrot.slane %v2281, 5
      %v2284 = vsel %vm260, %v2279, %v2283
      %v2285 = vshrl.u32 %v1998, 16
      %v2287 = vrot.slane %v2285, 4
      %v2288 = vor.u32 %v2287, %v2283
      %v2289 = vrot.slane %v2288, 4
      %v2291 = vshll.u32 %v1999, 16
      %v2293 = vrot.slane %v2291, 5
      %v2294 = vsel %vm260, %v2289, %v2293
      %v2295 = vshrl.u32 %v1999, 16
      %v2297 = vrot.slane %v2295, 4
      %v2298 = vor.u32 %v2297, %v2293
      %v2299 = vrot.slane %v2298, 4
      %v2301 = vshll.u32 %v2000, 16
      %v2303 = vrot.slane %v2301, 5
      %v2304 = vsel %vm260, %v2299, %v2303
      %v2305 = vshrl.u32 %v2000, 16
      %v2307 = vrot.slane %v2305, 4
      %v2308 = vor.u32 %v2307, %v2303
      %v2309 = vrot.slane %v2308, 4
      %v2311 = vshll.u32 %v2001, 16
      %v2313 = vrot.slane %v2311, 5
      %v2314 = vsel %vm260, %v2309, %v2313
      %v2316 = vshrl.u32 %v2002, 16
      %v2318 = vrot.slane %v2316, 4
      %v2319 = vshll.u32 %v2002, 16
      %v2321 = vrot.slane %v2319, 5
      %v2322 = vor.u32 %v2318, %v2321
      %v2323 = vrot.slane %v2322, 4
      %v2325 = vshll.u32 %v2003, 16
      %v2327 = vrot.slane %v2325, 5
      %v2328 = vsel %vm260, %v2323, %v2327
      %v2329 = vshrl.u32 %v2003, 16
      %v2331 = vrot.slane %v2329, 4
      %v2332 = vor.u32 %v2331, %v2327
      %v2333 = vrot.slane %v2332, 4
      %v2335 = vshll.u32 %v2004, 16
      %v2337 = vrot.slane %v2335, 5
      %v2338 = vsel %vm260, %v2333, %v2337
      %v2339 = vshrl.u32 %v2004, 16
      %v2341 = vrot.slane %v2339, 4
      %v2342 = vor.u32 %v2341, %v2337
      %v2343 = vrot.slane %v2342, 4
      %v2345 = vshll.u32 %v2005, 16
      %v2347 = vrot.slane %v2345, 5
      %v2348 = vsel %vm260, %v2343, %v2347
      %v2349 = vshrl.u32 %v2005, 16
      %v2351 = vrot.slane %v2349, 4
      %v2352 = vor.u32 %v2351, %v2347
      %v2353 = vrot.slane %v2352, 4
      %v2355 = vshll.u32 %v2006, 16
      %v2357 = vrot.slane %v2355, 5
      %v2358 = vsel %vm260, %v2353, %v2357
      %s2359 = scalar_lea.vmem %s1, 32
      %v2360 = vld [vmem:[%s2359] sm:$0xf]
      %v2361 = vld [vmem:[%s2359 + $0x4] sm:$0xf]
      %v2362 = vunpack.c.l.b16 %v2020
      %v2363 = vunpack.c.l.b16 %v2030
      %v2364 = vunpack.c.l.b16 %v2040
      %v2365 = vunpack.c.l.b16 %v2050
      %v2366 = vunpack.c.l.b16 %v2064
      %v2367 = vunpack.c.l.b16 %v2074
      %v2368 = vunpack.c.l.b16 %v2084
      %v2369 = vunpack.c.l.b16 %v2094
      %v2370 = vunpack.c.l.b16 %v2108
      %v2371 = vunpack.c.l.b16 %v2118
      %v2372 = vunpack.c.l.b16 %v2128
      %v2373 = vunpack.c.l.b16 %v2138
      %v2374 = vunpack.c.l.b16 %v2152
      %v2375 = vunpack.c.l.b16 %v2162
      %v2376 = vunpack.c.l.b16 %v2172
      %v2377 = vunpack.c.l.b16 %v2182
      %v2378 = vunpack.c.l.b16 %v2196
      %v2379 = vunpack.c.l.b16 %v2206
      %v2380 = vunpack.c.l.b16 %v2216
      %v2381 = vunpack.c.l.b16 %v2226
      %v2382 = vunpack.c.l.b16 %v2240
      %v2383 = vunpack.c.l.b16 %v2250
      %v2384 = vunpack.c.l.b16 %v2260
      %v2385 = vunpack.c.l.b16 %v2270
      %v2386 = vunpack.c.l.b16 %v2284
      %v2387 = vunpack.c.l.b16 %v2294
      %v2388 = vunpack.c.l.b16 %v2304
      %v2389 = vunpack.c.l.b16 %v2314
      %v2390 = vunpack.c.l.b16 %v2328
      %v2391 = vunpack.c.l.b16 %v2338
      %v2392 = vunpack.c.l.b16 %v2348
      %v2393 = vunpack.c.l.b16 %v2358
      %v2394 = vpack.c.b16 %v2363, %v2362
      %v2395 = vpack.c.b16 %v2365, %v2364
      %v2396 = vpack.c.b16 %v2367, %v2366
      %v2397 = vpack.c.b16 %v2369, %v2368
      %v2398 = vpack.c.b16 %v2371, %v2370
      %v2399 = vpack.c.b16 %v2373, %v2372
      %v2400 = vpack.c.b16 %v2375, %v2374
      %v2401 = vpack.c.b16 %v2377, %v2376
      %v2402 = vpack.c.b16 %v2379, %v2378
      %v2403 = vpack.c.b16 %v2381, %v2380
      %v2404 = vpack.c.b16 %v2383, %v2382
      %v2405 = vpack.c.b16 %v2385, %v2384
      %v2406 = vpack.c.b16 %v2387, %v2386
      %v2407 = vpack.c.b16 %v2389, %v2388
      %v2408 = vpack.c.b16 %v2391, %v2390
      %v2409 = vpack.c.b16 %v2393, %v2392
      %v2412 = vunpack.c.l.b16 %v2360
      %v2413 = vunpack.c.l.b16 %v2361
      %v2414 = vpack.c.b16 %v2413, %v2412
      %v2417 = vsel %vm670, %v2394, 0
      %v2420 = vsel %vm670, %v2395, 0
      %v2423 = vsel %vm670, %v2396, 0
      %v2426 = vsel %vm670, %v2397, 0
      %v2429 = vsel %vm670, %v2398, 0
      %v2432 = vsel %vm670, %v2399, 0
      %v2435 = vsel %vm670, %v2400, 0
      %v2438 = vsel %vm670, %v2401, 0
      %v2441 = vsel %vm670, %v2402, 0
      %v2444 = vsel %vm670, %v2403, 0
      %v2447 = vsel %vm670, %v2404, 0
      %v2450 = vsel %vm670, %v2405, 0
      %v2453 = vsel %vm670, %v2406, 0
      %v2456 = vsel %vm670, %v2407, 0
      %v2459 = vsel %vm670, %v2408, 0
      %v2462 = vsel %vm670, %v2409, 0
      %2464 = vmatprep.subr.bf16.mxu0 0
      %2465 = vmatpush1.bf16.msra.mxu0 %v2414
      %2466 = vmatprep.subr.bf16.mxu0 0
      %2467 = vmatpush1.bf16.msra.mxu0 0
      %2468 = vmatprep.subr.bf16.mxu0 0
      %2469 = vmatpush1.bf16.msra.mxu0 0
      %2470 = vmatprep.subr.bf16.mxu0 0
      %2471 = vmatpush1.bf16.msra.mxu0 0
      %2472 = vmatprep.subr.bf16.mxu0 0
      %2473 = vmatpush1.bf16.msra.mxu0 0
      %2474 = vmatprep.subr.bf16.mxu0 0
      %2475 = vmatpush1.bf16.msra.mxu0 0
      %2476 = vmatprep.subr.bf16.mxu0 0
      %2477 = vmatpush1.bf16.msra.mxu0 0
      %2478 = vmatprep.subr.bf16.mxu0 0
      %2479 = vmatpush1.bf16.msra.mxu0 0
      %2480 = vmatprep.subr.bf16.mxu0 0
      %2481 = vmatpush1.bf16.msra.mxu0 0
      %2482 = vmatprep.subr.bf16.mxu0 0
      %2483 = vmatpush1.bf16.msra.mxu0 0
      %2484 = vmatprep.subr.bf16.mxu0 0
      %2485 = vmatpush1.bf16.msra.mxu0 0
      %2486 = vmatprep.subr.bf16.mxu0 0
      %2487 = vmatpush1.bf16.msra.mxu0 0
      %2488 = vmatprep.subr.bf16.mxu0 0
      %2489 = vmatpush1.bf16.msra.mxu0 0
      %2490 = vmatprep.subr.bf16.mxu0 0
      %2491 = vmatpush1.bf16.msra.mxu0 0
      %2492 = vmatprep.subr.bf16.mxu0 0
      %2493 = vmatpush1.bf16.msra.mxu0 0
      %2494 = vmatprep.subr.bf16.mxu0 0
      %2495 = vmatpush1.bf16.msra.mxu0 0
      %2496 = vmatprep.mubr.bf16.mxu0 0
      %2497 = vmatmul.mubr.bf16.gmra.mrb[0].mxu0 %v2417
      %v2498 = vpop.f32.mrb[0].mxu0
      %v2499 = vadd.f32 0.0, %v2498
      %v2500 = vpop.f32.mrb[0].mxu0
      %v2501 = vpop.f32.mrb[0].mxu0
      %v2502 = vadd.f32 0.0, %v2501
      %v2503 = vpop.f32.mrb[0].mxu0
      %2504 = vmatprep.mubr.bf16.mxu0 0
      %2505 = vmatmul.mubr.bf16.gmra.mrb[0].mxu0 %v2420
      %v2506 = vpop.f32.mrb[0].mxu0
      %v2507 = vadd.f32 0.0, %v2506
      %v2508 = vpop.f32.mrb[0].mxu0
      %v2509 = vpop.f32.mrb[0].mxu0
      %v2510 = vadd.f32 0.0, %v2509
      %v2511 = vpop.f32.mrb[0].mxu0
      %2512 = vmatprep.mubr.bf16.mxu0 0
      %2513 = vmatmul.mubr.bf16.gmra.mrb[0].mxu0 %v2423
      %v2514 = vpop.f32.mrb[0].mxu0
      %v2515 = vadd.f32 0.0, %v2514
      %v2516 = vpop.f32.mrb[0].mxu0
      %v2517 = vpop.f32.mrb[0].mxu0
      %v2518 = vadd.f32 0.0, %v2517
      %v2519 = vpop.f32.mrb[0].mxu0
      %2520 = vmatprep.mubr.bf16.mxu0 0
      %2521 = vmatmul.mubr.bf16.gmra.mrb[0].mxu0 %v2426
      %v2522 = vpop.f32.mrb[0].mxu0
      %v2523 = vadd.f32 0.0, %v2522
      %v2524 = vpop.f32.mrb[0].mxu0
      %v2525 = vpop.f32.mrb[0].mxu0
      %v2526 = vadd.f32 0.0, %v2525
      %v2527 = vpop.f32.mrb[0].mxu0
      %2528 = vmatprep.mubr.bf16.mxu0 0
      %2529 = vmatmul.mubr.bf16.gmra.mrb[0].mxu0 %v2429
      %v2530 = vpop.f32.mrb[0].mxu0
      %v2531 = vadd.f32 0.0, %v2530
      %v2532 = vpop.f32.mrb[0].mxu0
      %v2533 = vpop.f32.mrb[0].mxu0
      %v2534 = vadd.f32 0.0, %v2533
      %v2535 = vpop.f32.mrb[0].mxu0
      %2536 = vmatprep.mubr.bf16.mxu0 0
      %2537 = vmatmul.mubr.bf16.gmra.mrb[0].mxu0 %v2432
      %v2538 = vpop.f32.mrb[0].mxu0
      %v2539 = vadd.f32 0.0, %v2538
      %v2540 = vpop.f32.mrb[0].mxu0
      %v2541 = vpop.f32.mrb[0].mxu0
      %v2542 = vadd.f32 0.0, %v2541
      %v2543 = vpop.f32.mrb[0].mxu0
      %2544 = vmatprep.mubr.bf16.mxu0 0
      %2545 = vmatmul.mubr.bf16.gmra.mrb[0].mxu0 %v2435
      %v2546 = vpop.f32.mrb[0].mxu0
      %v2547 = vadd.f32 0.0, %v2546
      %v2548 = vpop.f32.mrb[0].mxu0
      %v2549 = vpop.f32.mrb[0].mxu0
      %v2550 = vadd.f32 0.0, %v2549
      %v2551 = vpop.f32.mrb[0].mxu0
      %2552 = vmatprep.mubr.bf16.mxu0 0
      %2553 = vmatmul.mubr.bf16.gmra.mrb[0].mxu0 %v2438
      %v2554 = vpop.f32.mrb[0].mxu0
      %v2555 = vadd.f32 0.0, %v2554
      %v2556 = vpop.f32.mrb[0].mxu0
      %v2557 = vpop.f32.mrb[0].mxu0
      %v2558 = vadd.f32 0.0, %v2557
      %v2559 = vpop.f32.mrb[0].mxu0
      %2560 = vmatprep.mubr.bf16.mxu0 0
      %2561 = vmatmul.mubr.bf16.gmra.mrb[0].mxu0 %v2441
      %v2562 = vpop.f32.mrb[0].mxu0
      %v2563 = vadd.f32 0.0, %v2562
      %v2564 = vpop.f32.mrb[0].mxu0
      %v2565 = vpop.f32.mrb[0].mxu0
      %v2566 = vadd.f32 0.0, %v2565
      %v2567 = vpop.f32.mrb[0].mxu0
      %2568 = vmatprep.mubr.bf16.mxu0 0
      %2569 = vmatmul.mubr.bf16.gmra.mrb[0].mxu0 %v2444
      %v2570 = vpop.f32.mrb[0].mxu0
      %v2571 = vadd.f32 0.0, %v2570
      %v2572 = vpop.f32.mrb[0].mxu0
      %v2573 = vpop.f32.mrb[0].mxu0
      %v2574 = vadd.f32 0.0, %v2573
      %v2575 = vpop.f32.mrb[0].mxu0
      %2576 = vmatprep.mubr.bf16.mxu0 0
      %2577 = vmatmul.mubr.bf16.gmra.mrb[0].mxu0 %v2447
      %v2578 = vpop.f32.mrb[0].mxu0
      %v2579 = vadd.f32 0.0, %v2578
      %v2580 = vpop.f32.mrb[0].mxu0
      %v2581 = vpop.f32.mrb[0].mxu0
      %v2582 = vadd.f32 0.0, %v2581
      %v2583 = vpop.f32.mrb[0].mxu0
      %2584 = vmatprep.mubr.bf16.mxu0 0
      %2585 = vmatmul.mubr.bf16.gmra.mrb[0].mxu0 %v2450
      %v2586 = vpop.f32.mrb[0].mxu0
      %v2587 = vadd.f32 0.0, %v2586
      %v2588 = vpop.f32.mrb[0].mxu0
      %v2589 = vpop.f32.mrb[0].mxu0
      %v2590 = vadd.f32 0.0, %v2589
      %v2591 = vpop.f32.mrb[0].mxu0
      %2592 = vmatprep.mubr.bf16.mxu0 0
      %2593 = vmatmul.mubr.bf16.gmra.mrb[0].mxu0 %v2453
      %v2594 = vpop.f32.mrb[0].mxu0
      %v2595 = vadd.f32 0.0, %v2594
      %v2596 = vpop.f32.mrb[0].mxu0
      %v2597 = vpop.f32.mrb[0].mxu0
      %v2598 = vadd.f32 0.0, %v2597
      %v2599 = vpop.f32.mrb[0].mxu0
      %2600 = vmatprep.mubr.bf16.mxu0 0
      %2601 = vmatmul.mubr.bf16.gmra.mrb[0].mxu0 %v2456
      %v2602 = vpop.f32.mrb[0].mxu0
      %v2603 = vadd.f32 0.0, %v2602
      %v2604 = vpop.f32.mrb[0].mxu0
      %v2605 = vpop.f32.mrb[0].mxu0
      %v2606 = vadd.f32 0.0, %v2605
      %v2607 = vpop.f32.mrb[0].mxu0
      %2608 = vmatprep.mubr.bf16.mxu0 0
      %2609 = vmatmul.mubr.bf16.gmra.mrb[0].mxu0 %v2459
      %v2610 = vpop.f32.mrb[0].mxu0
      %v2611 = vadd.f32 0.0, %v2610
      %v2612 = vpop.f32.mrb[0].mxu0
      %v2613 = vpop.f32.mrb[0].mxu0
      %v2614 = vadd.f32 0.0, %v2613
      %v2615 = vpop.f32.mrb[0].mxu0
      %2616 = vmatprep.mubr.bf16.mxu0 0
      %2617 = vmatmul.mubr.bf16.gmra.mrb[0].mxu0 %v2462
      %v2618 = vpop.f32.mrb[0].mxu0
      %v2619 = vadd.f32 0.0, %v2618
      %v2620 = vpop.f32.mrb[0].mxu0
      %v2621 = vpop.f32.mrb[0].mxu0
      %v2622 = vadd.f32 0.0, %v2621
      %v2623 = vpop.f32.mrb[0].mxu0
      %2624 = vdwg.mxu0
      %v2625 = vadd.f32 %v1935, %v2499
      %v2626 = vadd.f32 %v1936, %v2502
      %v2627 = vadd.f32 %v1937, %v2507
      %v2628 = vadd.f32 %v1938, %v2510
      %v2629 = vadd.f32 %v1939, %v2515
      %v2630 = vadd.f32 %v1940, %v2518
      %v2631 = vadd.f32 %v1941, %v2523
      %v2632 = vadd.f32 %v1942, %v2526
      %v2633 = vadd.f32 %v1943, %v2531
      %v2634 = vadd.f32 %v1944, %v2534
      %v2635 = vadd.f32 %v1945, %v2539
      %v2636 = vadd.f32 %v1946, %v2542
      %v2637 = vadd.f32 %v1947, %v2547
      %v2638 = vadd.f32 %v1948, %v2550
      %v2639 = vadd.f32 %v1949, %v2555
      %v2640 = vadd.f32 %v1950, %v2558
      %v2641 = vadd.f32 %v1951, %v2563
      %v2642 = vadd.f32 %v1952, %v2566
      %v2643 = vadd.f32 %v1953, %v2571
      %v2644 = vadd.f32 %v1954, %v2574
      %v2645 = vadd.f32 %v1955, %v2579
      %v2646 = vadd.f32 %v1956, %v2582
      %v2647 = vadd.f32 %v1957, %v2587
      %v2648 = vadd.f32 %v1958, %v2590
      %v2649 = vadd.f32 %v1959, %v2595
      %v2650 = vadd.f32 %v1960, %v2598
      %v2651 = vadd.f32 %v1961, %v2603
      %v2652 = vadd.f32 %v1962, %v2606
      %v2653 = vadd.f32 %v1963, %v2611
      %v2654 = vadd.f32 %v1964, %v2614
      %v2655 = vadd.f32 %v1965, %v2619
      %v2656 = vadd.f32 %v1966, %v2622
      %v2657 = vld [vmem:[%s1604] sm:$0xe]
      %v2658 = vld [vmem:[%s1604 + $0x14] sm:$0xe]
      %v2659 = vld [vmem:[%s1604 + $0x28] sm:$0xe]
      %v2660 = vld [vmem:[%s1604 + $0x3c] sm:$0xe]
      %v2661 = vld [vmem:[%s1604 + $0x50] sm:$0xe]
      %v2662 = vld [vmem:[%s1604 + $0x64] sm:$0xe]
      %v2663 = vld [vmem:[%s1604 + $0x78] sm:$0xe]
      %v2664 = vld [vmem:[%s1604 + $0x8c] sm:$0xe]
      %v2705 = vrot.slane %v2657, 5
      %v2706 = vrot.slane %v2705, 4
      %v2707 = vrot.slane %v1968, 5
      %v2708 = vsel %vm1201, %v2706, %v2707
      %v2709 = vrot.slane %v2707, 4
      %v2710 = vrot.slane %v1969, 5
      %v2711 = vsel %vm1201, %v2709, %v2710
      %v2712 = vrot.slane %v2710, 4
      %v2713 = vrot.slane %v1970, 5
      %v2714 = vsel %vm1201, %v2712, %v2713
      %v2715 = vrot.slane %v2713, 4
      %v2716 = vrot.slane %v1971, 5
      %v2717 = vsel %vm1201, %v2715, %v2716
      %v2718 = vrot.slane %v2658, 5
      %v2719 = vrot.slane %v2718, 4
      %v2720 = vrot.slane %v1973, 5
      %v2721 = vsel %vm1201, %v2719, %v2720
      %v2722 = vrot.slane %v2720, 4
      %v2723 = vrot.slane %v1974, 5
      %v2724 = vsel %vm1201, %v2722, %v2723
      %v2725 = vrot.slane %v2723, 4
      %v2726 = vrot.slane %v1975, 5
      %v2727 = vsel %vm1201, %v2725, %v2726
      %v2728 = vrot.slane %v2726, 4
      %v2729 = vrot.slane %v1976, 5
      %v2730 = vsel %vm1201, %v2728, %v2729
      %v2731 = vrot.slane %v2659, 5
      %v2732 = vrot.slane %v2731, 4
      %v2733 = vrot.slane %v1978, 5
      %v2734 = vsel %vm1201, %v2732, %v2733
      %v2735 = vrot.slane %v2733, 4
      %v2736 = vrot.slane %v1979, 5
      %v2737 = vsel %vm1201, %v2735, %v2736
      %v2738 = vrot.slane %v2736, 4
      %v2739 = vrot.slane %v1980, 5
      %v2740 = vsel %vm1201, %v2738, %v2739
      %v2741 = vrot.slane %v2739, 4
      %v2742 = vrot.slane %v1981, 5
      %v2743 = vsel %vm1201, %v2741, %v2742
      %v2744 = vrot.slane %v2660, 5
      %v2745 = vrot.slane %v2744, 4
      %v2746 = vrot.slane %v1983, 5
      %v2747 = vsel %vm1201, %v2745, %v2746
      %v2748 = vrot.slane %v2746, 4
      %v2749 = vrot.slane %v1984, 5
      %v2750 = vsel %vm1201, %v2748, %v2749
      %v2751 = vrot.slane %v2749, 4
      %v2752 = vrot.slane %v1985, 5
      %v2753 = vsel %vm1201, %v2751, %v2752
      %v2754 = vrot.slane %v2752, 4
      %v2755 = vrot.slane %v1986, 5
      %v2756 = vsel %vm1201, %v2754, %v2755
      %v2757 = vrot.slane %v2661, 5
      %v2758 = vrot.slane %v2757, 4
      %v2759 = vrot.slane %v1988, 5
      %v2760 = vsel %vm1201, %v2758, %v2759
      %v2761 = vrot.slane %v2759, 4
      %v2762 = vrot.slane %v1989, 5
      %v2763 = vsel %vm1201, %v2761, %v2762
      %v2764 = vrot.slane %v2762, 4
      %v2765 = vrot.slane %v1990, 5
      %v2766 = vsel %vm1201, %v2764, %v2765
      %v2767 = vrot.slane %v2765, 4
      %v2768 = vrot.slane %v1991, 5
      %v2769 = vsel %vm1201, %v2767, %v2768
      %v2770 = vrot.slane %v2662, 5
      %v2771 = vrot.slane %v2770, 4
      %v2772 = vrot.slane %v1993, 5
      %v2773 = vsel %vm1201, %v2771, %v2772
      %v2774 = vrot.slane %v2772, 4
      %v2775 = vrot.slane %v1994, 5
      %v2776 = vsel %vm1201, %v2774, %v2775
      %v2777 = vrot.slane %v2775, 4
      %v2778 = vrot.slane %v1995, 5
      %v2779 = vsel %vm1201, %v2777, %v2778
      %v2780 = vrot.slane %v2778, 4
      %v2781 = vrot.slane %v1996, 5
      %v2782 = vsel %vm1201, %v2780, %v2781
      %v2783 = vrot.slane %v2663, 5
      %v2784 = vrot.slane %v2783, 4
      %v2785 = vrot.slane %v1998, 5
      %v2786 = vsel %vm1201, %v2784, %v2785
      %v2787 = vrot.slane %v2785, 4
      %v2788 = vrot.slane %v1999, 5
      %v2789 = vsel %vm1201, %v2787, %v2788
      %v2790 = vrot.slane %v2788, 4
      %v2791 = vrot.slane %v2000, 5
      %v2792 = vsel %vm1201, %v2790, %v2791
      %v2793 = vrot.slane %v2791, 4
      %v2794 = vrot.slane %v2001, 5
      %v2795 = vsel %vm1201, %v2793, %v2794
      %v2796 = vrot.slane %v2664, 5
      %v2797 = vrot.slane %v2796, 4
      %v2798 = vrot.slane %v2003, 5
      %v2799 = vsel %vm1201, %v2797, %v2798
      %v2800 = vrot.slane %v2798, 4
      %v2801 = vrot.slane %v2004, 5
      %v2802 = vsel %vm1201, %v2800, %v2801
      %v2803 = vrot.slane %v2801, 4
      %v2804 = vrot.slane %v2005, 5
      %v2805 = vsel %vm1201, %v2803, %v2804
      %v2806 = vrot.slane %v2804, 4
      %v2807 = vrot.slane %v2006, 5
      %v2808 = vsel %vm1201, %v2806, %v2807
      %s2809 = scalar_lea.vmem %s1, 40
      %v2810 = vld [vmem:[%s2809] sm:$0xf]
      %v2811 = vld [vmem:[%s2809 + $0x4] sm:$0xf]
      %v2812 = vunpack.c.l.b16 %v2708
      %v2813 = vunpack.c.l.b16 %v2711
      %v2814 = vunpack.c.l.b16 %v2714
      %v2815 = vunpack.c.l.b16 %v2717
      %v2816 = vunpack.c.l.b16 %v2721
      %v2817 = vunpack.c.l.b16 %v2724
      %v2818 = vunpack.c.l.b16 %v2727
      %v2819 = vunpack.c.l.b16 %v2730
      %v2820 = vunpack.c.l.b16 %v2734
      %v2821 = vunpack.c.l.b16 %v2737
      %v2822 = vunpack.c.l.b16 %v2740
      %v2823 = vunpack.c.l.b16 %v2743
      %v2824 = vunpack.c.l.b16 %v2747
      %v2825 = vunpack.c.l.b16 %v2750
      %v2826 = vunpack.c.l.b16 %v2753
      %v2827 = vunpack.c.l.b16 %v2756
      %v2828 = vunpack.c.l.b16 %v2760
      %v2829 = vunpack.c.l.b16 %v2763
      %v2830 = vunpack.c.l.b16 %v2766
      %v2831 = vunpack.c.l.b16 %v2769
      %v2832 = vunpack.c.l.b16 %v2773
      %v2833 = vunpack.c.l.b16 %v2776
      %v2834 = vunpack.c.l.b16 %v2779
      %v2835 = vunpack.c.l.b16 %v2782
      %v2836 = vunpack.c.l.b16 %v2786
      %v2837 = vunpack.c.l.b16 %v2789
      %v2838 = vunpack.c.l.b16 %v2792
      %v2839 = vunpack.c.l.b16 %v2795
      %v2840 = vunpack.c.l.b16 %v2799
      %v2841 = vunpack.c.l.b16 %v2802
      %v2842 = vunpack.c.l.b16 %v2805
      %v2843 = vunpack.c.l.b16 %v2808
      %v2844 = vpack.c.b16 %v2813, %v2812
      %v2845 = vpack.c.b16 %v2815, %v2814
      %v2846 = vpack.c.b16 %v2817, %v2816
      %v2847 = vpack.c.b16 %v2819, %v2818
      %v2848 = vpack.c.b16 %v2821, %v2820
      %v2849 = vpack.c.b16 %v2823, %v2822
      %v2850 = vpack.c.b16 %v2825, %v2824
      %v2851 = vpack.c.b16 %v2827, %v2826
      %v2852 = vpack.c.b16 %v2829, %v2828
      %v2853 = vpack.c.b16 %v2831, %v2830
      %v2854 = vpack.c.b16 %v2833, %v2832
      %v2855 = vpack.c.b16 %v2835, %v2834
      %v2856 = vpack.c.b16 %v2837, %v2836
      %v2857 = vpack.c.b16 %v2839, %v2838
      %v2858 = vpack.c.b16 %v2841, %v2840
      %v2859 = vpack.c.b16 %v2843, %v2842
      %v2862 = vunpack.c.l.b16 %v2810
      %v2863 = vunpack.c.l.b16 %v2811
      %v2864 = vpack.c.b16 %v2863, %v2862
      %v2867 = vsel %vm670, %v2844, 0
      %v2870 = vsel %vm670, %v2845, 0
      %v2873 = vsel %vm670, %v2846, 0
      %v2876 = vsel %vm670, %v2847, 0
      %v2879 = vsel %vm670, %v2848, 0
      %v2882 = vsel %vm670, %v2849, 0
      %v2885 = vsel %vm670, %v2850, 0
      %v2888 = vsel %vm670, %v2851, 0
      %v2891 = vsel %vm670, %v2852, 0
      %v2894 = vsel %vm670, %v2853, 0
      %v2897 = vsel %vm670, %v2854, 0
      %v2900 = vsel %vm670, %v2855, 0
      %v2903 = vsel %vm670, %v2856, 0
      %v2906 = vsel %vm670, %v2857, 0
      %v2909 = vsel %vm670, %v2858, 0
      %v2912 = vsel %vm670, %v2859, 0
      %2914 = vmatprep.subr.bf16.mxu0 0
      %2915 = vmatpush1.bf16.msra.mxu0 %v2864
      %2916 = vmatprep.subr.bf16.mxu0 0
      %2917 = vmatpush1.bf16.msra.mxu0 0
      %2918 = vmatprep.subr.bf16.mxu0 0
      %2919 = vmatpush1.bf16.msra.mxu0 0
      %2920 = vmatprep.subr.bf16.mxu0 0
      %2921 = vmatpush1.bf16.msra.mxu0 0
      %2922 = vmatprep.subr.bf16.mxu0 0
      %2923 = vmatpush1.bf16.msra.mxu0 0
      %2924 = vmatprep.subr.bf16.mxu0 0
      %2925 = vmatpush1.bf16.msra.mxu0 0
      %2926 = vmatprep.subr.bf16.mxu0 0
      %2927 = vmatpush1.bf16.msra.mxu0 0
      %2928 = vmatprep.subr.bf16.mxu0 0
      %2929 = vmatpush1.bf16.msra.mxu0 0
      %2930 = vmatprep.subr.bf16.mxu0 0
      %2931 = vmatpush1.bf16.msra.mxu0 0
      %2932 = vmatprep.subr.bf16.mxu0 0
      %2933 = vmatpush1.bf16.msra.mxu0 0
      %2934 = vmatprep.subr.bf16.mxu0 0
      %2935 = vmatpush1.bf16.msra.mxu0 0
      %2936 = vmatprep.subr.bf16.mxu0 0
      %2937 = vmatpush1.bf16.msra.mxu0 0
      %2938 = vmatprep.subr.bf16.mxu0 0
      %2939 = vmatpush1.bf16.msra.mxu0 0
      %2940 = vmatprep.subr.bf16.mxu0 0
      %2941 = vmatpush1.bf16.msra.mxu0 0
      %2942 = vmatprep.subr.bf16.mxu0 0
      %2943 = vmatpush1.bf16.msra.mxu0 0
      %2944 = vmatprep.subr.bf16.mxu0 0
      %2945 = vmatpush1.bf16.msra.mxu0 0
      %2946 = vmatprep.mubr.bf16.mxu0 0
      %2947 = vmatmul.mubr.bf16.gmra.mrb[0].mxu0 %v2867
      %v2948 = vpop.f32.mrb[0].mxu0
      %v2949 = vadd.f32 0.0, %v2948
      %v2950 = vpop.f32.mrb[0].mxu0
      %v2951 = vpop.f32.mrb[0].mxu0
      %v2952 = vadd.f32 0.0, %v2951
      %v2953 = vpop.f32.mrb[0].mxu0
      %2954 = vmatprep.mubr.bf16.mxu0 0
      %2955 = vmatmul.mubr.bf16.gmra.mrb[0].mxu0 %v2870
      %v2956 = vpop.f32.mrb[0].mxu0
      %v2957 = vadd.f32 0.0, %v2956
      %v2958 = vpop.f32.mrb[0].mxu0
      %v2959 = vpop.f32.mrb[0].mxu0
      %v2960 = vadd.f32 0.0, %v2959
      %v2961 = vpop.f32.mrb[0].mxu0
      %2962 = vmatprep.mubr.bf16.mxu0 0
      %2963 = vmatmul.mubr.bf16.gmra.mrb[0].mxu0 %v2873
      %v2964 = vpop.f32.mrb[0].mxu0
      %v2965 = vadd.f32 0.0, %v2964
      %v2966 = vpop.f32.mrb[0].mxu0
      %v2967 = vpop.f32.mrb[0].mxu0
      %v2968 = vadd.f32 0.0, %v2967
      %v2969 = vpop.f32.mrb[0].mxu0
      %2970 = vmatprep.mubr.bf16.mxu0 0
      %2971 = vmatmul.mubr.bf16.gmra.mrb[0].mxu0 %v2876
      %v2972 = vpop.f32.mrb[0].mxu0
      %v2973 = vadd.f32 0.0, %v2972
      %v2974 = vpop.f32.mrb[0].mxu0
      %v2975 = vpop.f32.mrb[0].mxu0
      %v2976 = vadd.f32 0.0, %v2975
      %v2977 = vpop.f32.mrb[0].mxu0
      %2978 = vmatprep.mubr.bf16.mxu0 0
      %2979 = vmatmul.mubr.bf16.gmra.mrb[0].mxu0 %v2879
      %v2980 = vpop.f32.mrb[0].mxu0
      %v2981 = vadd.f32 0.0, %v2980
      %v2982 = vpop.f32.mrb[0].mxu0
      %v2983 = vpop.f32.mrb[0].mxu0
      %v2984 = vadd.f32 0.0, %v2983
      %v2985 = vpop.f32.mrb[0].mxu0
      %2986 = vmatprep.mubr.bf16.mxu0 0
      %2987 = vmatmul.mubr.bf16.gmra.mrb[0].mxu0 %v2882
      %v2988 = vpop.f32.mrb[0].mxu0
      %v2989 = vadd.f32 0.0, %v2988
      %v2990 = vpop.f32.mrb[0].mxu0
      %v2991 = vpop.f32.mrb[0].mxu0
      %v2992 = vadd.f32 0.0, %v2991
      %v2993 = vpop.f32.mrb[0].mxu0
      %2994 = vmatprep.mubr.bf16.mxu0 0
      %2995 = vmatmul.mubr.bf16.gmra.mrb[0].mxu0 %v2885
      %v2996 = vpop.f32.mrb[0].mxu0
      %v2997 = vadd.f32 0.0, %v2996
      %v2998 = vpop.f32.mrb[0].mxu0
      %v2999 = vpop.f32.mrb[0].mxu0
      %v3000 = vadd.f32 0.0, %v2999
      %v3001 = vpop.f32.mrb[0].mxu0
      %3002 = vmatprep.mubr.bf16.mxu0 0
      %3003 = vmatmul.mubr.bf16.gmra.mrb[0].mxu0 %v2888
      %v3004 = vpop.f32.mrb[0].mxu0
      %v3005 = vadd.f32 0.0, %v3004
      %v3006 = vpop.f32.mrb[0].mxu0
      %v3007 = vpop.f32.mrb[0].mxu0
      %v3008 = vadd.f32 0.0, %v3007
      %v3009 = vpop.f32.mrb[0].mxu0
      %3010 = vmatprep.mubr.bf16.mxu0 0
      %3011 = vmatmul.mubr.bf16.gmra.mrb[0].mxu0 %v2891
      %v3012 = vpop.f32.mrb[0].mxu0
      %v3013 = vadd.f32 0.0, %v3012
      %v3014 = vpop.f32.mrb[0].mxu0
      %v3015 = vpop.f32.mrb[0].mxu0
      %v3016 = vadd.f32 0.0, %v3015
      %v3017 = vpop.f32.mrb[0].mxu0
      %3018 = vmatprep.mubr.bf16.mxu0 0
      %3019 = vmatmul.mubr.bf16.gmra.mrb[0].mxu0 %v2894
      %v3020 = vpop.f32.mrb[0].mxu0
      %v3021 = vadd.f32 0.0, %v3020
      %v3022 = vpop.f32.mrb[0].mxu0
      %v3023 = vpop.f32.mrb[0].mxu0
      %v3024 = vadd.f32 0.0, %v3023
      %v3025 = vpop.f32.mrb[0].mxu0
      %3026 = vmatprep.mubr.bf16.mxu0 0
      %3027 = vmatmul.mubr.bf16.gmra.mrb[0].mxu0 %v2897
      %v3028 = vpop.f32.mrb[0].mxu0
      %v3029 = vadd.f32 0.0, %v3028
      %v3030 = vpop.f32.mrb[0].mxu0
      %v3031 = vpop.f32.mrb[0].mxu0
      %v3032 = vadd.f32 0.0, %v3031
      %v3033 = vpop.f32.mrb[0].mxu0
      %3034 = vmatprep.mubr.bf16.mxu0 0
      %3035 = vmatmul.mubr.bf16.gmra.mrb[0].mxu0 %v2900
      %v3036 = vpop.f32.mrb[0].mxu0
      %v3037 = vadd.f32 0.0, %v3036
      %v3038 = vpop.f32.mrb[0].mxu0
      %v3039 = vpop.f32.mrb[0].mxu0
      %v3040 = vadd.f32 0.0, %v3039
      %v3041 = vpop.f32.mrb[0].mxu0
      %3042 = vmatprep.mubr.bf16.mxu0 0
      %3043 = vmatmul.mubr.bf16.gmra.mrb[0].mxu0 %v2903
      %v3044 = vpop.f32.mrb[0].mxu0
      %v3045 = vadd.f32 0.0, %v3044
      %v3046 = vpop.f32.mrb[0].mxu0
      %v3047 = vpop.f32.mrb[0].mxu0
      %v3048 = vadd.f32 0.0, %v3047
      %v3049 = vpop.f32.mrb[0].mxu0
      %3050 = vmatprep.mubr.bf16.mxu0 0
      %3051 = vmatmul.mubr.bf16.gmra.mrb[0].mxu0 %v2906
      %v3052 = vpop.f32.mrb[0].mxu0
      %v3053 = vadd.f32 0.0, %v3052
      %v3054 = vpop.f32.mrb[0].mxu0
      %v3055 = vpop.f32.mrb[0].mxu0
      %v3056 = vadd.f32 0.0, %v3055
      %v3057 = vpop.f32.mrb[0].mxu0
      %3058 = vmatprep.mubr.bf16.mxu0 0
      %3059 = vmatmul.mubr.bf16.gmra.mrb[0].mxu0 %v2909
      %v3060 = vpop.f32.mrb[0].mxu0
      %v3061 = vadd.f32 0.0, %v3060
      %v3062 = vpop.f32.mrb[0].mxu0
      %v3063 = vpop.f32.mrb[0].mxu0
      %v3064 = vadd.f32 0.0, %v3063
      %v3065 = vpop.f32.mrb[0].mxu0
      %3066 = vmatprep.mubr.bf16.mxu0 0
      %3067 = vmatmul.mubr.bf16.gmra.mrb[0].mxu0 %v2912
      %v3068 = vpop.f32.mrb[0].mxu0
      %v3069 = vadd.f32 0.0, %v3068
      %v3070 = vpop.f32.mrb[0].mxu0
      %v3071 = vpop.f32.mrb[0].mxu0
      %v3072 = vadd.f32 0.0, %v3071
      %v3073 = vpop.f32.mrb[0].mxu0
      %3074 = vdwg.mxu0
      %v3075 = vadd.f32 %v2625, %v2949
      %v3076 = vadd.f32 %v2626, %v2952
      %v3077 = vadd.f32 %v2627, %v2957
      %v3078 = vadd.f32 %v2628, %v2960
      %v3079 = vadd.f32 %v2629, %v2965
      %v3080 = vadd.f32 %v2630, %v2968
      %v3081 = vadd.f32 %v2631, %v2973
      %v3082 = vadd.f32 %v2632, %v2976
      %v3083 = vadd.f32 %v2633, %v2981
      %v3084 = vadd.f32 %v2634, %v2984
      %v3085 = vadd.f32 %v2635, %v2989
      %v3086 = vadd.f32 %v2636, %v2992
      %v3087 = vadd.f32 %v2637, %v2997
      %v3088 = vadd.f32 %v2638, %v3000
      %v3089 = vadd.f32 %v2639, %v3005
      %v3090 = vadd.f32 %v2640, %v3008
      %v3091 = vadd.f32 %v2641, %v3013
      %v3092 = vadd.f32 %v2642, %v3016
      %v3093 = vadd.f32 %v2643, %v3021
      %v3094 = vadd.f32 %v2644, %v3024
      %v3095 = vadd.f32 %v2645, %v3029
      %v3096 = vadd.f32 %v2646, %v3032
      %v3097 = vadd.f32 %v2647, %v3037
      %v3098 = vadd.f32 %v2648, %v3040
      %v3099 = vadd.f32 %v2649, %v3045
      %v3100 = vadd.f32 %v2650, %v3048
      %v3101 = vadd.f32 %v2651, %v3053
      %v3102 = vadd.f32 %v2652, %v3056
      %v3103 = vadd.f32 %v2653, %v3061
      %v3104 = vadd.f32 %v2654, %v3064
      %v3105 = vadd.f32 %v2655, %v3069
      %v3106 = vadd.f32 %v2656, %v3072
      %s3107 = scalar_lea.vmem %s203, 40
      %v3108 = vld [vmem:[%s3107] sm:$0xf]
      %v3109 = vld [vmem:[%s3107 + $0x4] sm:$0xf]
      %v3110 = vld [vmem:[%s3107 + $0x8] sm:$0xf]
      %v3111 = vld [vmem:[%s3107 + $0xc] sm:$0xf]
      %v3112 = vld [vmem:[%s3107 + $0x14] sm:$0xf]
      %v3113 = vld [vmem:[%s3107 + $0x18] sm:$0xf]
      %v3114 = vld [vmem:[%s3107 + $0x1c] sm:$0xf]
      %v3115 = vld [vmem:[%s3107 + $0x20] sm:$0xf]
      %v3116 = vld [vmem:[%s3107 + $0x28] sm:$0xf]
      %v3117 = vld [vmem:[%s3107 + $0x2c] sm:$0xf]
      %v3118 = vld [vmem:[%s3107 + $0x30] sm:$0xf]
      %v3119 = vld [vmem:[%s3107 + $0x34] sm:$0xf]
      %v3120 = vld [vmem:[%s3107 + $0x3c] sm:$0xf]
      %v3121 = vld [vmem:[%s3107 + $0x40] sm:$0xf]
      %v3122 = vld [vmem:[%s3107 + $0x44] sm:$0xf]
      %v3123 = vld [vmem:[%s3107 + $0x48] sm:$0xf]
      %v3124 = vld [vmem:[%s3107 + $0x50] sm:$0xf]
      %v3125 = vld [vmem:[%s3107 + $0x54] sm:$0xf]
      %v3126 = vld [vmem:[%s3107 + $0x58] sm:$0xf]
      %v3127 = vld [vmem:[%s3107 + $0x5c] sm:$0xf]
      %v3128 = vld [vmem:[%s3107 + $0x64] sm:$0xf]
      %v3129 = vld [vmem:[%s3107 + $0x68] sm:$0xf]
      %v3130 = vld [vmem:[%s3107 + $0x6c] sm:$0xf]
      %v3131 = vld [vmem:[%s3107 + $0x70] sm:$0xf]
      %v3132 = vld [vmem:[%s3107 + $0x78] sm:$0xf]
      %v3133 = vld [vmem:[%s3107 + $0x7c] sm:$0xf]
      %v3134 = vld [vmem:[%s3107 + $0x80] sm:$0xf]
      %v3135 = vld [vmem:[%s3107 + $0x84] sm:$0xf]
      %v3136 = vld [vmem:[%s3107 + $0x8c] sm:$0xf]
      %v3137 = vld [vmem:[%s3107 + $0x90] sm:$0xf]
      %v3138 = vld [vmem:[%s3107 + $0x94] sm:$0xf]
      %v3139 = vld [vmem:[%s3107 + $0x98] sm:$0xf]
      %s3140 = scalar_lea.vmem %s1, 48
      %v3141 = vld [vmem:[%s3140] sm:$0xf]
      %v3142 = vld [vmem:[%s3140 + $0x4] sm:$0xf]
      %v3175 = vunpack.c.l.b16 %v3108
      %v3176 = vunpack.c.l.b16 %v3109
      %v3177 = vunpack.c.l.b16 %v3110
      %v3178 = vunpack.c.l.b16 %v3111
      %v3179 = vunpack.c.l.b16 %v3112
      %v3180 = vunpack.c.l.b16 %v3113
      %v3181 = vunpack.c.l.b16 %v3114
      %v3182 = vunpack.c.l.b16 %v3115
      %v3183 = vunpack.c.l.b16 %v3116
      %v3184 = vunpack.c.l.b16 %v3117
      %v3185 = vunpack.c.l.b16 %v3118
      %v3186 = vunpack.c.l.b16 %v3119
      %v3187 = vunpack.c.l.b16 %v3120
      %v3188 = vunpack.c.l.b16 %v3121
      %v3189 = vunpack.c.l.b16 %v3122
      %v3190 = vunpack.c.l.b16 %v3123
      %v3191 = vunpack.c.l.b16 %v3124
      %v3192 = vunpack.c.l.b16 %v3125
      %v3193 = vunpack.c.l.b16 %v3126
      %v3194 = vunpack.c.l.b16 %v3127
      %v3195 = vunpack.c.l.b16 %v3128
      %v3196 = vunpack.c.l.b16 %v3129
      %v3197 = vunpack.c.l.b16 %v3130
      %v3198 = vunpack.c.l.b16 %v3131
      %v3199 = vunpack.c.l.b16 %v3132
      %v3200 = vunpack.c.l.b16 %v3133
      %v3201 = vunpack.c.l.b16 %v3134
      %v3202 = vunpack.c.l.b16 %v3135
      %v3203 = vunpack.c.l.b16 %v3136
      %v3204 = vunpack.c.l.b16 %v3137
      %v3205 = vunpack.c.l.b16 %v3138
      %v3206 = vunpack.c.l.b16 %v3139
      %v3207 = vpack.c.b16 %v3176, %v3175
      %v3208 = vpack.c.b16 %v3178, %v3177
      %v3209 = vpack.c.b16 %v3180, %v3179
      %v3210 = vpack.c.b16 %v3182, %v3181
      %v3211 = vpack.c.b16 %v3184, %v3183
      %v3212 = vpack.c.b16 %v3186, %v3185
      %v3213 = vpack.c.b16 %v3188, %v3187
      %v3214 = vpack.c.b16 %v3190, %v3189
      %v3215 = vpack.c.b16 %v3192, %v3191
      %v3216 = vpack.c.b16 %v3194, %v3193
      %v3217 = vpack.c.b16 %v3196, %v3195
      %v3218 = vpack.c.b16 %v3198, %v3197
      %v3219 = vpack.c.b16 %v3200, %v3199
      %v3220 = vpack.c.b16 %v3202, %v3201
      %v3221 = vpack.c.b16 %v3204, %v3203
      %v3222 = vpack.c.b16 %v3206, %v3205
      %v3225 = vunpack.c.l.b16 %v3141
      %v3226 = vunpack.c.l.b16 %v3142
      %v3227 = vpack.c.b16 %v3226, %v3225
      %v3230 = vsel %vm670, %v3207, 0
      %v3233 = vsel %vm670, %v3208, 0
      %v3236 = vsel %vm670, %v3209, 0
      %v3239 = vsel %vm670, %v3210, 0
      %v3242 = vsel %vm670, %v3211, 0
      %v3245 = vsel %vm670, %v3212, 0
      %v3248 = vsel %vm670, %v3213, 0
      %v3251 = vsel %vm670, %v3214, 0
      %v3254 = vsel %vm670, %v3215, 0
      %v3257 = vsel %vm670, %v3216, 0
      %v3260 = vsel %vm670, %v3217, 0
      %v3263 = vsel %vm670, %v3218, 0
      %v3266 = vsel %vm670, %v3219, 0
      %v3269 = vsel %vm670, %v3220, 0
      %v3272 = vsel %vm670, %v3221, 0
      %v3275 = vsel %vm670, %v3222, 0
      %3277 = vmatprep.subr.bf16.mxu0 0
      %3278 = vmatpush1.bf16.msra.mxu0 %v3227
      %3279 = vmatprep.subr.bf16.mxu0 0
      %3280 = vmatpush1.bf16.msra.mxu0 0
      %3281 = vmatprep.subr.bf16.mxu0 0
      %3282 = vmatpush1.bf16.msra.mxu0 0
      %3283 = vmatprep.subr.bf16.mxu0 0
      %3284 = vmatpush1.bf16.msra.mxu0 0
      %3285 = vmatprep.subr.bf16.mxu0 0
      %3286 = vmatpush1.bf16.msra.mxu0 0
      %3287 = vmatprep.subr.bf16.mxu0 0
      %3288 = vmatpush1.bf16.msra.mxu0 0
      %3289 = vmatprep.subr.bf16.mxu0 0
      %3290 = vmatpush1.bf16.msra.mxu0 0
      %3291 = vmatprep.subr.bf16.mxu0 0
      %3292 = vmatpush1.bf16.msra.mxu0 0
      %3293 = vmatprep.subr.bf16.mxu0 0
      %3294 = vmatpush1.bf16.msra.mxu0 0
      %3295 = vmatprep.subr.bf16.mxu0 0
      %3296 = vmatpush1.bf16.msra.mxu0 0
      %3297 = vmatprep.subr.bf16.mxu0 0
      %3298 = vmatpush1.bf16.msra.mxu0 0
      %3299 = vmatprep.subr.bf16.mxu0 0
      %3300 = vmatpush1.bf16.msra.mxu0 0
      %3301 = vmatprep.subr.bf16.mxu0 0
      %3302 = vmatpush1.bf16.msra.mxu0 0
      %3303 = vmatprep.subr.bf16.mxu0 0
      %3304 = vmatpush1.bf16.msra.mxu0 0
      %3305 = vmatprep.subr.bf16.mxu0 0
      %3306 = vmatpush1.bf16.msra.mxu0 0
      %3307 = vmatprep.subr.bf16.mxu0 0
      %3308 = vmatpush1.bf16.msra.mxu0 0
      %3309 = vmatprep.mubr.bf16.mxu0 0
      %3310 = vmatmul.mubr.bf16.gmra.mrb[0].mxu0 %v3230
      %v3311 = vpop.f32.mrb[0].mxu0
      %v3312 = vadd.f32 0.0, %v3311
      %v3313 = vpop.f32.mrb[0].mxu0
      %v3314 = vpop.f32.mrb[0].mxu0
      %v3315 = vadd.f32 0.0, %v3314
      %v3316 = vpop.f32.mrb[0].mxu0
      %3317 = vmatprep.mubr.bf16.mxu0 0
      %3318 = vmatmul.mubr.bf16.gmra.mrb[0].mxu0 %v3233
      %v3319 = vpop.f32.mrb[0].mxu0
      %v3320 = vadd.f32 0.0, %v3319
      %v3321 = vpop.f32.mrb[0].mxu0
      %v3322 = vpop.f32.mrb[0].mxu0
      %v3323 = vadd.f32 0.0, %v3322
      %v3324 = vpop.f32.mrb[0].mxu0
      %3325 = vmatprep.mubr.bf16.mxu0 0
      %3326 = vmatmul.mubr.bf16.gmra.mrb[0].mxu0 %v3236
      %v3327 = vpop.f32.mrb[0].mxu0
      %v3328 = vadd.f32 0.0, %v3327
      %v3329 = vpop.f32.mrb[0].mxu0
      %v3330 = vpop.f32.mrb[0].mxu0
      %v3331 = vadd.f32 0.0, %v3330
      %v3332 = vpop.f32.mrb[0].mxu0
      %3333 = vmatprep.mubr.bf16.mxu0 0
      %3334 = vmatmul.mubr.bf16.gmra.mrb[0].mxu0 %v3239
      %v3335 = vpop.f32.mrb[0].mxu0
      %v3336 = vadd.f32 0.0, %v3335
      %v3337 = vpop.f32.mrb[0].mxu0
      %v3338 = vpop.f32.mrb[0].mxu0
      %v3339 = vadd.f32 0.0, %v3338
      %v3340 = vpop.f32.mrb[0].mxu0
      %3341 = vmatprep.mubr.bf16.mxu0 0
      %3342 = vmatmul.mubr.bf16.gmra.mrb[0].mxu0 %v3242
      %v3343 = vpop.f32.mrb[0].mxu0
      %v3344 = vadd.f32 0.0, %v3343
      %v3345 = vpop.f32.mrb[0].mxu0
      %v3346 = vpop.f32.mrb[0].mxu0
      %v3347 = vadd.f32 0.0, %v3346
      %v3348 = vpop.f32.mrb[0].mxu0
      %3349 = vmatprep.mubr.bf16.mxu0 0
      %3350 = vmatmul.mubr.bf16.gmra.mrb[0].mxu0 %v3245
      %v3351 = vpop.f32.mrb[0].mxu0
      %v3352 = vadd.f32 0.0, %v3351
      %v3353 = vpop.f32.mrb[0].mxu0
      %v3354 = vpop.f32.mrb[0].mxu0
      %v3355 = vadd.f32 0.0, %v3354
      %v3356 = vpop.f32.mrb[0].mxu0
      %3357 = vmatprep.mubr.bf16.mxu0 0
      %3358 = vmatmul.mubr.bf16.gmra.mrb[0].mxu0 %v3248
      %v3359 = vpop.f32.mrb[0].mxu0
      %v3360 = vadd.f32 0.0, %v3359
      %v3361 = vpop.f32.mrb[0].mxu0
      %v3362 = vpop.f32.mrb[0].mxu0
      %v3363 = vadd.f32 0.0, %v3362
      %v3364 = vpop.f32.mrb[0].mxu0
      %3365 = vmatprep.mubr.bf16.mxu0 0
      %3366 = vmatmul.mubr.bf16.gmra.mrb[0].mxu0 %v3251
      %v3367 = vpop.f32.mrb[0].mxu0
      %v3368 = vadd.f32 0.0, %v3367
      %v3369 = vpop.f32.mrb[0].mxu0
      %v3370 = vpop.f32.mrb[0].mxu0
      %v3371 = vadd.f32 0.0, %v3370
      %v3372 = vpop.f32.mrb[0].mxu0
      %3373 = vmatprep.mubr.bf16.mxu0 0
      %3374 = vmatmul.mubr.bf16.gmra.mrb[0].mxu0 %v3254
      %v3375 = vpop.f32.mrb[0].mxu0
      %v3376 = vadd.f32 0.0, %v3375
      %v3377 = vpop.f32.mrb[0].mxu0
      %v3378 = vpop.f32.mrb[0].mxu0
      %v3379 = vadd.f32 0.0, %v3378
      %v3380 = vpop.f32.mrb[0].mxu0
      %3381 = vmatprep.mubr.bf16.mxu0 0
      %3382 = vmatmul.mubr.bf16.gmra.mrb[0].mxu0 %v3257
      %v3383 = vpop.f32.mrb[0].mxu0
      %v3384 = vadd.f32 0.0, %v3383
      %v3385 = vpop.f32.mrb[0].mxu0
      %v3386 = vpop.f32.mrb[0].mxu0
      %v3387 = vadd.f32 0.0, %v3386
      %v3388 = vpop.f32.mrb[0].mxu0
      %3389 = vmatprep.mubr.bf16.mxu0 0
      %3390 = vmatmul.mubr.bf16.gmra.mrb[0].mxu0 %v3260
      %v3391 = vpop.f32.mrb[0].mxu0
      %v3392 = vadd.f32 0.0, %v3391
      %v3393 = vpop.f32.mrb[0].mxu0
      %v3394 = vpop.f32.mrb[0].mxu0
      %v3395 = vadd.f32 0.0, %v3394
      %v3396 = vpop.f32.mrb[0].mxu0
      %3397 = vmatprep.mubr.bf16.mxu0 0
      %3398 = vmatmul.mubr.bf16.gmra.mrb[0].mxu0 %v3263
      %v3399 = vpop.f32.mrb[0].mxu0
      %v3400 = vadd.f32 0.0, %v3399
      %v3401 = vpop.f32.mrb[0].mxu0
      %v3402 = vpop.f32.mrb[0].mxu0
      %v3403 = vadd.f32 0.0, %v3402
      %v3404 = vpop.f32.mrb[0].mxu0
      %3405 = vmatprep.mubr.bf16.mxu0 0
      %3406 = vmatmul.mubr.bf16.gmra.mrb[0].mxu0 %v3266
      %v3407 = vpop.f32.mrb[0].mxu0
      %v3408 = vadd.f32 0.0, %v3407
      %v3409 = vpop.f32.mrb[0].mxu0
      %v3410 = vpop.f32.mrb[0].mxu0
      %v3411 = vadd.f32 0.0, %v3410
      %v3412 = vpop.f32.mrb[0].mxu0
      %3413 = vmatprep.mubr.bf16.mxu0 0
      %3414 = vmatmul.mubr.bf16.gmra.mrb[0].mxu0 %v3269
      %v3415 = vpop.f32.mrb[0].mxu0
      %v3416 = vadd.f32 0.0, %v3415
      %v3417 = vpop.f32.mrb[0].mxu0
      %v3418 = vpop.f32.mrb[0].mxu0
      %v3419 = vadd.f32 0.0, %v3418
      %v3420 = vpop.f32.mrb[0].mxu0
      %3421 = vmatprep.mubr.bf16.mxu0 0
      %3422 = vmatmul.mubr.bf16.gmra.mrb[0].mxu0 %v3272
      %v3423 = vpop.f32.mrb[0].mxu0
      %v3424 = vadd.f32 0.0, %v3423
      %v3425 = vpop.f32.mrb[0].mxu0
      %v3426 = vpop.f32.mrb[0].mxu0
      %v3427 = vadd.f32 0.0, %v3426
      %v3428 = vpop.f32.mrb[0].mxu0
      %3429 = vmatprep.mubr.bf16.mxu0 0
      %3430 = vmatmul.mubr.bf16.gmra.mrb[0].mxu0 %v3275
      %v3431 = vpop.f32.mrb[0].mxu0
      %v3432 = vadd.f32 0.0, %v3431
      %v3433 = vpop.f32.mrb[0].mxu0
      %v3434 = vpop.f32.mrb[0].mxu0
      %v3435 = vadd.f32 0.0, %v3434
      %v3436 = vpop.f32.mrb[0].mxu0
      %3437 = vdwg.mxu0
      %v3438 = vadd.f32 %v3075, %v3312
      %v3439 = vadd.f32 %v3076, %v3315
      %v3440 = vadd.f32 %v3077, %v3320
      %v3441 = vadd.f32 %v3078, %v3323
      %v3442 = vadd.f32 %v3079, %v3328
      %v3443 = vadd.f32 %v3080, %v3331
      %v3444 = vadd.f32 %v3081, %v3336
      %v3445 = vadd.f32 %v3082, %v3339
      %v3446 = vadd.f32 %v3083, %v3344
      %v3447 = vadd.f32 %v3084, %v3347
      %v3448 = vadd.f32 %v3085, %v3352
      %v3449 = vadd.f32 %v3086, %v3355
      %v3450 = vadd.f32 %v3087, %v3360
      %v3451 = vadd.f32 %v3088, %v3363
      %v3452 = vadd.f32 %v3089, %v3368
      %v3453 = vadd.f32 %v3090, %v3371
      %v3454 = vadd.f32 %v3091, %v3376
      %v3455 = vadd.f32 %v3092, %v3379
      %v3456 = vadd.f32 %v3093, %v3384
      %v3457 = vadd.f32 %v3094, %v3387
      %v3458 = vadd.f32 %v3095, %v3392
      %v3459 = vadd.f32 %v3096, %v3395
      %v3460 = vadd.f32 %v3097, %v3400
      %v3461 = vadd.f32 %v3098, %v3403
      %v3462 = vadd.f32 %v3099, %v3408
      %v3463 = vadd.f32 %v3100, %v3411
      %v3464 = vadd.f32 %v3101, %v3416
      %v3465 = vadd.f32 %v3102, %v3419
      %v3466 = vadd.f32 %v3103, %v3424
      %v3467 = vadd.f32 %v3104, %v3427
      %v3468 = vadd.f32 %v3105, %v3432
      %v3469 = vadd.f32 %v3106, %v3435
      %v3470 = vld [vmem:[%s3107] sm:$0xf]
      %v3471 = vld [vmem:[%s3107 + $0x4] sm:$0xf]
      %v3472 = vld [vmem:[%s3107 + $0x8] sm:$0xf]
      %v3473 = vld [vmem:[%s3107 + $0xc] sm:$0xf]
      %v3474 = vld [vmem:[%s3107 + $0x10] sm:$0x1]
      %v3475 = vld [vmem:[%s3107 + $0x14] sm:$0xf]
      %v3476 = vld [vmem:[%s3107 + $0x18] sm:$0xf]
      %v3477 = vld [vmem:[%s3107 + $0x1c] sm:$0xf]
      %v3478 = vld [vmem:[%s3107 + $0x20] sm:$0xf]
      %v3479 = vld [vmem:[%s3107 + $0x24] sm:$0x1]
      %v3480 = vld [vmem:[%s3107 + $0x28] sm:$0xf]
      %v3481 = vld [vmem:[%s3107 + $0x2c] sm:$0xf]
      %v3482 = vld [vmem:[%s3107 + $0x30] sm:$0xf]
      %v3483 = vld [vmem:[%s3107 + $0x34] sm:$0xf]
      %v3484 = vld [vmem:[%s3107 + $0x38] sm:$0x1]
      %v3485 = vld [vmem:[%s3107 + $0x3c] sm:$0xf]
      %v3486 = vld [vmem:[%s3107 + $0x40] sm:$0xf]
      %v3487 = vld [vmem:[%s3107 + $0x44] sm:$0xf]
      %v3488 = vld [vmem:[%s3107 + $0x48] sm:$0xf]
      %v3489 = vld [vmem:[%s3107 + $0x4c] sm:$0x1]
      %v3490 = vld [vmem:[%s3107 + $0x50] sm:$0xf]
      %v3491 = vld [vmem:[%s3107 + $0x54] sm:$0xf]
      %v3492 = vld [vmem:[%s3107 + $0x58] sm:$0xf]
      %v3493 = vld [vmem:[%s3107 + $0x5c] sm:$0xf]
      %v3494 = vld [vmem:[%s3107 + $0x60] sm:$0x1]
      %v3495 = vld [vmem:[%s3107 + $0x64] sm:$0xf]
      %v3496 = vld [vmem:[%s3107 + $0x68] sm:$0xf]
      %v3497 = vld [vmem:[%s3107 + $0x6c] sm:$0xf]
      %v3498 = vld [vmem:[%s3107 + $0x70] sm:$0xf]
      %v3499 = vld [vmem:[%s3107 + $0x74] sm:$0x1]
      %v3500 = vld [vmem:[%s3107 + $0x78] sm:$0xf]
      %v3501 = vld [vmem:[%s3107 + $0x7c] sm:$0xf]
      %v3502 = vld [vmem:[%s3107 + $0x80] sm:$0xf]
      %v3503 = vld [vmem:[%s3107 + $0x84] sm:$0xf]
      %v3504 = vld [vmem:[%s3107 + $0x88] sm:$0x1]
      %v3505 = vld [vmem:[%s3107 + $0x8c] sm:$0xf]
      %v3506 = vld [vmem:[%s3107 + $0x90] sm:$0xf]
      %v3507 = vld [vmem:[%s3107 + $0x94] sm:$0xf]
      %v3508 = vld [vmem:[%s3107 + $0x98] sm:$0xf]
      %v3509 = vld [vmem:[%s3107 + $0x9c] sm:$0x1]
      %v3511 = vshrl.u32 %v3470, 16
      %v3513 = vrot.slane %v3511, 4
      %v3514 = vshll.u32 %v3470, 16
      %v3516 = vrot.slane %v3514, 5
      %v3517 = vor.u32 %v3513, %v3516
      %v3518 = vrot.slane %v3517, 4
      %v3520 = vshll.u32 %v3471, 16
      %v3522 = vrot.slane %v3520, 5
      %v3523 = vsel %vm260, %v3518, %v3522
      %v3524 = vshrl.u32 %v3471, 16
      %v3526 = vrot.slane %v3524, 4
      %v3527 = vor.u32 %v3526, %v3522
      %v3528 = vrot.slane %v3527, 4
      %v3530 = vshll.u32 %v3472, 16
      %v3532 = vrot.slane %v3530, 5
      %v3533 = vsel %vm260, %v3528, %v3532
      %v3534 = vshrl.u32 %v3472, 16
      %v3536 = vrot.slane %v3534, 4
      %v3537 = vor.u32 %v3536, %v3532
      %v3538 = vrot.slane %v3537, 4
      %v3540 = vshll.u32 %v3473, 16
      %v3542 = vrot.slane %v3540, 5
      %v3543 = vsel %vm260, %v3538, %v3542
      %v3544 = vshrl.u32 %v3473, 16
      %v3546 = vrot.slane %v3544, 4
      %v3547 = vor.u32 %v3546, %v3542
      %v3548 = vrot.slane %v3547, 4
      %v3550 = vshll.u32 %v3474, 16
      %v3552 = vrot.slane %v3550, 5
      %v3553 = vsel %vm260, %v3548, %v3552
      %v3555 = vshrl.u32 %v3475, 16
      %v3557 = vrot.slane %v3555, 4
      %v3558 = vshll.u32 %v3475, 16
      %v3560 = vrot.slane %v3558, 5
      %v3561 = vor.u32 %v3557, %v3560
      %v3562 = vrot.slane %v3561, 4
      %v3564 = vshll.u32 %v3476, 16
      %v3566 = vrot.slane %v3564, 5
      %v3567 = vsel %vm260, %v3562, %v3566
      %v3568 = vshrl.u32 %v3476, 16
      %v3570 = vrot.slane %v3568, 4
      %v3571 = vor.u32 %v3570, %v3566
      %v3572 = vrot.slane %v3571, 4
      %v3574 = vshll.u32 %v3477, 16
      %v3576 = vrot.slane %v3574, 5
      %v3577 = vsel %vm260, %v3572, %v3576
      %v3578 = vshrl.u32 %v3477, 16
      %v3580 = vrot.slane %v3578, 4
      %v3581 = vor.u32 %v3580, %v3576
      %v3582 = vrot.slane %v3581, 4
      %v3584 = vshll.u32 %v3478, 16
      %v3586 = vrot.slane %v3584, 5
      %v3587 = vsel %vm260, %v3582, %v3586
      %v3588 = vshrl.u32 %v3478, 16
      %v3590 = vrot.slane %v3588, 4
      %v3591 = vor.u32 %v3590, %v3586
      %v3592 = vrot.slane %v3591, 4
      %v3594 = vshll.u32 %v3479, 16
      %v3596 = vrot.slane %v3594, 5
      %v3597 = vsel %vm260, %v3592, %v3596
      %v3599 = vshrl.u32 %v3480, 16
      %v3601 = vrot.slane %v3599, 4
      %v3602 = vshll.u32 %v3480, 16
      %v3604 = vrot.slane %v3602, 5
      %v3605 = vor.u32 %v3601, %v3604
      %v3606 = vrot.slane %v3605, 4
      %v3608 = vshll.u32 %v3481, 16
      %v3610 = vrot.slane %v3608, 5
      %v3611 = vsel %vm260, %v3606, %v3610
      %v3612 = vshrl.u32 %v3481, 16
      %v3614 = vrot.slane %v3612, 4
      %v3615 = vor.u32 %v3614, %v3610
      %v3616 = vrot.slane %v3615, 4
      %v3618 = vshll.u32 %v3482, 16
      %v3620 = vrot.slane %v3618, 5
      %v3621 = vsel %vm260, %v3616, %v3620
      %v3622 = vshrl.u32 %v3482, 16
      %v3624 = vrot.slane %v3622, 4
      %v3625 = vor.u32 %v3624, %v3620
      %v3626 = vrot.slane %v3625, 4
      %v3628 = vshll.u32 %v3483, 16
      %v3630 = vrot.slane %v3628, 5
      %v3631 = vsel %vm260, %v3626, %v3630
      %v3632 = vshrl.u32 %v3483, 16
      %v3634 = vrot.slane %v3632, 4
      %v3635 = vor.u32 %v3634, %v3630
      %v3636 = vrot.slane %v3635, 4
      %v3638 = vshll.u32 %v3484, 16
      %v3640 = vrot.slane %v3638, 5
      %v3641 = vsel %vm260, %v3636, %v3640
      %v3643 = vshrl.u32 %v3485, 16
      %v3645 = vrot.slane %v3643, 4
      %v3646 = vshll.u32 %v3485, 16
      %v3648 = vrot.slane %v3646, 5
      %v3649 = vor.u32 %v3645, %v3648
      %v3650 = vrot.slane %v3649, 4
      %v3652 = vshll.u32 %v3486, 16
      %v3654 = vrot.slane %v3652, 5
      %v3655 = vsel %vm260, %v3650, %v3654
      %v3656 = vshrl.u32 %v3486, 16
      %v3658 = vrot.slane %v3656, 4
      %v3659 = vor.u32 %v3658, %v3654
      %v3660 = vrot.slane %v3659, 4
      %v3662 = vshll.u32 %v3487, 16
      %v3664 = vrot.slane %v3662, 5
      %v3665 = vsel %vm260, %v3660, %v3664
      %v3666 = vshrl.u32 %v3487, 16
      %v3668 = vrot.slane %v3666, 4
      %v3669 = vor.u32 %v3668, %v3664
      %v3670 = vrot.slane %v3669, 4
      %v3672 = vshll.u32 %v3488, 16
      %v3674 = vrot.slane %v3672, 5
      %v3675 = vsel %vm260, %v3670, %v3674
      %v3676 = vshrl.u32 %v3488, 16
      %v3678 = vrot.slane %v3676, 4
      %v3679 = vor.u32 %v3678, %v3674
      %v3680 = vrot.slane %v3679, 4
      %v3682 = vshll.u32 %v3489, 16
      %v3684 = vrot.slane %v3682, 5
      %v3685 = vsel %vm260, %v3680, %v3684
      %v3687 = vshrl.u32 %v3490, 16
      %v3689 = vrot.slane %v3687, 4
      %v3690 = vshll.u32 %v3490, 16
      %v3692 = vrot.slane %v3690, 5
      %v3693 = vor.u32 %v3689, %v3692
      %v3694 = vrot.slane %v3693, 4
      %v3696 = vshll.u32 %v3491, 16
      %v3698 = vrot.slane %v3696, 5
      %v3699 = vsel %vm260, %v3694, %v3698
      %v3700 = vshrl.u32 %v3491, 16
      %v3702 = vrot.slane %v3700, 4
      %v3703 = vor.u32 %v3702, %v3698
      %v3704 = vrot.slane %v3703, 4
      %v3706 = vshll.u32 %v3492, 16
      %v3708 = vrot.slane %v3706, 5
      %v3709 = vsel %vm260, %v3704, %v3708
      %v3710 = vshrl.u32 %v3492, 16
      %v3712 = vrot.slane %v3710, 4
      %v3713 = vor.u32 %v3712, %v3708
      %v3714 = vrot.slane %v3713, 4
      %v3716 = vshll.u32 %v3493, 16
      %v3718 = vrot.slane %v3716, 5
      %v3719 = vsel %vm260, %v3714, %v3718
      %v3720 = vshrl.u32 %v3493, 16
      %v3722 = vrot.slane %v3720, 4
      %v3723 = vor.u32 %v3722, %v3718
      %v3724 = vrot.slane %v3723, 4
      %v3726 = vshll.u32 %v3494, 16
      %v3728 = vrot.slane %v3726, 5
      %v3729 = vsel %vm260, %v3724, %v3728
      %v3731 = vshrl.u32 %v3495, 16
      %v3733 = vrot.slane %v3731, 4
      %v3734 = vshll.u32 %v3495, 16
      %v3736 = vrot.slane %v3734, 5
      %v3737 = vor.u32 %v3733, %v3736
      %v3738 = vrot.slane %v3737, 4
      %v3740 = vshll.u32 %v3496, 16
      %v3742 = vrot.slane %v3740, 5
      %v3743 = vsel %vm260, %v3738, %v3742
      %v3744 = vshrl.u32 %v3496, 16
      %v3746 = vrot.slane %v3744, 4
      %v3747 = vor.u32 %v3746, %v3742
      %v3748 = vrot.slane %v3747, 4
      %v3750 = vshll.u32 %v3497, 16
      %v3752 = vrot.slane %v3750, 5
      %v3753 = vsel %vm260, %v3748, %v3752
      %v3754 = vshrl.u32 %v3497, 16
      %v3756 = vrot.slane %v3754, 4
      %v3757 = vor.u32 %v3756, %v3752
      %v3758 = vrot.slane %v3757, 4
      %v3760 = vshll.u32 %v3498, 16
      %v3762 = vrot.slane %v3760, 5
      %v3763 = vsel %vm260, %v3758, %v3762
      %v3764 = vshrl.u32 %v3498, 16
      %v3766 = vrot.slane %v3764, 4
      %v3767 = vor.u32 %v3766, %v3762
      %v3768 = vrot.slane %v3767, 4
      %v3770 = vshll.u32 %v3499, 16
      %v3772 = vrot.slane %v3770, 5
      %v3773 = vsel %vm260, %v3768, %v3772
      %v3775 = vshrl.u32 %v3500, 16
      %v3777 = vrot.slane %v3775, 4
      %v3778 = vshll.u32 %v3500, 16
      %v3780 = vrot.slane %v3778, 5
      %v3781 = vor.u32 %v3777, %v3780
      %v3782 = vrot.slane %v3781, 4
      %v3784 = vshll.u32 %v3501, 16
      %v3786 = vrot.slane %v3784, 5
      %v3787 = vsel %vm260, %v3782, %v3786
      %v3788 = vshrl.u32 %v3501, 16
      %v3790 = vrot.slane %v3788, 4
      %v3791 = vor.u32 %v3790, %v3786
      %v3792 = vrot.slane %v3791, 4
      %v3794 = vshll.u32 %v3502, 16
      %v3796 = vrot.slane %v3794, 5
      %v3797 = vsel %vm260, %v3792, %v3796
      %v3798 = vshrl.u32 %v3502, 16
      %v3800 = vrot.slane %v3798, 4
      %v3801 = vor.u32 %v3800, %v3796
      %v3802 = vrot.slane %v3801, 4
      %v3804 = vshll.u32 %v3503, 16
      %v3806 = vrot.slane %v3804, 5
      %v3807 = vsel %vm260, %v3802, %v3806
      %v3808 = vshrl.u32 %v3503, 16
      %v3810 = vrot.slane %v3808, 4
      %v3811 = vor.u32 %v3810, %v3806
      %v3812 = vrot.slane %v3811, 4
      %v3814 = vshll.u32 %v3504, 16
      %v3816 = vrot.slane %v3814, 5
      %v3817 = vsel %vm260, %v3812, %v3816
      %v3819 = vshrl.u32 %v3505, 16
      %v3821 = vrot.slane %v3819, 4
      %v3822 = vshll.u32 %v3505, 16
      %v3824 = vrot.slane %v3822, 5
      %v3825 = vor.u32 %v3821, %v3824
      %v3826 = vrot.slane %v3825, 4
      %v3828 = vshll.u32 %v3506, 16
      %v3830 = vrot.slane %v3828, 5
      %v3831 = vsel %vm260, %v3826, %v3830
      %v3832 = vshrl.u32 %v3506, 16
      %v3834 = vrot.slane %v3832, 4
      %v3835 = vor.u32 %v3834, %v3830
      %v3836 = vrot.slane %v3835, 4
      %v3838 = vshll.u32 %v3507, 16
      %v3840 = vrot.slane %v3838, 5
      %v3841 = vsel %vm260, %v3836, %v3840
      %v3842 = vshrl.u32 %v3507, 16
      %v3844 = vrot.slane %v3842, 4
      %v3845 = vor.u32 %v3844, %v3840
      %v3846 = vrot.slane %v3845, 4
      %v3848 = vshll.u32 %v3508, 16
      %v3850 = vrot.slane %v3848, 5
      %v3851 = vsel %vm260, %v3846, %v3850
      %v3852 = vshrl.u32 %v3508, 16
      %v3854 = vrot.slane %v3852, 4
      %v3855 = vor.u32 %v3854, %v3850
      %v3856 = vrot.slane %v3855, 4
      %v3858 = vshll.u32 %v3509, 16
      %v3860 = vrot.slane %v3858, 5
      %v3861 = vsel %vm260, %v3856, %v3860
      %s3862 = scalar_lea.vmem %s1, 56
      %v3863 = vld [vmem:[%s3862] sm:$0xf]
      %v3864 = vld [vmem:[%s3862 + $0x4] sm:$0xf]
      %v3865 = vunpack.c.l.b16 %v3523
      %v3866 = vunpack.c.l.b16 %v3533
      %v3867 = vunpack.c.l.b16 %v3543
      %v3868 = vunpack.c.l.b16 %v3553
      %v3869 = vunpack.c.l.b16 %v3567
      %v3870 = vunpack.c.l.b16 %v3577
      %v3871 = vunpack.c.l.b16 %v3587
      %v3872 = vunpack.c.l.b16 %v3597
      %v3873 = vunpack.c.l.b16 %v3611
      %v3874 = vunpack.c.l.b16 %v3621
      %v3875 = vunpack.c.l.b16 %v3631
      %v3876 = vunpack.c.l.b16 %v3641
      %v3877 = vunpack.c.l.b16 %v3655
      %v3878 = vunpack.c.l.b16 %v3665
      %v3879 = vunpack.c.l.b16 %v3675
      %v3880 = vunpack.c.l.b16 %v3685
      %v3881 = vunpack.c.l.b16 %v3699
      %v3882 = vunpack.c.l.b16 %v3709
      %v3883 = vunpack.c.l.b16 %v3719
      %v3884 = vunpack.c.l.b16 %v3729
      %v3885 = vunpack.c.l.b16 %v3743
      %v3886 = vunpack.c.l.b16 %v3753
      %v3887 = vunpack.c.l.b16 %v3763
      %v3888 = vunpack.c.l.b16 %v3773
      %v3889 = vunpack.c.l.b16 %v3787
      %v3890 = vunpack.c.l.b16 %v3797
      %v3891 = vunpack.c.l.b16 %v3807
      %v3892 = vunpack.c.l.b16 %v3817
      %v3893 = vunpack.c.l.b16 %v3831
      %v3894 = vunpack.c.l.b16 %v3841
      %v3895 = vunpack.c.l.b16 %v3851
      %v3896 = vunpack.c.l.b16 %v3861
      %v3897 = vpack.c.b16 %v3866, %v3865
      %v3898 = vpack.c.b16 %v3868, %v3867
      %v3899 = vpack.c.b16 %v3870, %v3869
      %v3900 = vpack.c.b16 %v3872, %v3871
      %v3901 = vpack.c.b16 %v3874, %v3873
      %v3902 = vpack.c.b16 %v3876, %v3875
      %v3903 = vpack.c.b16 %v3878, %v3877
      %v3904 = vpack.c.b16 %v3880, %v3879
      %v3905 = vpack.c.b16 %v3882, %v3881
      %v3906 = vpack.c.b16 %v3884, %v3883
      %v3907 = vpack.c.b16 %v3886, %v3885
      %v3908 = vpack.c.b16 %v3888, %v3887
      %v3909 = vpack.c.b16 %v3890, %v3889
      %v3910 = vpack.c.b16 %v3892, %v3891
      %v3911 = vpack.c.b16 %v3894, %v3893
      %v3912 = vpack.c.b16 %v3896, %v3895
      %v3915 = vunpack.c.l.b16 %v3863
      %v3916 = vunpack.c.l.b16 %v3864
      %v3917 = vpack.c.b16 %v3916, %v3915
      %v3920 = vsel %vm670, %v3897, 0
      %v3923 = vsel %vm670, %v3898, 0
      %v3926 = vsel %vm670, %v3899, 0
      %v3929 = vsel %vm670, %v3900, 0
      %v3932 = vsel %vm670, %v3901, 0
      %v3935 = vsel %vm670, %v3902, 0
      %v3938 = vsel %vm670, %v3903, 0
      %v3941 = vsel %vm670, %v3904, 0
      %v3944 = vsel %vm670, %v3905, 0
      %v3947 = vsel %vm670, %v3906, 0
      %v3950 = vsel %vm670, %v3907, 0
      %v3953 = vsel %vm670, %v3908, 0
      %v3956 = vsel %vm670, %v3909, 0
      %v3959 = vsel %vm670, %v3910, 0
      %v3962 = vsel %vm670, %v3911, 0
      %v3965 = vsel %vm670, %v3912, 0
      %3967 = vmatprep.subr.bf16.mxu0 0
      %3968 = vmatpush1.bf16.msra.mxu0 %v3917
      %3969 = vmatprep.subr.bf16.mxu0 0
      %3970 = vmatpush1.bf16.msra.mxu0 0
      %3971 = vmatprep.subr.bf16.mxu0 0
      %3972 = vmatpush1.bf16.msra.mxu0 0
      %3973 = vmatprep.subr.bf16.mxu0 0
      %3974 = vmatpush1.bf16.msra.mxu0 0
      %3975 = vmatprep.subr.bf16.mxu0 0
      %3976 = vmatpush1.bf16.msra.mxu0 0
      %3977 = vmatprep.subr.bf16.mxu0 0
      %3978 = vmatpush1.bf16.msra.mxu0 0
      %3979 = vmatprep.subr.bf16.mxu0 0
      %3980 = vmatpush1.bf16.msra.mxu0 0
      %3981 = vmatprep.subr.bf16.mxu0 0
      %3982 = vmatpush1.bf16.msra.mxu0 0
      %3983 = vmatprep.subr.bf16.mxu0 0
      %3984 = vmatpush1.bf16.msra.mxu0 0
      %3985 = vmatprep.subr.bf16.mxu0 0
      %3986 = vmatpush1.bf16.msra.mxu0 0
      %3987 = vmatprep.subr.bf16.mxu0 0
      %3988 = vmatpush1.bf16.msra.mxu0 0
      %3989 = vmatprep.subr.bf16.mxu0 0
      %3990 = vmatpush1.bf16.msra.mxu0 0
      %3991 = vmatprep.subr.bf16.mxu0 0
      %3992 = vmatpush1.bf16.msra.mxu0 0
      %3993 = vmatprep.subr.bf16.mxu0 0
      %3994 = vmatpush1.bf16.msra.mxu0 0
      %3995 = vmatprep.subr.bf16.mxu0 0
      %3996 = vmatpush1.bf16.msra.mxu0 0
      %3997 = vmatprep.subr.bf16.mxu0 0
      %3998 = vmatpush1.bf16.msra.mxu0 0
      %3999 = vmatprep.mubr.bf16.mxu0 0
      %4000 = vmatmul.mubr.bf16.gmra.mrb[0].mxu0 %v3920
      %v4001 = vpop.f32.mrb[0].mxu0
      %v4002 = vadd.f32 0.0, %v4001
      %v4003 = vpop.f32.mrb[0].mxu0
      %v4004 = vpop.f32.mrb[0].mxu0
      %v4005 = vadd.f32 0.0, %v4004
      %v4006 = vpop.f32.mrb[0].mxu0
      %4007 = vmatprep.mubr.bf16.mxu0 0
      %4008 = vmatmul.mubr.bf16.gmra.mrb[0].mxu0 %v3923
      %v4009 = vpop.f32.mrb[0].mxu0
      %v4010 = vadd.f32 0.0, %v4009
      %v4011 = vpop.f32.mrb[0].mxu0
      %v4012 = vpop.f32.mrb[0].mxu0
      %v4013 = vadd.f32 0.0, %v4012
      %v4014 = vpop.f32.mrb[0].mxu0
      %4015 = vmatprep.mubr.bf16.mxu0 0
      %4016 = vmatmul.mubr.bf16.gmra.mrb[0].mxu0 %v3926
      %v4017 = vpop.f32.mrb[0].mxu0
      %v4018 = vadd.f32 0.0, %v4017
      %v4019 = vpop.f32.mrb[0].mxu0
      %v4020 = vpop.f32.mrb[0].mxu0
      %v4021 = vadd.f32 0.0, %v4020
      %v4022 = vpop.f32.mrb[0].mxu0
      %4023 = vmatprep.mubr.bf16.mxu0 0
      %4024 = vmatmul.mubr.bf16.gmra.mrb[0].mxu0 %v3929
      %v4025 = vpop.f32.mrb[0].mxu0
      %v4026 = vadd.f32 0.0, %v4025
      %v4027 = vpop.f32.mrb[0].mxu0
      %v4028 = vpop.f32.mrb[0].mxu0
      %v4029 = vadd.f32 0.0, %v4028
      %v4030 = vpop.f32.mrb[0].mxu0
      %4031 = vmatprep.mubr.bf16.mxu0 0
      %4032 = vmatmul.mubr.bf16.gmra.mrb[0].mxu0 %v3932
      %v4033 = vpop.f32.mrb[0].mxu0
      %v4034 = vadd.f32 0.0, %v4033
      %v4035 = vpop.f32.mrb[0].mxu0
      %v4036 = vpop.f32.mrb[0].mxu0
      %v4037 = vadd.f32 0.0, %v4036
      %v4038 = vpop.f32.mrb[0].mxu0
      %4039 = vmatprep.mubr.bf16.mxu0 0
      %4040 = vmatmul.mubr.bf16.gmra.mrb[0].mxu0 %v3935
      %v4041 = vpop.f32.mrb[0].mxu0
      %v4042 = vadd.f32 0.0, %v4041
      %v4043 = vpop.f32.mrb[0].mxu0
      %v4044 = vpop.f32.mrb[0].mxu0
      %v4045 = vadd.f32 0.0, %v4044
      %v4046 = vpop.f32.mrb[0].mxu0
      %4047 = vmatprep.mubr.bf16.mxu0 0
      %4048 = vmatmul.mubr.bf16.gmra.mrb[0].mxu0 %v3938
      %v4049 = vpop.f32.mrb[0].mxu0
      %v4050 = vadd.f32 0.0, %v4049
      %v4051 = vpop.f32.mrb[0].mxu0
      %v4052 = vpop.f32.mrb[0].mxu0
      %v4053 = vadd.f32 0.0, %v4052
      %v4054 = vpop.f32.mrb[0].mxu0
      %4055 = vmatprep.mubr.bf16.mxu0 0
      %4056 = vmatmul.mubr.bf16.gmra.mrb[0].mxu0 %v3941
      %v4057 = vpop.f32.mrb[0].mxu0
      %v4058 = vadd.f32 0.0, %v4057
      %v4059 = vpop.f32.mrb[0].mxu0
      %v4060 = vpop.f32.mrb[0].mxu0
      %v4061 = vadd.f32 0.0, %v4060
      %v4062 = vpop.f32.mrb[0].mxu0
      %4063 = vmatprep.mubr.bf16.mxu0 0
      %4064 = vmatmul.mubr.bf16.gmra.mrb[0].mxu0 %v3944
      %v4065 = vpop.f32.mrb[0].mxu0
      %v4066 = vadd.f32 0.0, %v4065
      %v4067 = vpop.f32.mrb[0].mxu0
      %v4068 = vpop.f32.mrb[0].mxu0
      %v4069 = vadd.f32 0.0, %v4068
      %v4070 = vpop.f32.mrb[0].mxu0
      %4071 = vmatprep.mubr.bf16.mxu0 0
      %4072 = vmatmul.mubr.bf16.gmra.mrb[0].mxu0 %v3947
      %v4073 = vpop.f32.mrb[0].mxu0
      %v4074 = vadd.f32 0.0, %v4073
      %v4075 = vpop.f32.mrb[0].mxu0
      %v4076 = vpop.f32.mrb[0].mxu0
      %v4077 = vadd.f32 0.0, %v4076
      %v4078 = vpop.f32.mrb[0].mxu0
      %4079 = vmatprep.mubr.bf16.mxu0 0
      %4080 = vmatmul.mubr.bf16.gmra.mrb[0].mxu0 %v3950
      %v4081 = vpop.f32.mrb[0].mxu0
      %v4082 = vadd.f32 0.0, %v4081
      %v4083 = vpop.f32.mrb[0].mxu0
      %v4084 = vpop.f32.mrb[0].mxu0
      %v4085 = vadd.f32 0.0, %v4084
      %v4086 = vpop.f32.mrb[0].mxu0
      %4087 = vmatprep.mubr.bf16.mxu0 0
      %4088 = vmatmul.mubr.bf16.gmra.mrb[0].mxu0 %v3953
      %v4089 = vpop.f32.mrb[0].mxu0
      %v4090 = vadd.f32 0.0, %v4089
      %v4091 = vpop.f32.mrb[0].mxu0
      %v4092 = vpop.f32.mrb[0].mxu0
      %v4093 = vadd.f32 0.0, %v4092
      %v4094 = vpop.f32.mrb[0].mxu0
      %4095 = vmatprep.mubr.bf16.mxu0 0
      %4096 = vmatmul.mubr.bf16.gmra.mrb[0].mxu0 %v3956
      %v4097 = vpop.f32.mrb[0].mxu0
      %v4098 = vadd.f32 0.0, %v4097
      %v4099 = vpop.f32.mrb[0].mxu0
      %v4100 = vpop.f32.mrb[0].mxu0
      %v4101 = vadd.f32 0.0, %v4100
      %v4102 = vpop.f32.mrb[0].mxu0
      %4103 = vmatprep.mubr.bf16.mxu0 0
      %4104 = vmatmul.mubr.bf16.gmra.mrb[0].mxu0 %v3959
      %v4105 = vpop.f32.mrb[0].mxu0
      %v4106 = vadd.f32 0.0, %v4105
      %v4107 = vpop.f32.mrb[0].mxu0
      %v4108 = vpop.f32.mrb[0].mxu0
      %v4109 = vadd.f32 0.0, %v4108
      %v4110 = vpop.f32.mrb[0].mxu0
      %4111 = vmatprep.mubr.bf16.mxu0 0
      %4112 = vmatmul.mubr.bf16.gmra.mrb[0].mxu0 %v3962
      %v4113 = vpop.f32.mrb[0].mxu0
      %v4114 = vadd.f32 0.0, %v4113
      %v4115 = vpop.f32.mrb[0].mxu0
      %v4116 = vpop.f32.mrb[0].mxu0
      %v4117 = vadd.f32 0.0, %v4116
      %v4118 = vpop.f32.mrb[0].mxu0
      %4119 = vmatprep.mubr.bf16.mxu0 0
      %4120 = vmatmul.mubr.bf16.gmra.mrb[0].mxu0 %v3965
      %v4121 = vpop.f32.mrb[0].mxu0
      %v4122 = vadd.f32 0.0, %v4121
      %v4123 = vpop.f32.mrb[0].mxu0
      %v4124 = vpop.f32.mrb[0].mxu0
      %v4125 = vadd.f32 0.0, %v4124
      %v4126 = vpop.f32.mrb[0].mxu0
      %4127 = vdwg.mxu0
      %v4128 = vadd.f32 %v3438, %v4002
      %v4129 = vadd.f32 %v3439, %v4005
      %v4130 = vadd.f32 %v3440, %v4010
      %v4131 = vadd.f32 %v3441, %v4013
      %v4132 = vadd.f32 %v3442, %v4018
      %v4133 = vadd.f32 %v3443, %v4021
      %v4134 = vadd.f32 %v3444, %v4026
      %v4135 = vadd.f32 %v3445, %v4029
      %v4136 = vadd.f32 %v3446, %v4034
      %v4137 = vadd.f32 %v3447, %v4037
      %v4138 = vadd.f32 %v3448, %v4042
      %v4139 = vadd.f32 %v3449, %v4045
      %v4140 = vadd.f32 %v3450, %v4050
      %v4141 = vadd.f32 %v3451, %v4053
      %v4142 = vadd.f32 %v3452, %v4058
      %v4143 = vadd.f32 %v3453, %v4061
      %v4144 = vadd.f32 %v3454, %v4066
      %v4145 = vadd.f32 %v3455, %v4069
      %v4146 = vadd.f32 %v3456, %v4074
      %v4147 = vadd.f32 %v3457, %v4077
      %v4148 = vadd.f32 %v3458, %v4082
      %v4149 = vadd.f32 %v3459, %v4085
      %v4150 = vadd.f32 %v3460, %v4090
      %v4151 = vadd.f32 %v3461, %v4093
      %v4152 = vadd.f32 %v3462, %v4098
      %v4153 = vadd.f32 %v3463, %v4101
      %v4154 = vadd.f32 %v3464, %v4106
      %v4155 = vadd.f32 %v3465, %v4109
      %v4156 = vadd.f32 %v3466, %v4114
      %v4157 = vadd.f32 %v3467, %v4117
      %v4158 = vadd.f32 %v3468, %v4122
      %v4159 = vadd.f32 %v3469, %v4125
      %v4160 = vld [vmem:[%s3107] sm:$0xe]
      %v4161 = vld [vmem:[%s3107 + $0x14] sm:$0xe]
      %v4162 = vld [vmem:[%s3107 + $0x28] sm:$0xe]
      %v4163 = vld [vmem:[%s3107 + $0x3c] sm:$0xe]
      %v4164 = vld [vmem:[%s3107 + $0x50] sm:$0xe]
      %v4165 = vld [vmem:[%s3107 + $0x64] sm:$0xe]
      %v4166 = vld [vmem:[%s3107 + $0x78] sm:$0xe]
      %v4167 = vld [vmem:[%s3107 + $0x8c] sm:$0xe]
      %v4208 = vrot.slane %v4160, 5
      %v4209 = vrot.slane %v4208, 4
      %v4210 = vrot.slane %v3471, 5
      %v4211 = vsel %vm1201, %v4209, %v4210
      %v4212 = vrot.slane %v4210, 4
      %v4213 = vrot.slane %v3472, 5
      %v4214 = vsel %vm1201, %v4212, %v4213
      %v4215 = vrot.slane %v4213, 4
      %v4216 = vrot.slane %v3473, 5
      %v4217 = vsel %vm1201, %v4215, %v4216
      %v4218 = vrot.slane %v4216, 4
      %v4219 = vrot.slane %v3474, 5
      %v4220 = vsel %vm1201, %v4218, %v4219
      %v4221 = vrot.slane %v4161, 5
      %v4222 = vrot.slane %v4221, 4
      %v4223 = vrot.slane %v3476, 5
      %v4224 = vsel %vm1201, %v4222, %v4223
      %v4225 = vrot.slane %v4223, 4
      %v4226 = vrot.slane %v3477, 5
      %v4227 = vsel %vm1201, %v4225, %v4226
      %v4228 = vrot.slane %v4226, 4
      %v4229 = vrot.slane %v3478, 5
      %v4230 = vsel %vm1201, %v4228, %v4229
      %v4231 = vrot.slane %v4229, 4
      %v4232 = vrot.slane %v3479, 5
      %v4233 = vsel %vm1201, %v4231, %v4232
      %v4234 = vrot.slane %v4162, 5
      %v4235 = vrot.slane %v4234, 4
      %v4236 = vrot.slane %v3481, 5
      %v4237 = vsel %vm1201, %v4235, %v4236
      %v4238 = vrot.slane %v4236, 4
      %v4239 = vrot.slane %v3482, 5
      %v4240 = vsel %vm1201, %v4238, %v4239
      %v4241 = vrot.slane %v4239, 4
      %v4242 = vrot.slane %v3483, 5
      %v4243 = vsel %vm1201, %v4241, %v4242
      %v4244 = vrot.slane %v4242, 4
      %v4245 = vrot.slane %v3484, 5
      %v4246 = vsel %vm1201, %v4244, %v4245
      %v4247 = vrot.slane %v4163, 5
      %v4248 = vrot.slane %v4247, 4
      %v4249 = vrot.slane %v3486, 5
      %v4250 = vsel %vm1201, %v4248, %v4249
      %v4251 = vrot.slane %v4249, 4
      %v4252 = vrot.slane %v3487, 5
      %v4253 = vsel %vm1201, %v4251, %v4252
      %v4254 = vrot.slane %v4252, 4
      %v4255 = vrot.slane %v3488, 5
      %v4256 = vsel %vm1201, %v4254, %v4255
      %v4257 = vrot.slane %v4255, 4
      %v4258 = vrot.slane %v3489, 5
      %v4259 = vsel %vm1201, %v4257, %v4258
      %v4260 = vrot.slane %v4164, 5
      %v4261 = vrot.slane %v4260, 4
      %v4262 = vrot.slane %v3491, 5
      %v4263 = vsel %vm1201, %v4261, %v4262
      %v4264 = vrot.slane %v4262, 4
      %v4265 = vrot.slane %v3492, 5
      %v4266 = vsel %vm1201, %v4264, %v4265
      %v4267 = vrot.slane %v4265, 4
      %v4268 = vrot.slane %v3493, 5
      %v4269 = vsel %vm1201, %v4267, %v4268
      %v4270 = vrot.slane %v4268, 4
      %v4271 = vrot.slane %v3494, 5
      %v4272 = vsel %vm1201, %v4270, %v4271
      %v4273 = vrot.slane %v4165, 5
      %v4274 = vrot.slane %v4273, 4
      %v4275 = vrot.slane %v3496, 5
      %v4276 = vsel %vm1201, %v4274, %v4275
      %v4277 = vrot.slane %v4275, 4
      %v4278 = vrot.slane %v3497, 5
      %v4279 = vsel %vm1201, %v4277, %v4278
      %v4280 = vrot.slane %v4278, 4
      %v4281 = vrot.slane %v3498, 5
      %v4282 = vsel %vm1201, %v4280, %v4281
      %v4283 = vrot.slane %v4281, 4
      %v4284 = vrot.slane %v3499, 5
      %v4285 = vsel %vm1201, %v4283, %v4284
      %v4286 = vrot.slane %v4166, 5
      %v4287 = vrot.slane %v4286, 4
      %v4288 = vrot.slane %v3501, 5
      %v4289 = vsel %vm1201, %v4287, %v4288
      %v4290 = vrot.slane %v4288, 4
      %v4291 = vrot.slane %v3502, 5
      %v4292 = vsel %vm1201, %v4290, %v4291
      %v4293 = vrot.slane %v4291, 4
      %v4294 = vrot.slane %v3503, 5
      %v4295 = vsel %vm1201, %v4293, %v4294
      %v4296 = vrot.slane %v4294, 4
      %v4297 = vrot.slane %v3504, 5
      %v4298 = vsel %vm1201, %v4296, %v4297
      %v4299 = vrot.slane %v4167, 5
      %v4300 = vrot.slane %v4299, 4
      %v4301 = vrot.slane %v3506, 5
      %v4302 = vsel %vm1201, %v4300, %v4301
      %v4303 = vrot.slane %v4301, 4
      %v4304 = vrot.slane %v3507, 5
      %v4305 = vsel %vm1201, %v4303, %v4304
      %v4306 = vrot.slane %v4304, 4
      %v4307 = vrot.slane %v3508, 5
      %v4308 = vsel %vm1201, %v4306, %v4307
      %v4309 = vrot.slane %v4307, 4
      %v4310 = vrot.slane %v3509, 5
      %v4311 = vsel %vm1201, %v4309, %v4310
      %s4312 = scalar_lea.vmem %s1, 64
      %v4313 = vld [vmem:[%s4312] sm:$0xf]
      %v4314 = vld [vmem:[%s4312 + $0x4] sm:$0xf]
      %v4315 = vunpack.c.l.b16 %v4211
      %v4316 = vunpack.c.l.b16 %v4214
      %v4317 = vunpack.c.l.b16 %v4217
      %v4318 = vunpack.c.l.b16 %v4220
      %v4319 = vunpack.c.l.b16 %v4224
      %v4320 = vunpack.c.l.b16 %v4227
      %v4321 = vunpack.c.l.b16 %v4230
      %v4322 = vunpack.c.l.b16 %v4233
      %v4323 = vunpack.c.l.b16 %v4237
      %v4324 = vunpack.c.l.b16 %v4240
      %v4325 = vunpack.c.l.b16 %v4243
      %v4326 = vunpack.c.l.b16 %v4246
      %v4327 = vunpack.c.l.b16 %v4250
      %v4328 = vunpack.c.l.b16 %v4253
      %v4329 = vunpack.c.l.b16 %v4256
      %v4330 = vunpack.c.l.b16 %v4259
      %v4331 = vunpack.c.l.b16 %v4263
      %v4332 = vunpack.c.l.b16 %v4266
      %v4333 = vunpack.c.l.b16 %v4269
      %v4334 = vunpack.c.l.b16 %v4272
      %v4335 = vunpack.c.l.b16 %v4276
      %v4336 = vunpack.c.l.b16 %v4279
      %v4337 = vunpack.c.l.b16 %v4282
      %v4338 = vunpack.c.l.b16 %v4285
      %v4339 = vunpack.c.l.b16 %v4289
      %v4340 = vunpack.c.l.b16 %v4292
      %v4341 = vunpack.c.l.b16 %v4295
      %v4342 = vunpack.c.l.b16 %v4298
      %v4343 = vunpack.c.l.b16 %v4302
      %v4344 = vunpack.c.l.b16 %v4305
      %v4345 = vunpack.c.l.b16 %v4308
      %v4346 = vunpack.c.l.b16 %v4311
      %v4347 = vpack.c.b16 %v4316, %v4315
      %v4348 = vpack.c.b16 %v4318, %v4317
      %v4349 = vpack.c.b16 %v4320, %v4319
      %v4350 = vpack.c.b16 %v4322, %v4321
      %v4351 = vpack.c.b16 %v4324, %v4323
      %v4352 = vpack.c.b16 %v4326, %v4325
      %v4353 = vpack.c.b16 %v4328, %v4327
      %v4354 = vpack.c.b16 %v4330, %v4329
      %v4355 = vpack.c.b16 %v4332, %v4331
      %v4356 = vpack.c.b16 %v4334, %v4333
      %v4357 = vpack.c.b16 %v4336, %v4335
      %v4358 = vpack.c.b16 %v4338, %v4337
      %v4359 = vpack.c.b16 %v4340, %v4339
      %v4360 = vpack.c.b16 %v4342, %v4341
      %v4361 = vpack.c.b16 %v4344, %v4343
      %v4362 = vpack.c.b16 %v4346, %v4345
      %v4365 = vunpack.c.l.b16 %v4313
      %v4366 = vunpack.c.l.b16 %v4314
      %v4367 = vpack.c.b16 %v4366, %v4365
      %v4370 = vsel %vm670, %v4347, 0
      %v4373 = vsel %vm670, %v4348, 0
      %v4376 = vsel %vm670, %v4349, 0
      %v4379 = vsel %vm670, %v4350, 0
      %v4382 = vsel %vm670, %v4351, 0
      %v4385 = vsel %vm670, %v4352, 0
      %v4388 = vsel %vm670, %v4353, 0
      %v4391 = vsel %vm670, %v4354, 0
      %v4394 = vsel %vm670, %v4355, 0
      %v4397 = vsel %vm670, %v4356, 0
      %v4400 = vsel %vm670, %v4357, 0
      %v4403 = vsel %vm670, %v4358, 0
      %v4406 = vsel %vm670, %v4359, 0
      %v4409 = vsel %vm670, %v4360, 0
      %v4412 = vsel %vm670, %v4361, 0
      %v4415 = vsel %vm670, %v4362, 0
      %4417 = vmatprep.subr.bf16.mxu0 0
      %4418 = vmatpush1.bf16.msra.mxu0 %v4367
      %4419 = vmatprep.subr.bf16.mxu0 0
      %4420 = vmatpush1.bf16.msra.mxu0 0
      %4421 = vmatprep.subr.bf16.mxu0 0
      %4422 = vmatpush1.bf16.msra.mxu0 0
      %4423 = vmatprep.subr.bf16.mxu0 0
      %4424 = vmatpush1.bf16.msra.mxu0 0
      %4425 = vmatprep.subr.bf16.mxu0 0
      %4426 = vmatpush1.bf16.msra.mxu0 0
      %4427 = vmatprep.subr.bf16.mxu0 0
      %4428 = vmatpush1.bf16.msra.mxu0 0
      %4429 = vmatprep.subr.bf16.mxu0 0
      %4430 = vmatpush1.bf16.msra.mxu0 0
      %4431 = vmatprep.subr.bf16.mxu0 0
      %4432 = vmatpush1.bf16.msra.mxu0 0
      %4433 = vmatprep.subr.bf16.mxu0 0
      %4434 = vmatpush1.bf16.msra.mxu0 0
      %4435 = vmatprep.subr.bf16.mxu0 0
      %4436 = vmatpush1.bf16.msra.mxu0 0
      %4437 = vmatprep.subr.bf16.mxu0 0
      %4438 = vmatpush1.bf16.msra.mxu0 0
      %4439 = vmatprep.subr.bf16.mxu0 0
      %4440 = vmatpush1.bf16.msra.mxu0 0
      %4441 = vmatprep.subr.bf16.mxu0 0
      %4442 = vmatpush1.bf16.msra.mxu0 0
      %4443 = vmatprep.subr.bf16.mxu0 0
      %4444 = vmatpush1.bf16.msra.mxu0 0
      %4445 = vmatprep.subr.bf16.mxu0 0
      %4446 = vmatpush1.bf16.msra.mxu0 0
      %4447 = vmatprep.subr.bf16.mxu0 0
      %4448 = vmatpush1.bf16.msra.mxu0 0
      %4449 = vmatprep.mubr.bf16.mxu0 0
      %4450 = vmatmul.mubr.bf16.gmra.mrb[0].mxu0 %v4370
      %v4451 = vpop.f32.mrb[0].mxu0
      %v4452 = vadd.f32 0.0, %v4451
      %v4453 = vpop.f32.mrb[0].mxu0
      %v4454 = vpop.f32.mrb[0].mxu0
      %v4455 = vadd.f32 0.0, %v4454
      %v4456 = vpop.f32.mrb[0].mxu0
      %4457 = vmatprep.mubr.bf16.mxu0 0
      %4458 = vmatmul.mubr.bf16.gmra.mrb[0].mxu0 %v4373
      %v4459 = vpop.f32.mrb[0].mxu0
      %v4460 = vadd.f32 0.0, %v4459
      %v4461 = vpop.f32.mrb[0].mxu0
      %v4462 = vpop.f32.mrb[0].mxu0
      %v4463 = vadd.f32 0.0, %v4462
      %v4464 = vpop.f32.mrb[0].mxu0
      %4465 = vmatprep.mubr.bf16.mxu0 0
      %4466 = vmatmul.mubr.bf16.gmra.mrb[0].mxu0 %v4376
      %v4467 = vpop.f32.mrb[0].mxu0
      %v4468 = vadd.f32 0.0, %v4467
      %v4469 = vpop.f32.mrb[0].mxu0
      %v4470 = vpop.f32.mrb[0].mxu0
      %v4471 = vadd.f32 0.0, %v4470
      %v4472 = vpop.f32.mrb[0].mxu0
      %4473 = vmatprep.mubr.bf16.mxu0 0
      %4474 = vmatmul.mubr.bf16.gmra.mrb[0].mxu0 %v4379
      %v4475 = vpop.f32.mrb[0].mxu0
      %v4476 = vadd.f32 0.0, %v4475
      %v4477 = vpop.f32.mrb[0].mxu0
      %v4478 = vpop.f32.mrb[0].mxu0
      %v4479 = vadd.f32 0.0, %v4478
      %v4480 = vpop.f32.mrb[0].mxu0
      %4481 = vmatprep.mubr.bf16.mxu0 0
      %4482 = vmatmul.mubr.bf16.gmra.mrb[0].mxu0 %v4382
      %v4483 = vpop.f32.mrb[0].mxu0
      %v4484 = vadd.f32 0.0, %v4483
      %v4485 = vpop.f32.mrb[0].mxu0
      %v4486 = vpop.f32.mrb[0].mxu0
      %v4487 = vadd.f32 0.0, %v4486
      %v4488 = vpop.f32.mrb[0].mxu0
      %4489 = vmatprep.mubr.bf16.mxu0 0
      %4490 = vmatmul.mubr.bf16.gmra.mrb[0].mxu0 %v4385
      %v4491 = vpop.f32.mrb[0].mxu0
      %v4492 = vadd.f32 0.0, %v4491
      %v4493 = vpop.f32.mrb[0].mxu0
      %v4494 = vpop.f32.mrb[0].mxu0
      %v4495 = vadd.f32 0.0, %v4494
      %v4496 = vpop.f32.mrb[0].mxu0
      %4497 = vmatprep.mubr.bf16.mxu0 0
      %4498 = vmatmul.mubr.bf16.gmra.mrb[0].mxu0 %v4388
      %v4499 = vpop.f32.mrb[0].mxu0
      %v4500 = vadd.f32 0.0, %v4499
      %v4501 = vpop.f32.mrb[0].mxu0
      %v4502 = vpop.f32.mrb[0].mxu0
      %v4503 = vadd.f32 0.0, %v4502
      %v4504 = vpop.f32.mrb[0].mxu0
      %4505 = vmatprep.mubr.bf16.mxu0 0
      %4506 = vmatmul.mubr.bf16.gmra.mrb[0].mxu0 %v4391
      %v4507 = vpop.f32.mrb[0].mxu0
      %v4508 = vadd.f32 0.0, %v4507
      %v4509 = vpop.f32.mrb[0].mxu0
      %v4510 = vpop.f32.mrb[0].mxu0
      %v4511 = vadd.f32 0.0, %v4510
      %v4512 = vpop.f32.mrb[0].mxu0
      %4513 = vmatprep.mubr.bf16.mxu0 0
      %4514 = vmatmul.mubr.bf16.gmra.mrb[0].mxu0 %v4394
      %v4515 = vpop.f32.mrb[0].mxu0
      %v4516 = vadd.f32 0.0, %v4515
      %v4517 = vpop.f32.mrb[0].mxu0
      %v4518 = vpop.f32.mrb[0].mxu0
      %v4519 = vadd.f32 0.0, %v4518
      %v4520 = vpop.f32.mrb[0].mxu0
      %4521 = vmatprep.mubr.bf16.mxu0 0
      %4522 = vmatmul.mubr.bf16.gmra.mrb[0].mxu0 %v4397
      %v4523 = vpop.f32.mrb[0].mxu0
      %v4524 = vadd.f32 0.0, %v4523
      %v4525 = vpop.f32.mrb[0].mxu0
      %v4526 = vpop.f32.mrb[0].mxu0
      %v4527 = vadd.f32 0.0, %v4526
      %v4528 = vpop.f32.mrb[0].mxu0
      %4529 = vmatprep.mubr.bf16.mxu0 0
      %4530 = vmatmul.mubr.bf16.gmra.mrb[0].mxu0 %v4400
      %v4531 = vpop.f32.mrb[0].mxu0
      %v4532 = vadd.f32 0.0, %v4531
      %v4533 = vpop.f32.mrb[0].mxu0
      %v4534 = vpop.f32.mrb[0].mxu0
      %v4535 = vadd.f32 0.0, %v4534
      %v4536 = vpop.f32.mrb[0].mxu0
      %4537 = vmatprep.mubr.bf16.mxu0 0
      %4538 = vmatmul.mubr.bf16.gmra.mrb[0].mxu0 %v4403
      %v4539 = vpop.f32.mrb[0].mxu0
      %v4540 = vadd.f32 0.0, %v4539
      %v4541 = vpop.f32.mrb[0].mxu0
      %v4542 = vpop.f32.mrb[0].mxu0
      %v4543 = vadd.f32 0.0, %v4542
      %v4544 = vpop.f32.mrb[0].mxu0
      %4545 = vmatprep.mubr.bf16.mxu0 0
      %4546 = vmatmul.mubr.bf16.gmra.mrb[0].mxu0 %v4406
      %v4547 = vpop.f32.mrb[0].mxu0
      %v4548 = vadd.f32 0.0, %v4547
      %v4549 = vpop.f32.mrb[0].mxu0
      %v4550 = vpop.f32.mrb[0].mxu0
      %v4551 = vadd.f32 0.0, %v4550
      %v4552 = vpop.f32.mrb[0].mxu0
      %4553 = vmatprep.mubr.bf16.mxu0 0
      %4554 = vmatmul.mubr.bf16.gmra.mrb[0].mxu0 %v4409
      %v4555 = vpop.f32.mrb[0].mxu0
      %v4556 = vadd.f32 0.0, %v4555
      %v4557 = vpop.f32.mrb[0].mxu0
      %v4558 = vpop.f32.mrb[0].mxu0
      %v4559 = vadd.f32 0.0, %v4558
      %v4560 = vpop.f32.mrb[0].mxu0
      %4561 = vmatprep.mubr.bf16.mxu0 0
      %4562 = vmatmul.mubr.bf16.gmra.mrb[0].mxu0 %v4412
      %v4563 = vpop.f32.mrb[0].mxu0
      %v4564 = vadd.f32 0.0, %v4563
      %v4565 = vpop.f32.mrb[0].mxu0
      %v4566 = vpop.f32.mrb[0].mxu0
      %v4567 = vadd.f32 0.0, %v4566
      %v4568 = vpop.f32.mrb[0].mxu0
      %4569 = vmatprep.mubr.bf16.mxu0 0
      %4570 = vmatmul.mubr.bf16.gmra.mrb[0].mxu0 %v4415
      %v4571 = vpop.f32.mrb[0].mxu0
      %v4572 = vadd.f32 0.0, %v4571
      %v4573 = vpop.f32.mrb[0].mxu0
      %v4574 = vpop.f32.mrb[0].mxu0
      %v4575 = vadd.f32 0.0, %v4574
      %v4576 = vpop.f32.mrb[0].mxu0
      %4577 = vdwg.mxu0
      %v4578 = vadd.f32 %v4128, %v4452
      %v4579 = vadd.f32 %v4129, %v4455
      %v4580 = vadd.f32 %v4130, %v4460
      %v4581 = vadd.f32 %v4131, %v4463
      %v4582 = vadd.f32 %v4132, %v4468
      %v4583 = vadd.f32 %v4133, %v4471
      %v4584 = vadd.f32 %v4134, %v4476
      %v4585 = vadd.f32 %v4135, %v4479
      %v4586 = vadd.f32 %v4136, %v4484
      %v4587 = vadd.f32 %v4137, %v4487
      %v4588 = vadd.f32 %v4138, %v4492
      %v4589 = vadd.f32 %v4139, %v4495
      %v4590 = vadd.f32 %v4140, %v4500
      %v4591 = vadd.f32 %v4141, %v4503
      %v4592 = vadd.f32 %v4142, %v4508
      %v4593 = vadd.f32 %v4143, %v4511
      %v4594 = vadd.f32 %v4144, %v4516
      %v4595 = vadd.f32 %v4145, %v4519
      %v4596 = vadd.f32 %v4146, %v4524
      %v4597 = vadd.f32 %v4147, %v4527
      %v4598 = vadd.f32 %v4148, %v4532
      %v4599 = vadd.f32 %v4149, %v4535
      %v4600 = vadd.f32 %v4150, %v4540
      %v4601 = vadd.f32 %v4151, %v4543
      %v4602 = vadd.f32 %v4152, %v4548
      %v4603 = vadd.f32 %v4153, %v4551
      %v4604 = vadd.f32 %v4154, %v4556
      %v4605 = vadd.f32 %v4155, %v4559
      %v4606 = vadd.f32 %v4156, %v4564
      %v4607 = vadd.f32 %v4157, %v4567
      %v4608 = vadd.f32 %v4158, %v4572
      %v4609 = vadd.f32 %v4159, %v4575
      %4610 = vst [vmem:[%s208] sm:$0xff] %v4578
      %4611 = vst [vmem:[%s208 + $0x8] sm:$0xff] %v4579
      %4612 = vst [vmem:[%s208 + $0x10] sm:$0xff] %v4580
      %4613 = vst [vmem:[%s208 + $0x18] sm:$0xff] %v4581
      %4614 = vst [vmem:[%s208 + $0x20] sm:$0xff] %v4582
      %4615 = vst [vmem:[%s208 + $0x28] sm:$0xff] %v4583
      %4616 = vst [vmem:[%s208 + $0x30] sm:$0xff] %v4584
      %4617 = vst [vmem:[%s208 + $0x38] sm:$0xff] %v4585
      %4618 = vst [vmem:[%s208 + $0x40] sm:$0xff] %v4586
      %4619 = vst [vmem:[%s208 + $0x48] sm:$0xff] %v4587
      %4620 = vst [vmem:[%s208 + $0x50] sm:$0xff] %v4588
      %4621 = vst [vmem:[%s208 + $0x58] sm:$0xff] %v4589
      %4622 = vst [vmem:[%s208 + $0x60] sm:$0xff] %v4590
      %4623 = vst [vmem:[%s208 + $0x68] sm:$0xff] %v4591
      %4624 = vst [vmem:[%s208 + $0x70] sm:$0xff] %v4592
      %4625 = vst [vmem:[%s208 + $0x78] sm:$0xff] %v4593
      %4626 = vst [vmem:[%s208 + $0x80] sm:$0xff] %v4594
      %4627 = vst [vmem:[%s208 + $0x88] sm:$0xff] %v4595
      %4628 = vst [vmem:[%s208 + $0x90] sm:$0xff] %v4596
      %4629 = vst [vmem:[%s208 + $0x98] sm:$0xff] %v4597
      %4630 = vst [vmem:[%s208 + $0xa0] sm:$0xff] %v4598
      %4631 = vst [vmem:[%s208 + $0xa8] sm:$0xff] %v4599
      %4632 = vst [vmem:[%s208 + $0xb0] sm:$0xff] %v4600
      %4633 = vst [vmem:[%s208 + $0xb8] sm:$0xff] %v4601
      %4634 = vst [vmem:[%s208 + $0xc0] sm:$0xff] %v4602
      %4635 = vst [vmem:[%s208 + $0xc8] sm:$0xff] %v4603
      %4636 = vst [vmem:[%s208 + $0xd0] sm:$0xff] %v4604
      %4637 = vst [vmem:[%s208 + $0xd8] sm:$0xff] %v4605
      %4638 = vst [vmem:[%s208 + $0xe0] sm:$0xff] %v4606
      %4639 = vst [vmem:[%s208 + $0xe8] sm:$0xff] %v4607
      %4640 = vst [vmem:[%s208 + $0xf0] sm:$0xff] %v4608
      %4641 = vst [vmem:[%s208 + $0xf8] sm:$0xff] %v4609
      %v4642 = vadd.f32 %v4578, %v4579
      %v4643 = vadd.f32 %v4642, %v4580
      %v4644 = vadd.f32 %v4643, %v4581
      %v4645 = vadd.f32 %v4644, %v4582
      %v4646 = vadd.f32 %v4645, %v4583
      %v4647 = vadd.f32 %v4646, %v4584
      %v4648 = vadd.f32 %v4647, %v4585
      %v4649 = vadd.f32 %v4648, %v4586
      %v4650 = vadd.f32 %v4649, %v4587
      %v4651 = vadd.f32 %v4650, %v4588
      %v4652 = vadd.f32 %v4651, %v4589
      %v4653 = vadd.f32 %v4652, %v4590
      %v4654 = vadd.f32 %v4653, %v4591
      %v4655 = vadd.f32 %v4654, %v4592
      %v4656 = vadd.f32 %v4655, %v4593
      %v4657 = vadd.f32 %v4656, %v4594
      %v4658 = vadd.f32 %v4657, %v4595
      %v4659 = vadd.f32 %v4658, %v4596
      %v4660 = vadd.f32 %v4659, %v4597
      %v4661 = vadd.f32 %v4660, %v4598
      %v4662 = vadd.f32 %v4661, %v4599
      %v4663 = vadd.f32 %v4662, %v4600
      %v4664 = vadd.f32 %v4663, %v4601
      %v4665 = vadd.f32 %v4664, %v4602
      %v4666 = vadd.f32 %v4665, %v4603
      %v4667 = vadd.f32 %v4666, %v4604
      %v4668 = vadd.f32 %v4667, %v4605
      %v4669 = vadd.f32 %v4668, %v4606
      %v4670 = vadd.f32 %v4669, %v4607
      %v4671 = vadd.f32 %v4670, %v4608
      %v4672 = vadd.f32 %v4671, %v4609
      %v4673 = vrot.slane %v4672, 4
      %v4674 = vadd.f32 %v4672, %v4673
      %v4675 = vrot.slane %v4674, 2
      %v4676 = vadd.f32 %v4674, %v4675
      %v4677 = vrot.slane %v4676, 1
      %v4678 = vadd.f32 %v4676, %v4677
      %4679 = vst [vmem:[%s211] sm:$0x1] %v4678
      %v4680 = vmul.f32 %v4578, %v4578
      %v4681 = vmul.f32 %v4579, %v4579
      %v4682 = vmul.f32 %v4580, %v4580
      %v4683 = vmul.f32 %v4581, %v4581
      %v4684 = vmul.f32 %v4582, %v4582
      %v4685 = vmul.f32 %v4583, %v4583
      %v4686 = vmul.f32 %v4584, %v4584
      %v4687 = vmul.f32 %v4585, %v4585
      %v4688 = vmul.f32 %v4586, %v4586
      %v4689 = vmul.f32 %v4587, %v4587
      %v4690 = vmul.f32 %v4588, %v4588
      %v4691 = vmul.f32 %v4589, %v4589
      %v4692 = vmul.f32 %v4590, %v4590
      %v4693 = vmul.f32 %v4591, %v4591
      %v4694 = vmul.f32 %v4592, %v4592
      %v4695 = vmul.f32 %v4593, %v4593
      %v4696 = vmul.f32 %v4594, %v4594
      %v4697 = vmul.f32 %v4595, %v4595
      %v4698 = vmul.f32 %v4596, %v4596
      %v4699 = vmul.f32 %v4597, %v4597
      %v4700 = vmul.f32 %v4598, %v4598
      %v4701 = vmul.f32 %v4599, %v4599
      %v4702 = vmul.f32 %v4600, %v4600
      %v4703 = vmul.f32 %v4601, %v4601
      %v4704 = vmul.f32 %v4602, %v4602
      %v4705 = vmul.f32 %v4603, %v4603
      %v4706 = vmul.f32 %v4604, %v4604
      %v4707 = vmul.f32 %v4605, %v4605
      %v4708 = vmul.f32 %v4606, %v4606
      %v4709 = vmul.f32 %v4607, %v4607
      %v4710 = vmul.f32 %v4608, %v4608
      %v4711 = vmul.f32 %v4609, %v4609
      %v4712 = vadd.f32 %v4680, %v4681
      %v4713 = vadd.f32 %v4712, %v4682
      %v4714 = vadd.f32 %v4713, %v4683
      %v4715 = vadd.f32 %v4714, %v4684
      %v4716 = vadd.f32 %v4715, %v4685
      %v4717 = vadd.f32 %v4716, %v4686
      %v4718 = vadd.f32 %v4717, %v4687
      %v4719 = vadd.f32 %v4718, %v4688
      %v4720 = vadd.f32 %v4719, %v4689
      %v4721 = vadd.f32 %v4720, %v4690
      %v4722 = vadd.f32 %v4721, %v4691
      %v4723 = vadd.f32 %v4722, %v4692
      %v4724 = vadd.f32 %v4723, %v4693
      %v4725 = vadd.f32 %v4724, %v4694
      %v4726 = vadd.f32 %v4725, %v4695
      %v4727 = vadd.f32 %v4726, %v4696
      %v4728 = vadd.f32 %v4727, %v4697
      %v4729 = vadd.f32 %v4728, %v4698
      %v4730 = vadd.f32 %v4729, %v4699
      %v4731 = vadd.f32 %v4730, %v4700
      %v4732 = vadd.f32 %v4731, %v4701
      %v4733 = vadd.f32 %v4732, %v4702
      %v4734 = vadd.f32 %v4733, %v4703
      %v4735 = vadd.f32 %v4734, %v4704
      %v4736 = vadd.f32 %v4735, %v4705
      %v4737 = vadd.f32 %v4736, %v4706
      %v4738 = vadd.f32 %v4737, %v4707
      %v4739 = vadd.f32 %v4738, %v4708
      %v4740 = vadd.f32 %v4739, %v4709
      %v4741 = vadd.f32 %v4740, %v4710
      %v4742 = vadd.f32 %v4741, %v4711
      %v4743 = vrot.slane %v4742, 4
      %v4744 = vadd.f32 %v4742, %v4743
      %v4745 = vrot.slane %v4744, 2
      %v4746 = vadd.f32 %v4744, %v4745
      %v4747 = vrot.slane %v4746, 1
      %v4748 = vadd.f32 %v4746, %v4747
      %4749 = vst [vmem:[%s214] sm:$0x1] %v4748
      %p4750 = scmp.lt.s32.totalorder %s16, 7
      %s4751 = scalar_select %p4750, %s16, 7
      %s4752 = smul.addr %s4751, 32
      %s4753 = smul.addr %s4752, 8
      %s4754 = scalar_lea.vmem %s2, %s4753
      %p4755 = scmp.lt.s32.totalorder %s16, 7
      %s4756 = scalar_select %p4755, %s16, 7
      %s4757 = scalar_lea.vmem %s3, %s4756
      %p4758 = scmp.lt.s32.totalorder %s16, 7
      %s4759 = scalar_select %p4758, %s16, 7
      %s4760 = scalar_lea.vmem %s4, %s4759
      // Predicated region
      $region29: #{up_block_forward.2} parent=27 // pred_check
        %p4761 = pneg %p81
      $region30: #{up_block_forward.2} parent=27 // pred_check_branch
        %4763 = sbr.rel (%p4761) target = $region32
      $region31: #{up_block_forward.2} parent=27 // pred_region
        _
      $region32: #{up_block_forward.2} parent=27 // pred_fallthru
        _
      // Predicated region
      $region33: #{up_block_forward.2} parent=27 // pred_check
        %p4764 = pneg %p107
      $region34: #{up_block_forward.2} parent=27 // pred_check_branch
        %4766 = sbr.rel (%p4764) target = $region36
      $region35: #{up_block_forward.2} parent=27 // pred_region
        _
      $region36: #{up_block_forward.2} parent=27 // pred_fallthru
        _
      // Predicated region
      $region37: #{up_block_forward.2} parent=27 // pred_check
        %p4767 = pneg %p133
      $region38: #{up_block_forward.2} parent=27 // pred_check_branch
        %4769 = sbr.rel (%p4767) target = $region40
      $region39: #{up_block_forward.2} parent=27 // pred_region
        _
      $region40: #{up_block_forward.2} parent=27 // pred_fallthru
        _
    $region28: #{up_block_forward.2} parent=5 // pred_fallthru
      _
    %p4770 = scmp.le.s32.totalorder 2, %s11
    // Predicated region
    $region41: #{up_block_forward.2} parent=5 // pred_check
      %p4771 = pneg %p4770
    $region42: #{up_block_forward.2} parent=5 // pred_check_branch
      %4773 = sbr.rel (%p4771) target = $region44
    $region43: #{up_block_forward.2} parent=5 // pred_region
      %s4774 = ssub.s32 %s11, 2
      // Predicated region
      $region45: #{up_block_forward.2} parent=43 // pred_check
        %p4775 = pneg %p87
      $region46: #{up_block_forward.2} parent=43 // pred_check_branch
        %4777 = sbr.rel (%p4775) target = $region48
      $region47: #{up_block_forward.2} parent=43 // pred_region
        %p4778 = scmp.lt.s32.totalorder %s17, 7
        %s4779 = scalar_select %p4778, %s17, 7
        %s4780 = smul.addr %s4779, 32
        %s4781 = smul.addr %s4780, 8
        %s4782 = scalar_lea.vmem %s2, %s4781
      $region48: #{up_block_forward.2} parent=43 // pred_fallthru
        _
      // Predicated region
      $region49: #{up_block_forward.2} parent=43 // pred_check
        %p4783 = pneg %p113
      $region50: #{up_block_forward.2} parent=43 // pred_check_branch
        %4785 = sbr.rel (%p4783) target = $region52
      $region51: #{up_block_forward.2} parent=43 // pred_region
        %p4786 = scmp.lt.s32.totalorder %s17, 7
        %s4787 = scalar_select %p4786, %s17, 7
        %s4788 = scalar_lea.vmem %s3, %s4787
      $region52: #{up_block_forward.2} parent=43 // pred_fallthru
        _
      // Predicated region
      $region53: #{up_block_forward.2} parent=43 // pred_check
        %p4789 = pneg %p139
      $region54: #{up_block_forward.2} parent=43 // pred_check_branch
        %4791 = sbr.rel (%p4789) target = $region56
      $region55: #{up_block_forward.2} parent=43 // pred_region
        %p4792 = scmp.lt.s32.totalorder %s17, 7
        %s4793 = scalar_select %p4792, %s17, 7
        %s4794 = scalar_lea.vmem %s4, %s4793
      $region56: #{up_block_forward.2} parent=43 // pred_fallthru
        _
    $region44: #{up_block_forward.2} parent=5 // pred_fallthru
      _
  $region6: #{up_block_forward.2} parent=0 // loop_footer
    %s15 = sadd.s32 1, %s11
  $region7: #{up_block_forward.2} parent=0 // loop_footer_branch
    %10 = sbr.rel target = $region3
  $region8: #{up_block_forward.2} parent=0 // loop_exit
    _

</llo_original>
